<compile_context>
chip_gen: v5e
topology: v5e:2x2
jax: 0.10.0
libtpu: 0.0.40
codegen_flags: <defaults>
</compile_context>

<pallas_src>
import functools

import jax
import jax.numpy as jnp
from jax.experimental import pallas as pl
from jax.experimental.pallas import tpu as pltpu

D_IN, D_HID, D_OUT = 784, 800, 10
TK = 392                       # 784 = 2 * 392 -> 2 pipelined K tiles
NK = D_IN // TK


def _softplus(r):
    # numerically-stable softplus = log1p(exp(r)); only used at param-prep time.
    return jnp.logaddexp(r, 0.0)


def bayesian_mlp_kernel(
    x_ref,                                   # (1, TM, TK)      bf16
    w1_mu_ref, w1_sig_ref, w1_eps_ref,       # (1, TK, D_HID)   bf16
    b1_ref,                                  # (1, D_HID)       f32  (pre-sampled)
    w2_ref,                                  # (D_HID, D_OUT)   f32  (pre-sampled)
    b2_ref,                                  # (1, D_OUT)       f32  (pre-sampled)
    o_ref,                                   # (TM, D_OUT)      f32
    h_acc,                                   # VMEM (TM, D_HID) f32 scratch
):
    k = pl.program_id(1)

    @pl.when(k == 0)
    def _init():
        h_acc[...] = jnp.zeros_like(h_acc)

    # ---- sample this K tile of W1: plain bf16 FMA (sigma precomputed, eps streamed) ----
    w1 = w1_mu_ref[0] + w1_sig_ref[0] * w1_eps_ref[0]          # bf16 (TK, D_HID)

    # ---- partial fc1: bf16 MXU dot, f32 accumulation ----
    h_acc[...] += jnp.dot(x_ref[0], w1, preferred_element_type=jnp.float32)

    # ---- last K tile: bias + ReLU + small fc2 (weights already sampled in wrapper) ----
    @pl.when(k == pl.num_programs(1) - 1)
    def _finalize():
        h = jnp.maximum(h_acc[...] + b1_ref[...], 0.0)
        o_ref[...] = (
            jnp.dot(h, w2_ref[...], preferred_element_type=jnp.float32) + b2_ref[...]
        ).astype(o_ref.dtype)


@jax.jit
def bayesian_mlp_forward(x, params, eps):
    """x: (B, 784) f32.  params: prepared inference params.  eps: sample_eps() dict."""
    B = x.shape[0]
    assert B % 8 == 0, "batch must be a multiple of 8 (sublane alignment)"
    TM = 128 if B % 128 == 0 else B          # M tile; 128 rows feeds the MXU well
    MB = B // TM

    # Tiny layer-2 / bias sampling in the wrapper (no softplus, no lane-padded
    # elementwise work inside the kernel).
    b1 = params["b1_mu"] + params["b1_sigma"] * eps["b1"]
    w2 = params["w2_mu"] + params["w2_sigma"] * eps["w2"]
    b2 = params["b2_mu"] + params["b2_sigma"] * eps["b2"]

    # Layout plumbing: split the 784 contraction dim so every block's last two dims
    # equal the full array dims (392 is not a 128 multiple, so it must be a full axis).
    x3 = x.astype(jnp.bfloat16).reshape(B, NK, TK).transpose(1, 0, 2)   # (NK, B, TK)

    grid_spec = pltpu.PrefetchScalarGridSpec(
        num_scalar_prefetch=0,
        grid=(MB, NK),
        in_specs=[
            pl.BlockSpec((1, TM, TK), lambda m, k: (k, m, 0)),          # x K-tile
            pl.BlockSpec((1, TK, D_HID), lambda m, k: (k, 0, 0)),       # w1_mu K-tile
            pl.BlockSpec((1, TK, D_HID), lambda m, k: (k, 0, 0)),       # w1_sigma K-tile
            pl.BlockSpec((1, TK, D_HID), lambda m, k: (k, 0, 0)),       # w1_eps K-tile
            pl.BlockSpec((1, D_HID), lambda m, k: (0, 0)),              # b1 (resident)
            pl.BlockSpec((D_HID, D_OUT), lambda m, k: (0, 0)),          # w2 (resident)
            pl.BlockSpec((1, D_OUT), lambda m, k: (0, 0)),              # b2 (resident)
        ],
        out_specs=pl.BlockSpec((TM, D_OUT), lambda m, k: (m, 0)),
        scratch_shapes=[pltpu.VMEM((TM, D_HID), jnp.float32)],
    )

    return pl.pallas_call(
        bayesian_mlp_kernel,
        out_shape=jax.ShapeDtypeStruct((B, D_OUT), jnp.float32),
        grid_spec=grid_spec,
        compiler_params=pltpu.CompilerParams(
            dimension_semantics=("parallel", "arbitrary"),   # M parallel, K reduction
            vmem_limit_bytes=32 * 1024 * 1024,
        ),
    )(x3, params["w1_mu"], params["w1_sigma"], eps["w1"], b1, w2, b2)


# ----------------------------- parameter handling -----------------------------

def init_params(key):
    """Synthetic PyTorch-style init (mu / rho) for BayesianLinear(784,800)/(800,10)."""
    ks = jax.random.split(key, 8)

    def nrm(k, shape, scale=1.0):
        return (scale * jax.random.normal(k, shape)).astype(jnp.float32)

    return {
        "w1_mu": nrm(ks[0], (D_IN, D_HID), 0.05),
        "w1_rho": jnp.full((D_IN, D_HID), -4.0, jnp.float32) + nrm(ks[1], (D_IN, D_HID), 0.01),
        "b1_mu": nrm(ks[2], (1, D_HID), 0.05),
        "b1_rho": jnp.full((1, D_HID), -4.0, jnp.float32) + nrm(ks[3], (1, D_HID), 0.01),
        "w2_mu": nrm(ks[4], (D_HID, D_OUT), 0.05),
        "w2_rho": jnp.full((D_HID, D_OUT), -4.0, jnp.float32) + nrm(ks[5], (D_HID, D_OUT), 0.01),
        "b2_mu": nrm(ks[6], (1, D_OUT), 0.05),
        "b2_rho": jnp.full((1, D_OUT), -4.0, jnp.float32) + nrm(ks[7], (1, D_OUT), 0.01),
    }


def prepare_inference_params(raw):
    """One-time prep (redo only when params change): sigma = softplus(rho);
    W1 mu/sigma stored bf16 and pre-split into (NK, TK, D_HID) K tiles."""
    return {
        "w1_mu": raw["w1_mu"].reshape(NK, TK, D_HID).astype(jnp.bfloat16),
        "w1_sigma": _softplus(raw["w1_rho"]).reshape(NK, TK, D_HID).astype(jnp.bfloat16),
        "b1_mu": raw["b1_mu"],
        "b1_sigma": _softplus(raw["b1_rho"]),
        "w2_mu": raw["w2_mu"],
        "w2_sigma": _softplus(raw["w2_rho"]),
        "b2_mu": raw["b2_mu"],
        "b2_sigma": _softplus(raw["b2_rho"]),
    }


def sample_eps(key):
    """Fresh per-call posterior noise (true per-call weight sampling)."""
    k1, k2, k3, k4 = jax.random.split(key, 4)
    return {
        "w1": jax.random.normal(k1, (NK, TK, D_HID), jnp.float32).astype(jnp.bfloat16),
        "b1": jax.random.normal(k2, (1, D_HID), jnp.float32),
        "w2": jax.random.normal(k3, (D_HID, D_OUT), jnp.float32),
        "b2": jax.random.normal(k4, (1, D_OUT), jnp.float32),
    }


def zero_eps():
    return {
        "w1": jnp.zeros((NK, TK, D_HID), jnp.bfloat16),
        "b1": jnp.zeros((1, D_HID), jnp.float32),
        "w2": jnp.zeros((D_HID, D_OUT), jnp.float32),
        "b2": jnp.zeros((1, D_OUT), jnp.float32),
    }


def reference_forward(x, params, eps):
    """Pure-JAX reference mimicking the kernel's dtype path (bf16 sample + bf16 MXU)."""
    w1 = (params["w1_mu"] + params["w1_sigma"] * eps["w1"]).reshape(D_IN, D_HID)  # bf16
    b1 = params["b1_mu"] + params["b1_sigma"] * eps["b1"]
    w2 = params["w2_mu"] + params["w2_sigma"] * eps["w2"]
    b2 = params["b2_mu"] + params["b2_sigma"] * eps["b2"]
    h = jnp.dot(x.astype(jnp.bfloat16), w1, preferred_element_type=jnp.float32) + b1
    h = jnp.maximum(h, 0.0)
    return jnp.dot(h, w2, preferred_element_type=jnp.float32) + b2


if __name__ == "__main__":
    key = jax.random.PRNGKey(0)
    k_x, k_p, k_e = jax.random.split(key, 3)

    # Small demo batch.  For production, fold >=128 rows / MC samples into B so the
    # MXU rows and the second v7x TensorCore are actually used.
    B = 16
    x = jax.random.normal(k_x, (B, D_IN), dtype=jnp.float32)
    params = prepare_inference_params(init_params(k_p))

    # --- check 1 (deterministic): all eps = 0 -> W = mu exactly; must match reference.
    eps0 = zero_eps()
    out_det = jax.block_until_ready(bayesian_mlp_forward(x, params, eps0))
    ref_det = reference_forward(x, params, eps0)
    assert out_det.shape == (B, D_OUT)
    assert bool(jnp.allclose(out_det, ref_det, atol=1e-3, rtol=1e-3)), (
        "deterministic mismatch, max abs diff = "
        f"{float(jnp.max(jnp.abs(out_det - ref_det)))}")

    # --- check 2 (stochastic): fresh per-call eps; reference follows the same dtype
    #     path, tolerance covers bf16 FMA rounding-order differences.
    eps = sample_eps(k_e)
    out_sto = jax.block_until_ready(bayesian_mlp_forward(x, params, eps))
    ref_sto = reference_forward(x, params, eps)
    assert bool(jnp.all(jnp.isfinite(out_sto)))
    assert bool(jnp.allclose(out_sto, ref_sto, atol=5e-2, rtol=5e-2)), (
        "stochastic mismatch, max abs diff = "
        f"{float(jnp.max(jnp.abs(out_sto - ref_sto)))}")
    assert float(jnp.max(jnp.abs(out_sto - out_det))) > 1e-4, "noise not injected"

    print("KERNEL_OK")
</pallas_src>

<mosaic_0001>
module attributes {stable_mosaic.version = 11 : i64} {
  func.func @bayesian_mlp_kernel(%arg0: i32, %arg1: i32, %arg2: memref<1x16x392xbf16, #tpu.memory_space<vmem>>, %arg3: memref<1x392x800xbf16, #tpu.memory_space<vmem>>, %arg4: memref<1x392x800xbf16, #tpu.memory_space<vmem>>, %arg5: memref<1x392x800xbf16, #tpu.memory_space<vmem>>, %arg6: memref<1x800xf32, #tpu.memory_space<vmem>>, %arg7: memref<800x10xf32, #tpu.memory_space<vmem>>, %arg8: memref<1x10xf32, #tpu.memory_space<vmem>>, %arg9: memref<16x10xf32, #tpu.memory_space<vmem>>, %arg10: memref<16x800xf32, #tpu.memory_space<vmem>>) attributes {dimension_semantics = [#tpu.dimension_semantics<parallel>, #tpu.dimension_semantics<arbitrary>], iteration_bounds = array<i64: 1, 2>, scalar_prefetch = 0 : i64, scratch_operands = 1 : i64, tpu.core_type = #tpu.core_type<tc>, window_params = [{transform_indices = @transform_0, window_bounds = array<i64: 1, 16, 392>}, {transform_indices = @transform_1, window_bounds = array<i64: 1, 392, 800>}, {transform_indices = @transform_2, window_bounds = array<i64: 1, 392, 800>}, {transform_indices = @transform_3, window_bounds = array<i64: 1, 392, 800>}, {pipeline_mode = #tpu.pipeline_mode<synchronous>, transform_indices = @transform_4, window_bounds = array<i64: 1, 800>}, {pipeline_mode = #tpu.pipeline_mode<synchronous>, transform_indices = @transform_5, window_bounds = array<i64: 800, 10>}, {pipeline_mode = #tpu.pipeline_mode<synchronous>, transform_indices = @transform_6, window_bounds = array<i64: 1, 10>}, {transform_indices = @transform_7, window_bounds = array<i64: 16, 10>}]} {
    %c0_i32 = arith.constant 0 : i32
    %0 = arith.cmpi eq, %arg1, %c0_i32 : i32
    %1 = arith.extui %0 : i1 to i32
    %c0_i32_0 = arith.constant 0 : i32
    %2 = arith.cmpi ne, %1, %c0_i32_0 : i32
    scf.if %2 {
      %cst_17 = arith.constant 0.000000e+00 : f32
      %20 = vector.broadcast %cst_17 : f32 to vector<16x800xf32>
      %c0_18 = arith.constant 0 : index
      %c0_19 = arith.constant 0 : index
      %21 = vector.load %arg10[%c0_18, %c0_19] : memref<16x800xf32, #tpu.memory_space<vmem>>, vector<16x800xf32>
      tpu.vector_store %arg10[%c0_18, %c0_19], %20 {strides = array<i32>} : memref<16x800xf32, #tpu.memory_space<vmem>>, vector<16x800xf32>,
    } else {
    }
    %c0 = arith.constant 0 : index
    %c0_1 = arith.constant 0 : index
    %c0_2 = arith.constant 0 : index
    %3 = vector.load %arg3[%c0, %c0_1, %c0_2] : memref<1x392x800xbf16, #tpu.memory_space<vmem>>, vector<1x392x800xbf16>
    %4 = vector.shape_cast %3 : vector<1x392x800xbf16> to vector<392x800xbf16>
    %c0_3 = arith.constant 0 : index
    %c0_4 = arith.constant 0 : index
    %c0_5 = arith.constant 0 : index
    %5 = vector.load %arg4[%c0_3, %c0_4, %c0_5] : memref<1x392x800xbf16, #tpu.memory_space<vmem>>, vector<1x392x800xbf16>
    %6 = vector.shape_cast %5 : vector<1x392x800xbf16> to vector<392x800xbf16>
    %c0_6 = arith.constant 0 : index
    %c0_7 = arith.constant 0 : index
    %c0_8 = arith.constant 0 : index
    %7 = vector.load %arg5[%c0_6, %c0_7, %c0_8] : memref<1x392x800xbf16, #tpu.memory_space<vmem>>, vector<1x392x800xbf16>
    %8 = vector.shape_cast %7 : vector<1x392x800xbf16> to vector<392x800xbf16>
    %9 = arith.mulf %6, %8 : vector<392x800xbf16>
    %10 = arith.addf %4, %9 : vector<392x800xbf16>
    %c0_9 = arith.constant 0 : index
    %c0_10 = arith.constant 0 : index
    %11 = vector.load %arg10[%c0_9, %c0_10] : memref<16x800xf32, #tpu.memory_space<vmem>>, vector<16x800xf32>
    %c0_11 = arith.constant 0 : index
    %c0_12 = arith.constant 0 : index
    %c0_13 = arith.constant 0 : index
    %12 = vector.load %arg2[%c0_11, %c0_12, %c0_13] : memref<1x16x392xbf16, #tpu.memory_space<vmem>>, vector<1x16x392xbf16>
    %13 = vector.shape_cast %12 : vector<1x16x392xbf16> to vector<16x392xbf16>
    %cst = arith.constant dense<0.000000e+00> : vector<16x800xf32>
    %14 = tpu.matmul %13, %10, %cst {dimension_numbers = #tpu.dot_dimension_numbers<[1], [0], [0], [1], [0, 0, 1, 1], [], []>} : vector<16x392xbf16>, vector<392x800xbf16>, vector<16x800xf32> -> vector<16x800xf32>
    %15 = arith.addf %11, %14 : vector<16x800xf32>
    %c0_14 = arith.constant 0 : index
    %c0_15 = arith.constant 0 : index
    %16 = vector.load %arg10[%c0_14, %c0_15] : memref<16x800xf32, #tpu.memory_space<vmem>>, vector<16x800xf32>
    tpu.vector_store %arg10[%c0_14, %c0_15], %15 {strides = array<i32>} : memref<16x800xf32, #tpu.memory_space<vmem>>, vector<16x800xf32>,
    %c1_i32 = arith.constant 1 : i32
    %17 = arith.cmpi eq, %arg1, %c1_i32 : i32
    %18 = arith.extui %17 : i1 to i32
    %c0_i32_16 = arith.constant 0 : i32
    %19 = arith.cmpi ne, %18, %c0_i32_16 : i32
    scf.if %19 {
      %c0_17 = arith.constant 0 : index
      %c0_18 = arith.constant 0 : index
      %20 = vector.load %arg10[%c0_17, %c0_18] : memref<16x800xf32, #tpu.memory_space<vmem>>, vector<16x800xf32>
      %c0_19 = arith.constant 0 : index
      %c0_20 = arith.constant 0 : index
      %21 = vector.load %arg6[%c0_19, %c0_20] : memref<1x800xf32, #tpu.memory_space<vmem>>, vector<1x800xf32>
      %22 = vector.broadcast %21 : vector<1x800xf32> to vector<16x800xf32>
      %23 = arith.addf %20, %22 : vector<16x800xf32>
      %cst_21 = arith.constant 0.000000e+00 : f32
      %24 = vector.broadcast %cst_21 : f32 to vector<16x800xf32>
      %25 = arith.maximumf %23, %24 : vector<16x800xf32>
      %c0_22 = arith.constant 0 : index
      %c0_23 = arith.constant 0 : index
      %26 = vector.load %arg7[%c0_22, %c0_23] : memref<800x10xf32, #tpu.memory_space<vmem>>, vector<800x10xf32>
      %cst_24 = arith.constant dense<0.000000e+00> : vector<16x10xf32>
      %27 = tpu.matmul %25, %26, %cst_24 {dimension_numbers = #tpu.dot_dimension_numbers<[1], [0], [0], [1], [0, 0, 1, 1], [], []>} : vector<16x800xf32>, vector<800x10xf32>, vector<16x10xf32> -> vector<16x10xf32>
      %c0_25 = arith.constant 0 : index
      %c0_26 = arith.constant 0 : index
      %28 = vector.load %arg8[%c0_25, %c0_26] : memref<1x10xf32, #tpu.memory_space<vmem>>, vector<1x10xf32>
      %29 = vector.broadcast %28 : vector<1x10xf32> to vector<16x10xf32>
      %30 = arith.addf %27, %29 : vector<16x10xf32>
      %c0_27 = arith.constant 0 : index
      %c0_28 = arith.constant 0 : index
      %31 = vector.load %arg9[%c0_27, %c0_28] : memref<16x10xf32, #tpu.memory_space<vmem>>, vector<16x10xf32>
      tpu.vector_store %arg9[%c0_27, %c0_28], %30 {strides = array<i32>} : memref<16x10xf32, #tpu.memory_space<vmem>>, vector<16x10xf32>,
    } else {
    }
    return
  }
  func.func @transform_0(%arg0: i32, %arg1: i32) -> (i32, i32, i32) {
    %c0_i32 = arith.constant 0 : i32
    %c0_i32_0 = arith.constant 0 : i32
    return %arg1, %arg0, %c0_i32 : i32, i32, i32
  }
  func.func @transform_1(%arg0: i32, %arg1: i32) -> (i32, i32, i32) {
    %c0_i32 = arith.constant 0 : i32
    %c0_i32_0 = arith.constant 0 : i32
    %c0_i32_1 = arith.constant 0 : i32
    return %arg1, %c0_i32, %c0_i32_0 : i32, i32, i32
  }
  func.func @transform_2(%arg0: i32, %arg1: i32) -> (i32, i32, i32) {
    %c0_i32 = arith.constant 0 : i32
    %c0_i32_0 = arith.constant 0 : i32
    %c0_i32_1 = arith.constant 0 : i32
    return %arg1, %c0_i32, %c0_i32_0 : i32, i32, i32
  }
  func.func @transform_3(%arg0: i32, %arg1: i32) -> (i32, i32, i32) {
    %c0_i32 = arith.constant 0 : i32
    %c0_i32_0 = arith.constant 0 : i32
    %c0_i32_1 = arith.constant 0 : i32
    return %arg1, %c0_i32, %c0_i32_0 : i32, i32, i32
  }
  func.func @transform_4(%arg0: i32, %arg1: i32) -> (i32, i32) {
    %c0_i32 = arith.constant 0 : i32
    %c0_i32_0 = arith.constant 0 : i32
    %c0_i32_1 = arith.constant 0 : i32
    return %c0_i32, %c0_i32_0 : i32, i32
  }
  func.func @transform_5(%arg0: i32, %arg1: i32) -> (i32, i32) {
    %c0_i32 = arith.constant 0 : i32
    %c0_i32_0 = arith.constant 0 : i32
    %c0_i32_1 = arith.constant 0 : i32
    return %c0_i32, %c0_i32_0 : i32, i32
  }
  func.func @transform_6(%arg0: i32, %arg1: i32) -> (i32, i32) {
    %c0_i32 = arith.constant 0 : i32
    %c0_i32_0 = arith.constant 0 : i32
    %c0_i32_1 = arith.constant 0 : i32
    return %c0_i32, %c0_i32_0 : i32, i32
  }
  func.func @transform_7(%arg0: i32, %arg1: i32) -> (i32, i32) {
    %c0_i32 = arith.constant 0 : i32
    %c0_i32_0 = arith.constant 0 : i32
    return %arg0, %c0_i32 : i32, i32
  }
}

</mosaic_0001>

<llo_original>
// kernel: mul.4
$region0: #{mul.4}
  #allocation4 [shape = 's32[1]{0}', space=sflag, size = 0x4, scoped, tag = 'scoped memory for mul.4']
  %s0 = inlined_call_operand.hbm [shape: f32[800,10], index: 0, kind: input, shape index: {}]
  %s1 = inlined_call_operand.hbm [shape: f32[800,10], index: 1, kind: input, shape index: {}]
  %s2 = inlined_call_operand.vmem [shape: f32[800,10], index: 2, kind: output, shape index: {}]
  $region1: #{mul.4} parent=0
    #allocation0 [shape = 'u8[57344]{0}', space=vmem, size = 0xe000, scoped, tag = 'operand span for operand 0']
    #allocation1 [shape = 's32[1]{0}', space=sflag, size = 0x4, scoped, tag = 'scoped memory for mul.4']
    #allocation2 [shape = 'u8[57344]{0}', space=vmem, size = 0xe000, scoped, tag = 'operand span for operand 1']
    #allocation3 [shape = 's32[1]{0}', space=sflag, size = 0x4, scoped, tag = 'scoped memory for mul.4']
    %3 = vsyncpa [#allocation1], 0
    %4 = vsyncpa [#allocation3], 0
    %6 = vsyncadd [#allocation1], 0
    %s7 = sshll.u32 %s0, 4
    %s8 = int_to_ptr.hbm [resolvable:$true] %s7
    %s9 = sshll.u32 [#allocation0], 4
    %s10 = int_to_ptr.vmem [resolvable:$true] %s9
    %15 = dma.hbm_to_vmem [thread:$0]  %s8, 1792, %s10, [#allocation1], 896, 896, 56
    %17 = vsyncadd [#allocation3], 0
    %s18 = sshll.u32 %s1, 4
    %s19 = int_to_ptr.hbm [resolvable:$true] %s18
    %s20 = sshll.u32 [#allocation2], 4
    %s21 = int_to_ptr.vmem [resolvable:$true] %s20
    %26 = dma.hbm_to_vmem [thread:$0]  %s19, 1792, %s21, [#allocation3], 896, 896, 56
    %28 = dma.done [#allocation1], 1792
    %30 = dma.done [#allocation3], 1792
    %v31 = vld [vmem:[#allocation0] sm:$0xff]
    %v32 = vld [vmem:[#allocation2] sm:$0xff]
    %33 = xla_tuple %v31, %v32
    %34 = xla_tuple %33
    %v35 = vmul.f32 %v31, %v32
    %36 = xla_tuple %v35
    %37 = vst [vmem:[%s2] sm:$0xff] %v35
    %s38 = scalar_lea.vmem [#allocation0], 56
    %v39 = vld [vmem:[%s38] sm:$0xff]
    %s40 = scalar_lea.vmem [#allocation2], 56
    %v41 = vld [vmem:[%s40] sm:$0xff]
    %42 = xla_tuple %v39, %v41
    %43 = xla_tuple %42
    %v44 = vmul.f32 %v39, %v41
    %45 = xla_tuple %v44
    %s46 = scalar_lea.vmem %s2, 56
    %47 = vst [vmem:[%s46] sm:$0xff] %v44
    %s48 = scalar_lea.vmem [#allocation0], 8
    %v49 = vld [vmem:[%s48] sm:$0xff]
    %s50 = scalar_lea.vmem [#allocation2], 8
    %v51 = vld [vmem:[%s50] sm:$0xff]
    %52 = xla_tuple %v49, %v51
    %53 = xla_tuple %52
    %v54 = vmul.f32 %v49, %v51
    %55 = xla_tuple %v54
    %s56 = scalar_lea.vmem %s2, 8
    %57 = vst [vmem:[%s56] sm:$0xff] %v54
    %s58 = scalar_lea.vmem [#allocation0], 64
    %v59 = vld [vmem:[%s58] sm:$0xff]
    %s60 = scalar_lea.vmem [#allocation2], 64
    %v61 = vld [vmem:[%s60] sm:$0xff]
    %62 = xla_tuple %v59, %v61
    %63 = xla_tuple %62
    %v64 = vmul.f32 %v59, %v61
    %65 = xla_tuple %v64
    %s66 = scalar_lea.vmem %s2, 64
    %67 = vst [vmem:[%s66] sm:$0xff] %v64
    %s68 = scalar_lea.vmem [#allocation0], 16
    %v69 = vld [vmem:[%s68] sm:$0xff]
    %s70 = scalar_lea.vmem [#allocation2], 16
    %v71 = vld [vmem:[%s70] sm:$0xff]
    %72 = xla_tuple %v69, %v71
    %73 = xla_tuple %72
    %v74 = vmul.f32 %v69, %v71
    %75 = xla_tuple %v74
    %s76 = scalar_lea.vmem %s2, 16
    %77 = vst [vmem:[%s76] sm:$0xff] %v74
    %s78 = scalar_lea.vmem [#allocation0], 72
    %v79 = vld [vmem:[%s78] sm:$0xff]
    %s80 = scalar_lea.vmem [#allocation2], 72
    %v81 = vld [vmem:[%s80] sm:$0xff]
    %82 = xla_tuple %v79, %v81
    %83 = xla_tuple %82
    %v84 = vmul.f32 %v79, %v81
    %85 = xla_tuple %v84
    %s86 = scalar_lea.vmem %s2, 72
    %87 = vst [vmem:[%s86] sm:$0xff] %v84
    %s88 = scalar_lea.vmem [#allocation0], 24
    %v89 = vld [vmem:[%s88] sm:$0xff]
    %s90 = scalar_lea.vmem [#allocation2], 24
    %v91 = vld [vmem:[%s90] sm:$0xff]
    %92 = xla_tuple %v89, %v91
    %93 = xla_tuple %92
    %v94 = vmul.f32 %v89, %v91
    %95 = xla_tuple %v94
    %s96 = scalar_lea.vmem %s2, 24
    %97 = vst [vmem:[%s96] sm:$0xff] %v94
    %s98 = scalar_lea.vmem [#allocation0], 80
    %v99 = vld [vmem:[%s98] sm:$0xff]
    %s100 = scalar_lea.vmem [#allocation2], 80
    %v101 = vld [vmem:[%s100] sm:$0xff]
    %102 = xla_tuple %v99, %v101
    %103 = xla_tuple %102
    %v104 = vmul.f32 %v99, %v101
    %105 = xla_tuple %v104
    %s106 = scalar_lea.vmem %s2, 80
    %107 = vst [vmem:[%s106] sm:$0xff] %v104
    %s108 = scalar_lea.vmem [#allocation0], 32
    %v109 = vld [vmem:[%s108] sm:$0xff]
    %s110 = scalar_lea.vmem [#allocation2], 32
    %v111 = vld [vmem:[%s110] sm:$0xff]
    %112 = xla_tuple %v109, %v111
    %113 = xla_tuple %112
    %v114 = vmul.f32 %v109, %v111
    %115 = xla_tuple %v114
    %s116 = scalar_lea.vmem %s2, 32
    %117 = vst [vmem:[%s116] sm:$0xff] %v114
    %s118 = scalar_lea.vmem [#allocation0], 88
    %v119 = vld [vmem:[%s118] sm:$0xff]
    %s120 = scalar_lea.vmem [#allocation2], 88
    %v121 = vld [vmem:[%s120] sm:$0xff]
    %122 = xla_tuple %v119, %v121
    %123 = xla_tuple %122
    %v124 = vmul.f32 %v119, %v121
    %125 = xla_tuple %v124
    %s126 = scalar_lea.vmem %s2, 88
    %127 = vst [vmem:[%s126] sm:$0xff] %v124
    %s128 = scalar_lea.vmem [#allocation0], 40
    %v129 = vld [vmem:[%s128] sm:$0xff]
    %s130 = scalar_lea.vmem [#allocation2], 40
    %v131 = vld [vmem:[%s130] sm:$0xff]
    %132 = xla_tuple %v129, %v131
    %133 = xla_tuple %132
    %v134 = vmul.f32 %v129, %v131
    %135 = xla_tuple %v134
    %s136 = scalar_lea.vmem %s2, 40
    %137 = vst [vmem:[%s136] sm:$0xff] %v134
    %s138 = scalar_lea.vmem [#allocation0], 96
    %v139 = vld [vmem:[%s138] sm:$0xff]
    %s140 = scalar_lea.vmem [#allocation2], 96
    %v141 = vld [vmem:[%s140] sm:$0xff]
    %142 = xla_tuple %v139, %v141
    %143 = xla_tuple %142
    %v144 = vmul.f32 %v139, %v141
    %145 = xla_tuple %v144
    %s146 = scalar_lea.vmem %s2, 96
    %147 = vst [vmem:[%s146] sm:$0xff] %v144
    %s148 = scalar_lea.vmem [#allocation0], 48
    %v149 = vld [vmem:[%s148] sm:$0xff]
    %s150 = scalar_lea.vmem [#allocation2], 48
    %v151 = vld [vmem:[%s150] sm:$0xff]
    %152 = xla_tuple %v149, %v151
    %153 = xla_tuple %152
    %v154 = vmul.f32 %v149, %v151
    %155 = xla_tuple %v154
    %s156 = scalar_lea.vmem %s2, 48
    %157 = vst [vmem:[%s156] sm:$0xff] %v154
    %s158 = scalar_lea.vmem [#allocation0], 104
    %v159 = vld [vmem:[%s158] sm:$0xff]
    %s160 = scalar_lea.vmem [#allocation2], 104
    %v161 = vld [vmem:[%s160] sm:$0xff]
    %162 = xla_tuple %v159, %v161
    %163 = xla_tuple %162
    %v164 = vmul.f32 %v159, %v161
    %165 = xla_tuple %v164
    %s166 = scalar_lea.vmem %s2, 104
    %167 = vst [vmem:[%s166] sm:$0xff] %v164
    %168 = vsyncpa [#allocation1], 1
    %169 = vsyncpa [#allocation3], 1

// kernel: bayesian_mlp_forward.1
$region0: #{bayesian_mlp_forward.1}
  #allocation0 [shape = 'u32[]', space=smem, size = 0x4, offset = 0x4, fixed_abs, tag = 'smem constant byte address 0x4 - core index']
  #allocation1 [shape = 'u32[72,128]{1,0:T(1,128)}', space=vmem, size = 0x9000, scoped, tag = 'internal scratch']
  #allocation2 [shape = 'f32[16,800]{1,0:T(8,128)}', space=vmem, size = 0xe000, scoped, tag = 'scratch operand']
  %s0 = inlined_call_operand.vmem [shape: bf16[2,16,392], index: 0, kind: input, shape index: {}]
  %s1 = inlined_call_operand.vmem [shape: bf16[2,392,800], index: 1, kind: input, shape index: {}]
  %s2 = inlined_call_operand.hbm [shape: bf16[2,392,800], index: 2, kind: input, shape index: {}]
  %s3 = inlined_call_operand.hbm [shape: bf16[2,392,800], index: 3, kind: input, shape index: {}]
  %s4 = inlined_call_operand.vmem [shape: f32[1,800], index: 4, kind: input, shape index: {}]
  %s5 = inlined_call_operand.vmem [shape: f32[800,10], index: 5, kind: input, shape index: {}]
  %s6 = inlined_call_operand.vmem [shape: f32[1,10], index: 6, kind: input, shape index: {}]
  %s7 = inlined_call_operand.hbm [shape: f32[16,10], index: 7, kind: output, shape index: {}]
  %s8 = sld [smem:[#allocation0]]
  $region77: #{bayesian_mlp_forward.1} parent=0
    _
  %s10 = ssub.s32 1, %s8
  %s11 = scalar_select 0, %s10, %s8
  $region1: #{bayesian_mlp_forward.1} parent=0
    #allocation3 [shape = 'u8[1404928]{0}', space=vmem, size = 0x157000, scoped, tag = 'input window, operand 2']
    #allocation4 [shape = 's32[2]{0}', space=sflag, size = 0x8, scoped, tag = 'scoped memory for bayesian_mlp_forward.1']
    #allocation5 [shape = 's32[2]{0}', space=sflag, size = 0x8, scoped, tag = 'scoped memory for bayesian_mlp_forward.1']
    #allocation6 [shape = 'u8[1404928]{0}', space=vmem, size = 0x157000, scoped, tag = 'input window, operand 3']
    #allocation7 [shape = 's32[2]{0}', space=sflag, size = 0x8, scoped, tag = 'scoped memory for bayesian_mlp_forward.1']
    #allocation8 [shape = 'u8[8192]{0}', space=vmem, size = 0x2000, scoped, tag = 'output window, operand 0, single buffered']
    %12 = vsyncpa [#allocation4], 0
    %s13 = scalar_lea.sflag [#allocation4], 1
    %14 = vsyncpa %s13, 0
    %15 = vsyncpa [#allocation7], 0
    %s16 = scalar_lea.sflag [#allocation7], 1
    %17 = vsyncpa %s16, 0
    %18 = vsyncpa [#allocation5], 0
    loop: start=0, step=1, limit=4
    $region2: #{bayesian_mlp_forward.1} parent=1 // loop_pre_header
      _
    $region3: #{bayesian_mlp_forward.1} parent=1 // loop_header
      %s20 = sphi 0, %s24
      %p21 = scmp.ge.s32.totalorder %s20, 4
      %s27 = sphi 0, %s39
      %s28 = sphi 0, %s35
      %s29 = sphi 0, %s27
      %s30 = sphi 0, %s28
      %s31 = sphi 0, %s29
      %s32 = sphi 0, %s30
      %s44 = sphi 0, %s46
      %s47 = sphi 0, %s44
      %s48 = sphi 0, %s47
      %s64 = sphi 0, %s48
      %s70 = sphi 0, %s72
      %s73 = sphi 0, %s70
      %s74 = sphi 0, %s73
      %s90 = sphi 0, %s74
      %s96 = sphi 0, %s98
      %s99 = sphi 0, %s96
      %s100 = sphi 0, %s99
      %s116 = sphi 0, %s100
      %s122 = sphi 0, %s124
      %s125 = sphi 0, %s122
      %s126 = sphi 0, %s125
      %s142 = sphi 0, %s126
      %s146 = sphi 0, %s146
      %s148 = sphi 0, %s146
      %s149 = sphi 0, %s148
      %s163 = sphi 0, %s149
      %s167 = sphi 0, %s167
      %s169 = sphi 0, %s167
      %s170 = sphi 0, %s169
      %s184 = sphi 0, %s170
      %s188 = sphi 0, %s188
      %s190 = sphi 0, %s188
      %s191 = sphi 0, %s190
      %s205 = sphi 0, %s191
      %s211 = sphi 0, %s213
      %s214 = sphi 0, %s211
      %s215 = sphi 0, %s214
      %s231 = sphi 0, %s215
    $region4: #{bayesian_mlp_forward.1} parent=1 // loop_header_branch
      %23 = sbr.rel (%p21) target = $region8
    $region5: #{bayesian_mlp_forward.1} parent=1 // loop_body
      %s25 = ssub.s32 %s20, 1
      %s26 = ssub.s32 %s20, 2
      %s33 = sadd.s32 1, %s28
      %p34 = scmp.ge.s32.totalorder %s33, 2
      %s35 = scalar_select %p34, 0, %s33
      %s36 = sadd.s32 1, %s27
      %s37 = scalar_select %p34, %s36, %s27
      %p38 = scmp.ge.s32.totalorder %s37, 1
      %s39 = scalar_select %p38, 0, %s37
      %s40 = ssub.s32 %s28, %s35
      %s41 = ssub.s32 %s27, %s39
      %s42 = sor.u32 %s40, %s41
      %p43 = scmp.eq.s32.totalorder %s42, 0
      %s45 = sadd.s32 %s44, 1
      %s46 = scalar_select %p43, %s44, %s45
      %p49 = pneg %p43
      %p50 = scmp.eq.s32.totalorder %s20, 1
      %p51 = por %p49, %p50
      %p52 = scmp.ne.s32.totalorder %s44, %s47
      %p53 = scmp.eq.s32.totalorder %s20, 0
      %p54 = por %p52, %p53
      %p55 = scmp.ne.s32.totalorder %s44, %s47
      %p56 = scmp.eq.s32.totalorder %s25, 1
      %p57 = por %p55, %p56
      %p58 = scmp.ne.s32.totalorder %s47, %s48
      %p59 = scmp.eq.s32.totalorder %s25, 0
      %p60 = por %p58, %p59
      %p61 = scmp.ne.s32.totalorder %s47, %s48
      %p62 = scmp.eq.s32.totalorder %s26, 1
      %p63 = por %p61, %p62
      %p65 = scmp.ne.s32.totalorder %s48, %s64
      %p66 = scmp.eq.s32.totalorder %s26, 0
      %p67 = por %p65, %p66
      %s68 = ssub.s32 %s28, %s35
      %p69 = scmp.eq.s32.totalorder %s68, 0
      %s71 = sadd.s32 %s70, 1
      %s72 = scalar_select %p69, %s70, %s71
      %p75 = pneg %p69
      %p76 = scmp.eq.s32.totalorder %s20, 1
      %p77 = por %p75, %p76
      %p78 = scmp.ne.s32.totalorder %s70, %s73
      %p79 = scmp.eq.s32.totalorder %s20, 0
      %p80 = por %p78, %p79
      %p81 = scmp.ne.s32.totalorder %s70, %s73
      %p82 = scmp.eq.s32.totalorder %s25, 1
      %p83 = por %p81, %p82
      %p84 = scmp.ne.s32.totalorder %s73, %s74
      %p85 = scmp.eq.s32.totalorder %s25, 0
      %p86 = por %p84, %p85
      %p87 = scmp.ne.s32.totalorder %s73, %s74
      %p88 = scmp.eq.s32.totalorder %s26, 1
      %p89 = por %p87, %p88
      %p91 = scmp.ne.s32.totalorder %s74, %s90
      %p92 = scmp.eq.s32.totalorder %s26, 0
      %p93 = por %p91, %p92
      %s94 = ssub.s32 %s28, %s35
      %p95 = scmp.eq.s32.totalorder %s94, 0
      %s97 = sadd.s32 %s96, 1
      %s98 = scalar_select %p95, %s96, %s97
      %p101 = pneg %p95
      %p102 = scmp.eq.s32.totalorder %s20, 1
      %p103 = por %p101, %p102
      %p104 = scmp.ne.s32.totalorder %s96, %s99
      %p105 = scmp.eq.s32.totalorder %s20, 0
      %p106 = por %p104, %p105
      %p107 = scmp.ne.s32.totalorder %s96, %s99
      %p108 = scmp.eq.s32.totalorder %s25, 1
      %p109 = por %p107, %p108
      %p110 = scmp.ne.s32.totalorder %s99, %s100
      %p111 = scmp.eq.s32.totalorder %s25, 0
      %p112 = por %p110, %p111
      %p113 = scmp.ne.s32.totalorder %s99, %s100
      %p114 = scmp.eq.s32.totalorder %s26, 1
      %p115 = por %p113, %p114
      %p117 = scmp.ne.s32.totalorder %s100, %s116
      %p118 = scmp.eq.s32.totalorder %s26, 0
      %p119 = por %p117, %p118
      %s120 = ssub.s32 %s28, %s35
      %p121 = scmp.eq.s32.totalorder %s120, 0
      %s123 = sadd.s32 %s122, 1
      %s124 = scalar_select %p121, %s122, %s123
      %p127 = pneg %p121
      %p128 = scmp.eq.s32.totalorder %s20, 1
      %p129 = por %p127, %p128
      %p130 = scmp.ne.s32.totalorder %s122, %s125
      %p131 = scmp.eq.s32.totalorder %s20, 0
      %p132 = por %p130, %p131
      %p133 = scmp.ne.s32.totalorder %s122, %s125
      %p134 = scmp.eq.s32.totalorder %s25, 1
      %p135 = por %p133, %p134
      %p136 = scmp.ne.s32.totalorder %s125, %s126
      %p137 = scmp.eq.s32.totalorder %s25, 0
      %p138 = por %p136, %p137
      %p139 = scmp.ne.s32.totalorder %s125, %s126
      %p140 = scmp.eq.s32.totalorder %s26, 1
      %p141 = por %p139, %p140
      %p143 = scmp.ne.s32.totalorder %s126, %s142
      %p144 = scmp.eq.s32.totalorder %s26, 0
      %p145 = por %p143, %p144
      %s147 = sadd.s32 %s146, 1
      %p150 = scmp.eq.s32.totalorder %s20, 1
      %p151 = scmp.ne.s32.totalorder %s146, %s148
      %p152 = scmp.eq.s32.totalorder %s20, 0
      %p153 = por %p151, %p152
      %p154 = scmp.ne.s32.totalorder %s146, %s148
      %p155 = scmp.eq.s32.totalorder %s25, 1
      %p156 = por %p154, %p155
      %p157 = scmp.ne.s32.totalorder %s148, %s149
      %p158 = scmp.eq.s32.totalorder %s25, 0
      %p159 = por %p157, %p158
      %p160 = scmp.ne.s32.totalorder %s148, %s149
      %p161 = scmp.eq.s32.totalorder %s26, 1
      %p162 = por %p160, %p161
      %p164 = scmp.ne.s32.totalorder %s149, %s163
      %p165 = scmp.eq.s32.totalorder %s26, 0
      %p166 = por %p164, %p165
      %s168 = sadd.s32 %s167, 1
      %p171 = scmp.eq.s32.totalorder %s20, 1
      %p172 = scmp.ne.s32.totalorder %s167, %s169
      %p173 = scmp.eq.s32.totalorder %s20, 0
      %p174 = por %p172, %p173
      %p175 = scmp.ne.s32.totalorder %s167, %s169
      %p176 = scmp.eq.s32.totalorder %s25, 1
      %p177 = por %p175, %p176
      %p178 = scmp.ne.s32.totalorder %s169, %s170
      %p179 = scmp.eq.s32.totalorder %s25, 0
      %p180 = por %p178, %p179
      %p181 = scmp.ne.s32.totalorder %s169, %s170
      %p182 = scmp.eq.s32.totalorder %s26, 1
      %p183 = por %p181, %p182
      %p185 = scmp.ne.s32.totalorder %s170, %s184
      %p186 = scmp.eq.s32.totalorder %s26, 0
      %p187 = por %p185, %p186
      %s189 = sadd.s32 %s188, 1
      %p192 = scmp.eq.s32.totalorder %s20, 1
      %p193 = scmp.ne.s32.totalorder %s188, %s190
      %p194 = scmp.eq.s32.totalorder %s20, 0
      %p195 = por %p193, %p194
      %p196 = scmp.ne.s32.totalorder %s188, %s190
      %p197 = scmp.eq.s32.totalorder %s25, 1
      %p198 = por %p196, %p197
      %p199 = scmp.ne.s32.totalorder %s190, %s191
      %p200 = scmp.eq.s32.totalorder %s25, 0
      %p201 = por %p199, %p200
      %p202 = scmp.ne.s32.totalorder %s190, %s191
      %p203 = scmp.eq.s32.totalorder %s26, 1
      %p204 = por %p202, %p203
      %p206 = scmp.ne.s32.totalorder %s191, %s205
      %p207 = scmp.eq.s32.totalorder %s26, 0
      %p208 = por %p206, %p207
      %s209 = ssub.s32 %s27, %s39
      %p210 = scmp.eq.s32.totalorder %s209, 0
      %s212 = sadd.s32 %s211, 1
      %s213 = scalar_select %p210, %s211, %s212
      %p216 = pneg %p210
      %p217 = scmp.eq.s32.totalorder %s20, 1
      %p218 = por %p216, %p217
      %p219 = scmp.ne.s32.totalorder %s211, %s214
      %p220 = scmp.eq.s32.totalorder %s20, 0
      %p221 = por %p219, %p220
      %p222 = scmp.ne.s32.totalorder %s211, %s214
      %p223 = scmp.eq.s32.totalorder %s25, 1
      %p224 = por %p222, %p223
      %p225 = scmp.ne.s32.totalorder %s214, %s215
      %p226 = scmp.eq.s32.totalorder %s25, 0
      %p227 = por %p225, %p226
      %p228 = scmp.ne.s32.totalorder %s214, %s215
      %p229 = scmp.eq.s32.totalorder %s26, 1
      %p230 = por %p228, %p229
      %p232 = scmp.ne.s32.totalorder %s215, %s231
      %p233 = scmp.eq.s32.totalorder %s26, 0
      %p234 = por %p232, %p233
      %p235 = scmp.le.s32.totalorder 1, %s20
      %p236 = scmp.lt.s32.totalorder %s20, 3
      %p237 = pnand %p235, %p236
      %p238 = pneg %p237
      // Predicated region
      $region9: #{bayesian_mlp_forward.1} parent=5 // pred_check
        _
      $region10: #{bayesian_mlp_forward.1} parent=5 // pred_check_branch
        %240 = sbr.rel (%p237) target = $region12
      $region11: #{bayesian_mlp_forward.1} parent=5 // pred_region
        %s241 = ssub.s32 %s20, 1
        // Predicated region
        $region13: #{bayesian_mlp_forward.1} parent=11 // pred_check
          %p242 = pneg %p159
        $region14: #{bayesian_mlp_forward.1} parent=11 // pred_check_branch
          %244 = sbr.rel (%p242) target = $region16
        $region15: #{bayesian_mlp_forward.1} parent=11 // pred_region
          _
        $region16: #{bayesian_mlp_forward.1} parent=11 // pred_fallthru
          _
        // Predicated region
        $region17: #{bayesian_mlp_forward.1} parent=11 // pred_check
          %p245 = pneg %p180
        $region18: #{bayesian_mlp_forward.1} parent=11 // pred_check_branch
          %247 = sbr.rel (%p245) target = $region20
        $region19: #{bayesian_mlp_forward.1} parent=11 // pred_region
          _
        $region20: #{bayesian_mlp_forward.1} parent=11 // pred_fallthru
          _
        // Predicated region
        $region21: #{bayesian_mlp_forward.1} parent=11 // pred_check
          %p248 = pneg %p201
        $region22: #{bayesian_mlp_forward.1} parent=11 // pred_check_branch
          %250 = sbr.rel (%p248) target = $region24
        $region23: #{bayesian_mlp_forward.1} parent=11 // pred_region
          _
        $region24: #{bayesian_mlp_forward.1} parent=11 // pred_fallthru
          _
      $region12: #{bayesian_mlp_forward.1} parent=5 // pred_fallthru
        _
      %p251 = scmp.lt.s32.totalorder %s20, 2
      // Predicated region
      $region25: #{bayesian_mlp_forward.1} parent=5 // pred_check
        %p252 = pneg %p251
      $region26: #{bayesian_mlp_forward.1} parent=5 // pred_check_branch
        %254 = sbr.rel (%p252) target = $region28
      $region27: #{bayesian_mlp_forward.1} parent=5 // pred_region
        // Predicated region
        $region29: #{bayesian_mlp_forward.1} parent=27 // pred_check
          %p255 = pneg %p54
        $region30: #{bayesian_mlp_forward.1} parent=27 // pred_check_branch
          %257 = sbr.rel (%p255) target = $region32
        $region31: #{bayesian_mlp_forward.1} parent=27 // pred_region
          %s258 = smul.u32 2, %s27
          %p259 = scmp.lt.s32.totalorder %s28, 1
          %s260 = scalar_select %p259, %s28, 1
          %p261 = scmp.lt.s32.totalorder %s258, 1
          %s262 = scalar_select %p261, %s258, 1
          %s263 = smul.addr %s262, 4
          %s264 = smul.addr %s260, 8
          %s265 = sadd.s32 %s263, %s264
          %s266 = smul.addr %s265, 4
          %s267 = scalar_lea.vmem %s0, %s266
          %s268 = smul.u32 2, %s27
        $region32: #{bayesian_mlp_forward.1} parent=27 // pred_fallthru
          _
        // Predicated region
        $region33: #{bayesian_mlp_forward.1} parent=27 // pred_check
          %p269 = pneg %p80
        $region34: #{bayesian_mlp_forward.1} parent=27 // pred_check_branch
          %271 = sbr.rel (%p269) target = $region36
        $region35: #{bayesian_mlp_forward.1} parent=27 // pred_region
          %p272 = scmp.lt.s32.totalorder %s28, 1
          %s273 = scalar_select %p272, %s28, 1
          %s274 = smul.addr %s273, 343
          %s275 = smul.addr %s274, 4
          %s276 = scalar_lea.vmem %s1, %s275
        $region36: #{bayesian_mlp_forward.1} parent=27 // pred_fallthru
          _
        // Predicated region
        $region37: #{bayesian_mlp_forward.1} parent=27 // pred_check
          %p277 = pneg %p106
        $region38: #{bayesian_mlp_forward.1} parent=27 // pred_check_branch
          %279 = sbr.rel (%p277) target = $region40
        $region39: #{bayesian_mlp_forward.1} parent=27 // pred_region
          %s280 = sand.u32 %s96, 1
          %s281 = scalar_lea.sflag [#allocation4], %s280
          %s282 = sand.u32 %s96, 1
          %s283 = smul.addr %s282, 1372
          %s284 = scalar_lea.vmem [#allocation3], %s283
          %286 = vsyncadd %s281, 0
          %s287 = smul.addr %s28, 343
          %s288 = smul.addr %s287, 4
          %s289 = scalar_lea.hbm %s2, %s288
          %s290 = sshll.u32 %s289, 4
          %s291 = int_to_ptr.hbm [resolvable:$true] %s290
          %s292 = sshll.u32 %s284, 4
          %s293 = int_to_ptr.vmem [resolvable:$true] %s292
          %298 = dma.hbm_to_vmem [thread:$0]  %s291, 21952, %s293, %s281, 448, 448, 28
        $region40: #{bayesian_mlp_forward.1} parent=27 // pred_fallthru
          _
        // Predicated region
        $region41: #{bayesian_mlp_forward.1} parent=27 // pred_check
          %p299 = pneg %p132
        $region42: #{bayesian_mlp_forward.1} parent=27 // pred_check_branch
          %301 = sbr.rel (%p299) target = $region44
        $region43: #{bayesian_mlp_forward.1} parent=27 // pred_region
          %s302 = sand.u32 %s122, 1
          %s303 = scalar_lea.sflag [#allocation7], %s302
          %s304 = sand.u32 %s122, 1
          %s305 = smul.addr %s304, 1372
          %s306 = scalar_lea.vmem [#allocation6], %s305
          %308 = vsyncadd %s303, 0
          %s309 = smul.addr %s28, 343
          %s310 = smul.addr %s309, 4
          %s311 = scalar_lea.hbm %s3, %s310
          %s312 = sshll.u32 %s311, 4
          %s313 = int_to_ptr.hbm [resolvable:$true] %s312
          %s314 = sshll.u32 %s306, 4
          %s315 = int_to_ptr.vmem [resolvable:$true] %s314
          %320 = dma.hbm_to_vmem [thread:$0]  %s313, 21952, %s315, %s303, 448, 448, 28
        $region44: #{bayesian_mlp_forward.1} parent=27 // pred_fallthru
          _
      $region28: #{bayesian_mlp_forward.1} parent=5 // pred_fallthru
        _
      %p321 = scmp.le.s32.totalorder 1, %s20
      %p322 = scmp.lt.s32.totalorder %s20, 3
      %p323 = pnand %p321, %p322
      %p324 = pneg %p323
      // Predicated region
      $region45: #{bayesian_mlp_forward.1} parent=5 // pred_check
        _
      $region46: #{bayesian_mlp_forward.1} parent=5 // pred_check_branch
        %326 = sbr.rel (%p323) target = $region48
      $region47: #{bayesian_mlp_forward.1} parent=5 // pred_region
        %s327 = ssub.s32 %s20, 1
        %s328 = sand.u32 %s99, 1
        %s329 = scalar_lea.sflag [#allocation4], %s328
        %s330 = sand.u32 %s99, 1
        %s331 = smul.addr %s330, 1372
        %s332 = scalar_lea.vmem [#allocation3], %s331
        // Predicated region
        $region49: #{bayesian_mlp_forward.1} parent=47 // pred_check
          %p333 = pneg %p112
        $region50: #{bayesian_mlp_forward.1} parent=47 // pred_check_branch
          %335 = sbr.rel (%p333) target = $region52
        $region51: #{bayesian_mlp_forward.1} parent=47 // pred_region
          %337 = dma.done %s329, 21952
        $region52: #{bayesian_mlp_forward.1} parent=47 // pred_fallthru
          _
        %s338 = sand.u32 %s125, 1
        %s339 = scalar_lea.sflag [#allocation7], %s338
        %s340 = sand.u32 %s125, 1
        %s341 = smul.addr %s340, 1372
        %s342 = scalar_lea.vmem [#allocation6], %s341
        // Predicated region
        $region53: #{bayesian_mlp_forward.1} parent=47 // pred_check
          %p343 = pneg %p138
        $region54: #{bayesian_mlp_forward.1} parent=47 // pred_check_branch
          %345 = sbr.rel (%p343) target = $region56
        $region55: #{bayesian_mlp_forward.1} parent=47 // pred_region
          %347 = dma.done %s339, 21952
        $region56: #{bayesian_mlp_forward.1} parent=47 // pred_fallthru
          _
        %s348 = smul.u32 2, %s29
        %p349 = scmp.lt.s32.totalorder %s30, 1
        %s350 = scalar_select %p349, %s30, 1
        %p351 = scmp.lt.s32.totalorder %s348, 1
        %s352 = scalar_select %p351, %s348, 1
        %s353 = smul.addr %s352, 4
        %s354 = smul.addr %s350, 8
        %s355 = sadd.s32 %s353, %s354
        %s356 = smul.addr %s355, 4
        %s357 = scalar_lea.vmem %s0, %s356
        %p358 = pneg %p60
        %p359 = pneg %p57
        %p360 = scmp.lt.s32.totalorder %s30, 1
        %s361 = scalar_select %p360, %s30, 1
        %s362 = smul.addr %s361, 343
        %s363 = smul.addr %s362, 4
        %s364 = scalar_lea.vmem %s1, %s363
        %p365 = pneg %p86
        %p366 = pneg %p83
        %s367 = sand.u32 %s99, 1
        %s368 = scalar_lea.sflag [#allocation4], %s367
        %s369 = sand.u32 %s99, 1
        %s370 = smul.addr %s369, 1372
        %s371 = scalar_lea.vmem [#allocation3], %s370
        %p372 = pneg %p112
        %p373 = pneg %p109
        %s374 = sand.u32 %s125, 1
        %s375 = scalar_lea.sflag [#allocation7], %s374
        %s376 = sand.u32 %s125, 1
        %s377 = smul.addr %s376, 1372
        %s378 = scalar_lea.vmem [#allocation6], %s377
        %p379 = pneg %p138
        %p380 = pneg %p135
        %p381 = pneg %p159
        %p382 = pneg %p156
        %p383 = pneg %p180
        %p384 = pneg %p177
        %p385 = pneg %p201
        %p386 = pneg %p198
        %p387 = pneg %p227
        %p388 = pneg %p224
        %s389 = smul.u32 2, %s29
        %p390 = scmp.lt.s32.totalorder %s30, 1
        %s391 = scalar_select %p390, %s30, 1
        %p392 = scmp.lt.s32.totalorder %s389, 1
        %s393 = scalar_select %p392, %s389, 1
        %s394 = smul.addr %s393, 4
        %s395 = smul.addr %s391, 8
        %s396 = sadd.s32 %s394, %s395
        %s397 = smul.addr %s396, 4
        %s398 = scalar_lea.vmem %s0, %s397
        %s399 = smul.u32 2, %s29
        %p400 = scmp.lt.s32.totalorder %s30, 1
        %s401 = scalar_select %p400, %s30, 1
        %s402 = smul.addr %s401, 343
        %s403 = smul.addr %s402, 4
        %s404 = scalar_lea.vmem %s1, %s403
        %s405 = smul.u32 2, %s29
        %p407 = scmp.eq.s32.totalorder %s30, 0
        // Predicated region
        $region57: #{bayesian_mlp_forward.1} parent=47 // pred_check
          %p408 = pneg %p407
        $region58: #{bayesian_mlp_forward.1} parent=47 // pred_check_branch
          %410 = sbr.rel (%p408) target = $region60
        $region59: #{bayesian_mlp_forward.1} parent=47 // pred_region
          %411 = vst [vmem:[#allocation2] sm:$0xff] 0.0
          %412 = vst [vmem:[#allocation2 + $0x8] sm:$0xff] 0.0
          %413 = vst [vmem:[#allocation2 + $0x10] sm:$0xff] 0.0
          %414 = vst [vmem:[#allocation2 + $0x18] sm:$0xff] 0.0
          %415 = vst [vmem:[#allocation2 + $0x20] sm:$0xff] 0.0
          %416 = vst [vmem:[#allocation2 + $0x28] sm:$0xff] 0.0
          %vm417 = vcmask 261120
          %418 = vst.msk [vmem:[#allocation2 + $0x30] sm:$0xff] %vm417, 0.0
          %419 = vst [vmem:[#allocation2 + $0x38] sm:$0xff] 0.0
          %420 = vst [vmem:[#allocation2 + $0x40] sm:$0xff] 0.0
          %421 = vst [vmem:[#allocation2 + $0x48] sm:$0xff] 0.0
          %422 = vst [vmem:[#allocation2 + $0x50] sm:$0xff] 0.0
          %423 = vst [vmem:[#allocation2 + $0x58] sm:$0xff] 0.0
          %424 = vst [vmem:[#allocation2 + $0x60] sm:$0xff] 0.0
          %425 = vst.msk [vmem:[#allocation2 + $0x68] sm:$0xff] %vm417, 0.0
        $region60: #{bayesian_mlp_forward.1} parent=47 // pred_fallthru
          _
        %v426 = vld [vmem:[%s404] sm:$0xff]
        %v427 = vld [vmem:[%s404 + $0x8] sm:$0xff]
        %v428 = vld [vmem:[%s404 + $0x10] sm:$0xff]
        %v429 = vld [vmem:[%s404 + $0x18] sm:$0xf]
        %v430 = vld [vmem:[%s404 + $0x1c] sm:$0xff]
        %v431 = vld [vmem:[%s404 + $0x24] sm:$0xff]
        %v432 = vld [vmem:[%s404 + $0x2c] sm:$0xff]
        %v433 = vld [vmem:[%s404 + $0x34] sm:$0xf]
        %v434 = vld [vmem:[%s404 + $0x38] sm:$0xff]
        %v435 = vld [vmem:[%s404 + $0x40] sm:$0xff]
        %v436 = vld [vmem:[%s404 + $0x48] sm:$0xff]
        %v437 = vld [vmem:[%s404 + $0x50] sm:$0xf]
        %v438 = vld [vmem:[%s404 + $0x54] sm:$0xff]
        %v439 = vld [vmem:[%s404 + $0x5c] sm:$0xff]
        %v440 = vld [vmem:[%s404 + $0x64] sm:$0xff]
        %v441 = vld [vmem:[%s404 + $0x6c] sm:$0xf]
        %v442 = vld [vmem:[%s404 + $0x70] sm:$0xff]
        %v443 = vld [vmem:[%s404 + $0x78] sm:$0xff]
        %v444 = vld [vmem:[%s404 + $0x80] sm:$0xff]
        %v445 = vld [vmem:[%s404 + $0x88] sm:$0xf]
        %v446 = vld [vmem:[%s404 + $0x8c] sm:$0xff]
        %v447 = vld [vmem:[%s404 + $0x94] sm:$0xff]
        %v448 = vld [vmem:[%s404 + $0x9c] sm:$0xff]
        %v449 = vld [vmem:[%s404 + $0xa4] sm:$0xf]
        %v450 = vld [vmem:[%s404 + $0xa8] sm:$0xff]
        %v451 = vld [vmem:[%s404 + $0xb0] sm:$0xff]
        %v452 = vld [vmem:[%s404 + $0xb8] sm:$0xff]
        %v453 = vld [vmem:[%s404 + $0xc0] sm:$0xf]
        %v454 = vld [vmem:[%s404 + $0xc4] sm:$0xff]
        %v455 = vld [vmem:[%s404 + $0xcc] sm:$0xff]
        %v456 = vld [vmem:[%s404 + $0xd4] sm:$0xff]
        %v457 = vld [vmem:[%s404 + $0xdc] sm:$0xf]
        %v458 = vld [vmem:[%s404 + $0xe0] sm:$0xff]
        %v459 = vld [vmem:[%s404 + $0xe8] sm:$0xff]
        %v460 = vld [vmem:[%s404 + $0xf0] sm:$0xff]
        %v461 = vld [vmem:[%s404 + $0xf8] sm:$0xf]
        %v462 = vld [vmem:[%s404 + $0xfc] sm:$0xff]
        %v463 = vld [vmem:[%s404 + $0x104] sm:$0xff]
        %v464 = vld [vmem:[%s404 + $0x10c] sm:$0xff]
        %v465 = vld [vmem:[%s404 + $0x114] sm:$0xf]
        %v466 = vld [vmem:[%s404 + $0x118] sm:$0xff]
        %v467 = vld [vmem:[%s404 + $0x120] sm:$0xff]
        %v468 = vld [vmem:[%s404 + $0x128] sm:$0xff]
        %v469 = vld [vmem:[%s404 + $0x130] sm:$0xf]
        %v470 = vld [vmem:[%s404 + $0x134] sm:$0xff]
        %v471 = vld [vmem:[%s404 + $0x13c] sm:$0xff]
        %v472 = vld [vmem:[%s404 + $0x144] sm:$0xff]
        %v473 = vld [vmem:[%s404 + $0x14c] sm:$0xf]
        %v474 = vld [vmem:[%s404 + $0x150] sm:$0xff]
        %v475 = vld [vmem:[%s404 + $0x158] sm:$0xff]
        %v476 = vld [vmem:[%s404 + $0x160] sm:$0xff]
        %v477 = vld [vmem:[%s404 + $0x168] sm:$0xf]
        %v478 = vld [vmem:[%s404 + $0x16c] sm:$0xff]
        %v479 = vld [vmem:[%s404 + $0x174] sm:$0xff]
        %v480 = vld [vmem:[%s404 + $0x17c] sm:$0xff]
        %v481 = vld [vmem:[%s404 + $0x184] sm:$0xf]
        %v482 = vld [vmem:[%s404 + $0x188] sm:$0xff]
        %v483 = vld [vmem:[%s404 + $0x190] sm:$0xff]
        %v484 = vld [vmem:[%s404 + $0x198] sm:$0xff]
        %v485 = vld [vmem:[%s404 + $0x1a0] sm:$0xf]
        %v486 = vld [vmem:[%s404 + $0x1a4] sm:$0xff]
        %v487 = vld [vmem:[%s404 + $0x1ac] sm:$0xff]
        %v488 = vld [vmem:[%s404 + $0x1b4] sm:$0xff]
        %v489 = vld [vmem:[%s404 + $0x1bc] sm:$0xf]
        %v490 = vld [vmem:[%s404 + $0x1c0] sm:$0xff]
        %v491 = vld [vmem:[%s404 + $0x1c8] sm:$0xff]
        %v492 = vld [vmem:[%s404 + $0x1d0] sm:$0xff]
        %v493 = vld [vmem:[%s404 + $0x1d8] sm:$0xf]
        %v494 = vld [vmem:[%s404 + $0x1dc] sm:$0xff]
        %v495 = vld [vmem:[%s404 + $0x1e4] sm:$0xff]
        %v496 = vld [vmem:[%s404 + $0x1ec] sm:$0xff]
        %v497 = vld [vmem:[%s404 + $0x1f4] sm:$0xf]
        %v498 = vld [vmem:[%s404 + $0x1f8] sm:$0xff]
        %v499 = vld [vmem:[%s404 + $0x200] sm:$0xff]
        %v500 = vld [vmem:[%s404 + $0x208] sm:$0xff]
        %v501 = vld [vmem:[%s404 + $0x210] sm:$0xf]
        %v502 = vld [vmem:[%s404 + $0x214] sm:$0xff]
        %v503 = vld [vmem:[%s404 + $0x21c] sm:$0xff]
        %v504 = vld [vmem:[%s404 + $0x224] sm:$0xff]
        %v505 = vld [vmem:[%s404 + $0x22c] sm:$0xf]
        %v506 = vld [vmem:[%s404 + $0x230] sm:$0xff]
        %v507 = vld [vmem:[%s404 + $0x238] sm:$0xff]
        %v508 = vld [vmem:[%s404 + $0x240] sm:$0xff]
        %v509 = vld [vmem:[%s404 + $0x248] sm:$0xf]
        %v510 = vld [vmem:[%s404 + $0x24c] sm:$0xff]
        %v511 = vld [vmem:[%s404 + $0x254] sm:$0xff]
        %v512 = vld [vmem:[%s404 + $0x25c] sm:$0xff]
        %v513 = vld [vmem:[%s404 + $0x264] sm:$0xf]
        %v514 = vld [vmem:[%s404 + $0x268] sm:$0xff]
        %v515 = vld [vmem:[%s404 + $0x270] sm:$0xff]
        %v516 = vld [vmem:[%s404 + $0x278] sm:$0xff]
        %v517 = vld [vmem:[%s404 + $0x280] sm:$0xf]
        %v518 = vld [vmem:[%s404 + $0x284] sm:$0xff]
        %v519 = vld [vmem:[%s404 + $0x28c] sm:$0xff]
        %v520 = vld [vmem:[%s404 + $0x294] sm:$0xff]
        %v521 = vld [vmem:[%s404 + $0x29c] sm:$0xf]
        %v522 = vld [vmem:[%s404 + $0x2a0] sm:$0xff]
        %v523 = vld [vmem:[%s404 + $0x2a8] sm:$0xff]
        %v524 = vld [vmem:[%s404 + $0x2b0] sm:$0xff]
        %v525 = vld [vmem:[%s404 + $0x2b8] sm:$0xf]
        %v526 = vld [vmem:[%s404 + $0x2bc] sm:$0xff]
        %v527 = vld [vmem:[%s404 + $0x2c4] sm:$0xff]
        %v528 = vld [vmem:[%s404 + $0x2cc] sm:$0xff]
        %v529 = vld [vmem:[%s404 + $0x2d4] sm:$0xf]
        %v530 = vld [vmem:[%s404 + $0x2d8] sm:$0xff]
        %v531 = vld [vmem:[%s404 + $0x2e0] sm:$0xff]
        %v532 = vld [vmem:[%s404 + $0x2e8] sm:$0xff]
        %v533 = vld [vmem:[%s404 + $0x2f0] sm:$0xf]
        %v534 = vld [vmem:[%s404 + $0x2f4] sm:$0xff]
        %v535 = vld [vmem:[%s404 + $0x2fc] sm:$0xff]
        %v536 = vld [vmem:[%s404 + $0x304] sm:$0xff]
        %v537 = vld [vmem:[%s404 + $0x30c] sm:$0xf]
        %v538 = vld [vmem:[%s404 + $0x310] sm:$0xff]
        %v539 = vld [vmem:[%s404 + $0x318] sm:$0xff]
        %v540 = vld [vmem:[%s404 + $0x320] sm:$0xff]
        %v541 = vld [vmem:[%s404 + $0x328] sm:$0xf]
        %v542 = vld [vmem:[%s404 + $0x32c] sm:$0xff]
        %v543 = vld [vmem:[%s404 + $0x334] sm:$0xff]
        %v544 = vld [vmem:[%s404 + $0x33c] sm:$0xff]
        %v545 = vld [vmem:[%s404 + $0x344] sm:$0xf]
        %v546 = vld [vmem:[%s404 + $0x348] sm:$0xff]
        %v547 = vld [vmem:[%s404 + $0x350] sm:$0xff]
        %v548 = vld [vmem:[%s404 + $0x358] sm:$0xff]
        %v549 = vld [vmem:[%s404 + $0x360] sm:$0xf]
        %v550 = vld [vmem:[%s404 + $0x364] sm:$0xff]
        %v551 = vld [vmem:[%s404 + $0x36c] sm:$0xff]
        %v552 = vld [vmem:[%s404 + $0x374] sm:$0xff]
        %v553 = vld [vmem:[%s404 + $0x37c] sm:$0xf]
        %v554 = vld [vmem:[%s404 + $0x380] sm:$0xff]
        %v555 = vld [vmem:[%s404 + $0x388] sm:$0xff]
        %v556 = vld [vmem:[%s404 + $0x390] sm:$0xff]
        %v557 = vld [vmem:[%s404 + $0x398] sm:$0xf]
        %v558 = vld [vmem:[%s404 + $0x39c] sm:$0xff]
        %v559 = vld [vmem:[%s404 + $0x3a4] sm:$0xff]
        %v560 = vld [vmem:[%s404 + $0x3ac] sm:$0xff]
        %v561 = vld [vmem:[%s404 + $0x3b4] sm:$0xf]
        %v562 = vld [vmem:[%s404 + $0x3b8] sm:$0xff]
        %v563 = vld [vmem:[%s404 + $0x3c0] sm:$0xff]
        %v564 = vld [vmem:[%s404 + $0x3c8] sm:$0xff]
        %v565 = vld [vmem:[%s404 + $0x3d0] sm:$0xf]
        %v566 = vld [vmem:[%s404 + $0x3d4] sm:$0xff]
        %v567 = vld [vmem:[%s404 + $0x3dc] sm:$0xff]
        %v568 = vld [vmem:[%s404 + $0x3e4] sm:$0xff]
        %v569 = vld [vmem:[%s404 + $0x3ec] sm:$0xf]
        %v570 = vld [vmem:[%s404 + $0x3f0] sm:$0xff]
        %v571 = vld [vmem:[%s404 + $0x3f8] sm:$0xff]
        %v572 = vld [vmem:[%s404 + $0x400] sm:$0xff]
        %v573 = vld [vmem:[%s404 + $0x408] sm:$0xf]
        %v574 = vld [vmem:[%s404 + $0x40c] sm:$0xff]
        %v575 = vld [vmem:[%s404 + $0x414] sm:$0xff]
        %v576 = vld [vmem:[%s404 + $0x41c] sm:$0xff]
        %v577 = vld [vmem:[%s404 + $0x424] sm:$0xf]
        %v578 = vld [vmem:[%s404 + $0x428] sm:$0xff]
        %v579 = vld [vmem:[%s404 + $0x430] sm:$0xff]
        %v580 = vld [vmem:[%s404 + $0x438] sm:$0xff]
        %v581 = vld [vmem:[%s404 + $0x440] sm:$0xf]
        %v582 = vld [vmem:[%s404 + $0x444] sm:$0xff]
        %v583 = vld [vmem:[%s404 + $0x44c] sm:$0xff]
        %v584 = vld [vmem:[%s404 + $0x454] sm:$0xff]
        %v585 = vld [vmem:[%s404 + $0x45c] sm:$0xf]
        %v586 = vld [vmem:[%s404 + $0x460] sm:$0xff]
        %v587 = vld [vmem:[%s404 + $0x468] sm:$0xff]
        %v588 = vld [vmem:[%s404 + $0x470] sm:$0xff]
        %v589 = vld [vmem:[%s404 + $0x478] sm:$0xf]
        %v590 = vld [vmem:[%s404 + $0x47c] sm:$0xff]
        %v591 = vld [vmem:[%s404 + $0x484] sm:$0xff]
        %v592 = vld [vmem:[%s404 + $0x48c] sm:$0xff]
        %v593 = vld [vmem:[%s404 + $0x494] sm:$0xf]
        %v594 = vld [vmem:[%s404 + $0x498] sm:$0xff]
        %v595 = vld [vmem:[%s404 + $0x4a0] sm:$0xff]
        %v596 = vld [vmem:[%s404 + $0x4a8] sm:$0xff]
        %v597 = vld [vmem:[%s404 + $0x4b0] sm:$0xf]
        %v598 = vld [vmem:[%s404 + $0x4b4] sm:$0xff]
        %v599 = vld [vmem:[%s404 + $0x4bc] sm:$0xff]
        %v600 = vld [vmem:[%s404 + $0x4c4] sm:$0xff]
        %v601 = vld [vmem:[%s404 + $0x4cc] sm:$0xf]
        %v602 = vld [vmem:[%s404 + $0x4d0] sm:$0xff]
        %v603 = vld [vmem:[%s404 + $0x4d8] sm:$0xff]
        %v604 = vld [vmem:[%s404 + $0x4e0] sm:$0xff]
        %v605 = vld [vmem:[%s404 + $0x4e8] sm:$0xf]
        %v606 = vld [vmem:[%s404 + $0x4ec] sm:$0xff]
        %v607 = vld [vmem:[%s404 + $0x4f4] sm:$0xff]
        %v608 = vld [vmem:[%s404 + $0x4fc] sm:$0xff]
        %v609 = vld [vmem:[%s404 + $0x504] sm:$0xf]
        %v610 = vld [vmem:[%s404 + $0x508] sm:$0xff]
        %v611 = vld [vmem:[%s404 + $0x510] sm:$0xff]
        %v612 = vld [vmem:[%s404 + $0x518] sm:$0xff]
        %v613 = vld [vmem:[%s404 + $0x520] sm:$0xf]
        %v614 = vld [vmem:[%s404 + $0x524] sm:$0xff]
        %v615 = vld [vmem:[%s404 + $0x52c] sm:$0xff]
        %v616 = vld [vmem:[%s404 + $0x534] sm:$0xff]
        %v617 = vld [vmem:[%s404 + $0x53c] sm:$0xf]
        %v618 = vld [vmem:[%s404 + $0x540] sm:$0xff]
        %v619 = vld [vmem:[%s404 + $0x548] sm:$0xff]
        %v620 = vld [vmem:[%s404 + $0x550] sm:$0xff]
        %v621 = vld [vmem:[%s404 + $0x558] sm:$0xf]
        %v622 = vld [vmem:[%s332] sm:$0xff]
        %v623 = vld [vmem:[%s332 + $0x8] sm:$0xff]
        %v624 = vld [vmem:[%s332 + $0x10] sm:$0xff]
        %v625 = vld [vmem:[%s332 + $0x18] sm:$0xf]
        %v626 = vld [vmem:[%s332 + $0x1c] sm:$0xff]
        %v627 = vld [vmem:[%s332 + $0x24] sm:$0xff]
        %v628 = vld [vmem:[%s332 + $0x2c] sm:$0xff]
        %v629 = vld [vmem:[%s332 + $0x34] sm:$0xf]
        %v630 = vld [vmem:[%s332 + $0x38] sm:$0xff]
        %v631 = vld [vmem:[%s332 + $0x40] sm:$0xff]
        %v632 = vld [vmem:[%s332 + $0x48] sm:$0xff]
        %v633 = vld [vmem:[%s332 + $0x50] sm:$0xf]
        %v634 = vld [vmem:[%s332 + $0x54] sm:$0xff]
        %v635 = vld [vmem:[%s332 + $0x5c] sm:$0xff]
        %v636 = vld [vmem:[%s332 + $0x64] sm:$0xff]
        %v637 = vld [vmem:[%s332 + $0x6c] sm:$0xf]
        %v638 = vld [vmem:[%s332 + $0x70] sm:$0xff]
        %v639 = vld [vmem:[%s332 + $0x78] sm:$0xff]
        %v640 = vld [vmem:[%s332 + $0x80] sm:$0xff]
        %v641 = vld [vmem:[%s332 + $0x88] sm:$0xf]
        %v642 = vld [vmem:[%s332 + $0x8c] sm:$0xff]
        %v643 = vld [vmem:[%s332 + $0x94] sm:$0xff]
        %v644 = vld [vmem:[%s332 + $0x9c] sm:$0xff]
        %v645 = vld [vmem:[%s332 + $0xa4] sm:$0xf]
        %v646 = vld [vmem:[%s332 + $0xa8] sm:$0xff]
        %v647 = vld [vmem:[%s332 + $0xb0] sm:$0xff]
        %v648 = vld [vmem:[%s332 + $0xb8] sm:$0xff]
        %v649 = vld [vmem:[%s332 + $0xc0] sm:$0xf]
        %v650 = vld [vmem:[%s332 + $0xc4] sm:$0xff]
        %v651 = vld [vmem:[%s332 + $0xcc] sm:$0xff]
        %v652 = vld [vmem:[%s332 + $0xd4] sm:$0xff]
        %v653 = vld [vmem:[%s332 + $0xdc] sm:$0xf]
        %v654 = vld [vmem:[%s332 + $0xe0] sm:$0xff]
        %v655 = vld [vmem:[%s332 + $0xe8] sm:$0xff]
        %v656 = vld [vmem:[%s332 + $0xf0] sm:$0xff]
        %v657 = vld [vmem:[%s332 + $0xf8] sm:$0xf]
        %v658 = vld [vmem:[%s332 + $0xfc] sm:$0xff]
        %v659 = vld [vmem:[%s332 + $0x104] sm:$0xff]
        %v660 = vld [vmem:[%s332 + $0x10c] sm:$0xff]
        %v661 = vld [vmem:[%s332 + $0x114] sm:$0xf]
        %v662 = vld [vmem:[%s332 + $0x118] sm:$0xff]
        %v663 = vld [vmem:[%s332 + $0x120] sm:$0xff]
        %v664 = vld [vmem:[%s332 + $0x128] sm:$0xff]
        %v665 = vld [vmem:[%s332 + $0x130] sm:$0xf]
        %v666 = vld [vmem:[%s332 + $0x134] sm:$0xff]
        %v667 = vld [vmem:[%s332 + $0x13c] sm:$0xff]
        %v668 = vld [vmem:[%s332 + $0x144] sm:$0xff]
        %v669 = vld [vmem:[%s332 + $0x14c] sm:$0xf]
        %v670 = vld [vmem:[%s332 + $0x150] sm:$0xff]
        %v671 = vld [vmem:[%s332 + $0x158] sm:$0xff]
        %v672 = vld [vmem:[%s332 + $0x160] sm:$0xff]
        %v673 = vld [vmem:[%s332 + $0x168] sm:$0xf]
        %v674 = vld [vmem:[%s332 + $0x16c] sm:$0xff]
        %v675 = vld [vmem:[%s332 + $0x174] sm:$0xff]
        %v676 = vld [vmem:[%s332 + $0x17c] sm:$0xff]
        %v677 = vld [vmem:[%s332 + $0x184] sm:$0xf]
        %v678 = vld [vmem:[%s332 + $0x188] sm:$0xff]
        %v679 = vld [vmem:[%s332 + $0x190] sm:$0xff]
        %v680 = vld [vmem:[%s332 + $0x198] sm:$0xff]
        %v681 = vld [vmem:[%s332 + $0x1a0] sm:$0xf]
        %v682 = vld [vmem:[%s332 + $0x1a4] sm:$0xff]
        %v683 = vld [vmem:[%s332 + $0x1ac] sm:$0xff]
        %v684 = vld [vmem:[%s332 + $0x1b4] sm:$0xff]
        %v685 = vld [vmem:[%s332 + $0x1bc] sm:$0xf]
        %v686 = vld [vmem:[%s332 + $0x1c0] sm:$0xff]
        %v687 = vld [vmem:[%s332 + $0x1c8] sm:$0xff]
        %v688 = vld [vmem:[%s332 + $0x1d0] sm:$0xff]
        %v689 = vld [vmem:[%s332 + $0x1d8] sm:$0xf]
        %v690 = vld [vmem:[%s332 + $0x1dc] sm:$0xff]
        %v691 = vld [vmem:[%s332 + $0x1e4] sm:$0xff]
        %v692 = vld [vmem:[%s332 + $0x1ec] sm:$0xff]
        %v693 = vld [vmem:[%s332 + $0x1f4] sm:$0xf]
        %v694 = vld [vmem:[%s332 + $0x1f8] sm:$0xff]
        %v695 = vld [vmem:[%s332 + $0x200] sm:$0xff]
        %v696 = vld [vmem:[%s332 + $0x208] sm:$0xff]
        %v697 = vld [vmem:[%s332 + $0x210] sm:$0xf]
        %v698 = vld [vmem:[%s332 + $0x214] sm:$0xff]
        %v699 = vld [vmem:[%s332 + $0x21c] sm:$0xff]
        %v700 = vld [vmem:[%s332 + $0x224] sm:$0xff]
        %v701 = vld [vmem:[%s332 + $0x22c] sm:$0xf]
        %v702 = vld [vmem:[%s332 + $0x230] sm:$0xff]
        %v703 = vld [vmem:[%s332 + $0x238] sm:$0xff]
        %v704 = vld [vmem:[%s332 + $0x240] sm:$0xff]
        %v705 = vld [vmem:[%s332 + $0x248] sm:$0xf]
        %v706 = vld [vmem:[%s332 + $0x24c] sm:$0xff]
        %v707 = vld [vmem:[%s332 + $0x254] sm:$0xff]
        %v708 = vld [vmem:[%s332 + $0x25c] sm:$0xff]
        %v709 = vld [vmem:[%s332 + $0x264] sm:$0xf]
        %v710 = vld [vmem:[%s332 + $0x268] sm:$0xff]
        %v711 = vld [vmem:[%s332 + $0x270] sm:$0xff]
        %v712 = vld [vmem:[%s332 + $0x278] sm:$0xff]
        %v713 = vld [vmem:[%s332 + $0x280] sm:$0xf]
        %v714 = vld [vmem:[%s332 + $0x284] sm:$0xff]
        %v715 = vld [vmem:[%s332 + $0x28c] sm:$0xff]
        %v716 = vld [vmem:[%s332 + $0x294] sm:$0xff]
        %v717 = vld [vmem:[%s332 + $0x29c] sm:$0xf]
        %v718 = vld [vmem:[%s332 + $0x2a0] sm:$0xff]
        %v719 = vld [vmem:[%s332 + $0x2a8] sm:$0xff]
        %v720 = vld [vmem:[%s332 + $0x2b0] sm:$0xff]
        %v721 = vld [vmem:[%s332 + $0x2b8] sm:$0xf]
        %v722 = vld [vmem:[%s332 + $0x2bc] sm:$0xff]
        %v723 = vld [vmem:[%s332 + $0x2c4] sm:$0xff]
        %v724 = vld [vmem:[%s332 + $0x2cc] sm:$0xff]
        %v725 = vld [vmem:[%s332 + $0x2d4] sm:$0xf]
        %v726 = vld [vmem:[%s332 + $0x2d8] sm:$0xff]
        %v727 = vld [vmem:[%s332 + $0x2e0] sm:$0xff]
        %v728 = vld [vmem:[%s332 + $0x2e8] sm:$0xff]
        %v729 = vld [vmem:[%s332 + $0x2f0] sm:$0xf]
        %v730 = vld [vmem:[%s332 + $0x2f4] sm:$0xff]
        %v731 = vld [vmem:[%s332 + $0x2fc] sm:$0xff]
        %v732 = vld [vmem:[%s332 + $0x304] sm:$0xff]
        %v733 = vld [vmem:[%s332 + $0x30c] sm:$0xf]
        %v734 = vld [vmem:[%s332 + $0x310] sm:$0xff]
        %v735 = vld [vmem:[%s332 + $0x318] sm:$0xff]
        %v736 = vld [vmem:[%s332 + $0x320] sm:$0xff]
        %v737 = vld [vmem:[%s332 + $0x328] sm:$0xf]
        %v738 = vld [vmem:[%s332 + $0x32c] sm:$0xff]
        %v739 = vld [vmem:[%s332 + $0x334] sm:$0xff]
        %v740 = vld [vmem:[%s332 + $0x33c] sm:$0xff]
        %v741 = vld [vmem:[%s332 + $0x344] sm:$0xf]
        %v742 = vld [vmem:[%s332 + $0x348] sm:$0xff]
        %v743 = vld [vmem:[%s332 + $0x350] sm:$0xff]
        %v744 = vld [vmem:[%s332 + $0x358] sm:$0xff]
        %v745 = vld [vmem:[%s332 + $0x360] sm:$0xf]
        %v746 = vld [vmem:[%s332 + $0x364] sm:$0xff]
        %v747 = vld [vmem:[%s332 + $0x36c] sm:$0xff]
        %v748 = vld [vmem:[%s332 + $0x374] sm:$0xff]
        %v749 = vld [vmem:[%s332 + $0x37c] sm:$0xf]
        %v750 = vld [vmem:[%s332 + $0x380] sm:$0xff]
        %v751 = vld [vmem:[%s332 + $0x388] sm:$0xff]
        %v752 = vld [vmem:[%s332 + $0x390] sm:$0xff]
        %v753 = vld [vmem:[%s332 + $0x398] sm:$0xf]
        %v754 = vld [vmem:[%s332 + $0x39c] sm:$0xff]
        %v755 = vld [vmem:[%s332 + $0x3a4] sm:$0xff]
        %v756 = vld [vmem:[%s332 + $0x3ac] sm:$0xff]
        %v757 = vld [vmem:[%s332 + $0x3b4] sm:$0xf]
        %v758 = vld [vmem:[%s332 + $0x3b8] sm:$0xff]
        %v759 = vld [vmem:[%s332 + $0x3c0] sm:$0xff]
        %v760 = vld [vmem:[%s332 + $0x3c8] sm:$0xff]
        %v761 = vld [vmem:[%s332 + $0x3d0] sm:$0xf]
        %v762 = vld [vmem:[%s332 + $0x3d4] sm:$0xff]
        %v763 = vld [vmem:[%s332 + $0x3dc] sm:$0xff]
        %v764 = vld [vmem:[%s332 + $0x3e4] sm:$0xff]
        %v765 = vld [vmem:[%s332 + $0x3ec] sm:$0xf]
        %v766 = vld [vmem:[%s332 + $0x3f0] sm:$0xff]
        %v767 = vld [vmem:[%s332 + $0x3f8] sm:$0xff]
        %v768 = vld [vmem:[%s332 + $0x400] sm:$0xff]
        %v769 = vld [vmem:[%s332 + $0x408] sm:$0xf]
        %v770 = vld [vmem:[%s332 + $0x40c] sm:$0xff]
        %v771 = vld [vmem:[%s332 + $0x414] sm:$0xff]
        %v772 = vld [vmem:[%s332 + $0x41c] sm:$0xff]
        %v773 = vld [vmem:[%s332 + $0x424] sm:$0xf]
        %v774 = vld [vmem:[%s332 + $0x428] sm:$0xff]
        %v775 = vld [vmem:[%s332 + $0x430] sm:$0xff]
        %v776 = vld [vmem:[%s332 + $0x438] sm:$0xff]
        %v777 = vld [vmem:[%s332 + $0x440] sm:$0xf]
        %v778 = vld [vmem:[%s332 + $0x444] sm:$0xff]
        %v779 = vld [vmem:[%s332 + $0x44c] sm:$0xff]
        %v780 = vld [vmem:[%s332 + $0x454] sm:$0xff]
        %v781 = vld [vmem:[%s332 + $0x45c] sm:$0xf]
        %v782 = vld [vmem:[%s332 + $0x460] sm:$0xff]
        %v783 = vld [vmem:[%s332 + $0x468] sm:$0xff]
        %v784 = vld [vmem:[%s332 + $0x470] sm:$0xff]
        %v785 = vld [vmem:[%s332 + $0x478] sm:$0xf]
        %v786 = vld [vmem:[%s332 + $0x47c] sm:$0xff]
        %v787 = vld [vmem:[%s332 + $0x484] sm:$0xff]
        %v788 = vld [vmem:[%s332 + $0x48c] sm:$0xff]
        %v789 = vld [vmem:[%s332 + $0x494] sm:$0xf]
        %v790 = vld [vmem:[%s332 + $0x498] sm:$0xff]
        %v791 = vld [vmem:[%s332 + $0x4a0] sm:$0xff]
        %v792 = vld [vmem:[%s332 + $0x4a8] sm:$0xff]
        %v793 = vld [vmem:[%s332 + $0x4b0] sm:$0xf]
        %v794 = vld [vmem:[%s332 + $0x4b4] sm:$0xff]
        %v795 = vld [vmem:[%s332 + $0x4bc] sm:$0xff]
        %v796 = vld [vmem:[%s332 + $0x4c4] sm:$0xff]
        %v797 = vld [vmem:[%s332 + $0x4cc] sm:$0xf]
        %v798 = vld [vmem:[%s332 + $0x4d0] sm:$0xff]
        %v799 = vld [vmem:[%s332 + $0x4d8] sm:$0xff]
        %v800 = vld [vmem:[%s332 + $0x4e0] sm:$0xff]
        %v801 = vld [vmem:[%s332 + $0x4e8] sm:$0xf]
        %v802 = vld [vmem:[%s332 + $0x4ec] sm:$0xff]
        %v803 = vld [vmem:[%s332 + $0x4f4] sm:$0xff]
        %v804 = vld [vmem:[%s332 + $0x4fc] sm:$0xff]
        %v805 = vld [vmem:[%s332 + $0x504] sm:$0xf]
        %v806 = vld [vmem:[%s332 + $0x508] sm:$0xff]
        %v807 = vld [vmem:[%s332 + $0x510] sm:$0xff]
        %v808 = vld [vmem:[%s332 + $0x518] sm:$0xff]
        %v809 = vld [vmem:[%s332 + $0x520] sm:$0xf]
        %v810 = vld [vmem:[%s332 + $0x524] sm:$0xff]
        %v811 = vld [vmem:[%s332 + $0x52c] sm:$0xff]
        %v812 = vld [vmem:[%s332 + $0x534] sm:$0xff]
        %v813 = vld [vmem:[%s332 + $0x53c] sm:$0xf]
        %v814 = vld [vmem:[%s332 + $0x540] sm:$0xff]
        %v815 = vld [vmem:[%s332 + $0x548] sm:$0xff]
        %v816 = vld [vmem:[%s332 + $0x550] sm:$0xff]
        %v817 = vld [vmem:[%s332 + $0x558] sm:$0xf]
        %v818 = vld [vmem:[%s342] sm:$0xff]
        %v819 = vld [vmem:[%s342 + $0x8] sm:$0xff]
        %v820 = vld [vmem:[%s342 + $0x10] sm:$0xff]
        %v821 = vld [vmem:[%s342 + $0x18] sm:$0xf]
        %v822 = vld [vmem:[%s342 + $0x1c] sm:$0xff]
        %v823 = vld [vmem:[%s342 + $0x24] sm:$0xff]
        %v824 = vld [vmem:[%s342 + $0x2c] sm:$0xff]
        %v825 = vld [vmem:[%s342 + $0x34] sm:$0xf]
        %v826 = vld [vmem:[%s342 + $0x38] sm:$0xff]
        %v827 = vld [vmem:[%s342 + $0x40] sm:$0xff]
        %v828 = vld [vmem:[%s342 + $0x48] sm:$0xff]
        %v829 = vld [vmem:[%s342 + $0x50] sm:$0xf]
        %v830 = vld [vmem:[%s342 + $0x54] sm:$0xff]
        %v831 = vld [vmem:[%s342 + $0x5c] sm:$0xff]
        %v832 = vld [vmem:[%s342 + $0x64] sm:$0xff]
        %v833 = vld [vmem:[%s342 + $0x6c] sm:$0xf]
        %v834 = vld [vmem:[%s342 + $0x70] sm:$0xff]
        %v835 = vld [vmem:[%s342 + $0x78] sm:$0xff]
        %v836 = vld [vmem:[%s342 + $0x80] sm:$0xff]
        %v837 = vld [vmem:[%s342 + $0x88] sm:$0xf]
        %v838 = vld [vmem:[%s342 + $0x8c] sm:$0xff]
        %v839 = vld [vmem:[%s342 + $0x94] sm:$0xff]
        %v840 = vld [vmem:[%s342 + $0x9c] sm:$0xff]
        %v841 = vld [vmem:[%s342 + $0xa4] sm:$0xf]
        %v842 = vld [vmem:[%s342 + $0xa8] sm:$0xff]
        %v843 = vld [vmem:[%s342 + $0xb0] sm:$0xff]
        %v844 = vld [vmem:[%s342 + $0xb8] sm:$0xff]
        %v845 = vld [vmem:[%s342 + $0xc0] sm:$0xf]
        %v846 = vld [vmem:[%s342 + $0xc4] sm:$0xff]
        %v847 = vld [vmem:[%s342 + $0xcc] sm:$0xff]
        %v848 = vld [vmem:[%s342 + $0xd4] sm:$0xff]
        %v849 = vld [vmem:[%s342 + $0xdc] sm:$0xf]
        %v850 = vld [vmem:[%s342 + $0xe0] sm:$0xff]
        %v851 = vld [vmem:[%s342 + $0xe8] sm:$0xff]
        %v852 = vld [vmem:[%s342 + $0xf0] sm:$0xff]
        %v853 = vld [vmem:[%s342 + $0xf8] sm:$0xf]
        %v854 = vld [vmem:[%s342 + $0xfc] sm:$0xff]
        %v855 = vld [vmem:[%s342 + $0x104] sm:$0xff]
        %v856 = vld [vmem:[%s342 + $0x10c] sm:$0xff]
        %v857 = vld [vmem:[%s342 + $0x114] sm:$0xf]
        %v858 = vld [vmem:[%s342 + $0x118] sm:$0xff]
        %v859 = vld [vmem:[%s342 + $0x120] sm:$0xff]
        %v860 = vld [vmem:[%s342 + $0x128] sm:$0xff]
        %v861 = vld [vmem:[%s342 + $0x130] sm:$0xf]
        %v862 = vld [vmem:[%s342 + $0x134] sm:$0xff]
        %v863 = vld [vmem:[%s342 + $0x13c] sm:$0xff]
        %v864 = vld [vmem:[%s342 + $0x144] sm:$0xff]
        %v865 = vld [vmem:[%s342 + $0x14c] sm:$0xf]
        %v866 = vld [vmem:[%s342 + $0x150] sm:$0xff]
        %v867 = vld [vmem:[%s342 + $0x158] sm:$0xff]
        %v868 = vld [vmem:[%s342 + $0x160] sm:$0xff]
        %v869 = vld [vmem:[%s342 + $0x168] sm:$0xf]
        %v870 = vld [vmem:[%s342 + $0x16c] sm:$0xff]
        %v871 = vld [vmem:[%s342 + $0x174] sm:$0xff]
        %v872 = vld [vmem:[%s342 + $0x17c] sm:$0xff]
        %v873 = vld [vmem:[%s342 + $0x184] sm:$0xf]
        %v874 = vld [vmem:[%s342 + $0x188] sm:$0xff]
        %v875 = vld [vmem:[%s342 + $0x190] sm:$0xff]
        %v876 = vld [vmem:[%s342 + $0x198] sm:$0xff]
        %v877 = vld [vmem:[%s342 + $0x1a0] sm:$0xf]
        %v878 = vld [vmem:[%s342 + $0x1a4] sm:$0xff]
        %v879 = vld [vmem:[%s342 + $0x1ac] sm:$0xff]
        %v880 = vld [vmem:[%s342 + $0x1b4] sm:$0xff]
        %v881 = vld [vmem:[%s342 + $0x1bc] sm:$0xf]
        %v882 = vld [vmem:[%s342 + $0x1c0] sm:$0xff]
        %v883 = vld [vmem:[%s342 + $0x1c8] sm:$0xff]
        %v884 = vld [vmem:[%s342 + $0x1d0] sm:$0xff]
        %v885 = vld [vmem:[%s342 + $0x1d8] sm:$0xf]
        %v886 = vld [vmem:[%s342 + $0x1dc] sm:$0xff]
        %v887 = vld [vmem:[%s342 + $0x1e4] sm:$0xff]
        %v888 = vld [vmem:[%s342 + $0x1ec] sm:$0xff]
        %v889 = vld [vmem:[%s342 + $0x1f4] sm:$0xf]
        %v890 = vld [vmem:[%s342 + $0x1f8] sm:$0xff]
        %v891 = vld [vmem:[%s342 + $0x200] sm:$0xff]
        %v892 = vld [vmem:[%s342 + $0x208] sm:$0xff]
        %v893 = vld [vmem:[%s342 + $0x210] sm:$0xf]
        %v894 = vld [vmem:[%s342 + $0x214] sm:$0xff]
        %v895 = vld [vmem:[%s342 + $0x21c] sm:$0xff]
        %v896 = vld [vmem:[%s342 + $0x224] sm:$0xff]
        %v897 = vld [vmem:[%s342 + $0x22c] sm:$0xf]
        %v898 = vld [vmem:[%s342 + $0x230] sm:$0xff]
        %v899 = vld [vmem:[%s342 + $0x238] sm:$0xff]
        %v900 = vld [vmem:[%s342 + $0x240] sm:$0xff]
        %v901 = vld [vmem:[%s342 + $0x248] sm:$0xf]
        %v902 = vld [vmem:[%s342 + $0x24c] sm:$0xff]
        %v903 = vld [vmem:[%s342 + $0x254] sm:$0xff]
        %v904 = vld [vmem:[%s342 + $0x25c] sm:$0xff]
        %v905 = vld [vmem:[%s342 + $0x264] sm:$0xf]
        %v906 = vld [vmem:[%s342 + $0x268] sm:$0xff]
        %v907 = vld [vmem:[%s342 + $0x270] sm:$0xff]
        %v908 = vld [vmem:[%s342 + $0x278] sm:$0xff]
        %v909 = vld [vmem:[%s342 + $0x280] sm:$0xf]
        %v910 = vld [vmem:[%s342 + $0x284] sm:$0xff]
        %v911 = vld [vmem:[%s342 + $0x28c] sm:$0xff]
        %v912 = vld [vmem:[%s342 + $0x294] sm:$0xff]
        %v913 = vld [vmem:[%s342 + $0x29c] sm:$0xf]
        %v914 = vld [vmem:[%s342 + $0x2a0] sm:$0xff]
        %v915 = vld [vmem:[%s342 + $0x2a8] sm:$0xff]
        %v916 = vld [vmem:[%s342 + $0x2b0] sm:$0xff]
        %v917 = vld [vmem:[%s342 + $0x2b8] sm:$0xf]
        %v918 = vld [vmem:[%s342 + $0x2bc] sm:$0xff]
        %v919 = vld [vmem:[%s342 + $0x2c4] sm:$0xff]
        %v920 = vld [vmem:[%s342 + $0x2cc] sm:$0xff]
        %v921 = vld [vmem:[%s342 + $0x2d4] sm:$0xf]
        %v922 = vld [vmem:[%s342 + $0x2d8] sm:$0xff]
        %v923 = vld [vmem:[%s342 + $0x2e0] sm:$0xff]
        %v924 = vld [vmem:[%s342 + $0x2e8] sm:$0xff]
        %v925 = vld [vmem:[%s342 + $0x2f0] sm:$0xf]
        %v926 = vld [vmem:[%s342 + $0x2f4] sm:$0xff]
        %v927 = vld [vmem:[%s342 + $0x2fc] sm:$0xff]
        %v928 = vld [vmem:[%s342 + $0x304] sm:$0xff]
        %v929 = vld [vmem:[%s342 + $0x30c] sm:$0xf]
        %v930 = vld [vmem:[%s342 + $0x310] sm:$0xff]
        %v931 = vld [vmem:[%s342 + $0x318] sm:$0xff]
        %v932 = vld [vmem:[%s342 + $0x320] sm:$0xff]
        %v933 = vld [vmem:[%s342 + $0x328] sm:$0xf]
        %v934 = vld [vmem:[%s342 + $0x32c] sm:$0xff]
        %v935 = vld [vmem:[%s342 + $0x334] sm:$0xff]
        %v936 = vld [vmem:[%s342 + $0x33c] sm:$0xff]
        %v937 = vld [vmem:[%s342 + $0x344] sm:$0xf]
        %v938 = vld [vmem:[%s342 + $0x348] sm:$0xff]
        %v939 = vld [vmem:[%s342 + $0x350] sm:$0xff]
        %v940 = vld [vmem:[%s342 + $0x358] sm:$0xff]
        %v941 = vld [vmem:[%s342 + $0x360] sm:$0xf]
        %v942 = vld [vmem:[%s342 + $0x364] sm:$0xff]
        %v943 = vld [vmem:[%s342 + $0x36c] sm:$0xff]
        %v944 = vld [vmem:[%s342 + $0x374] sm:$0xff]
        %v945 = vld [vmem:[%s342 + $0x37c] sm:$0xf]
        %v946 = vld [vmem:[%s342 + $0x380] sm:$0xff]
        %v947 = vld [vmem:[%s342 + $0x388] sm:$0xff]
        %v948 = vld [vmem:[%s342 + $0x390] sm:$0xff]
        %v949 = vld [vmem:[%s342 + $0x398] sm:$0xf]
        %v950 = vld [vmem:[%s342 + $0x39c] sm:$0xff]
        %v951 = vld [vmem:[%s342 + $0x3a4] sm:$0xff]
        %v952 = vld [vmem:[%s342 + $0x3ac] sm:$0xff]
        %v953 = vld [vmem:[%s342 + $0x3b4] sm:$0xf]
        %v954 = vld [vmem:[%s342 + $0x3b8] sm:$0xff]
        %v955 = vld [vmem:[%s342 + $0x3c0] sm:$0xff]
        %v956 = vld [vmem:[%s342 + $0x3c8] sm:$0xff]
        %v957 = vld [vmem:[%s342 + $0x3d0] sm:$0xf]
        %v958 = vld [vmem:[%s342 + $0x3d4] sm:$0xff]
        %v959 = vld [vmem:[%s342 + $0x3dc] sm:$0xff]
        %v960 = vld [vmem:[%s342 + $0x3e4] sm:$0xff]
        %v961 = vld [vmem:[%s342 + $0x3ec] sm:$0xf]
        %v962 = vld [vmem:[%s342 + $0x3f0] sm:$0xff]
        %v963 = vld [vmem:[%s342 + $0x3f8] sm:$0xff]
        %v964 = vld [vmem:[%s342 + $0x400] sm:$0xff]
        %v965 = vld [vmem:[%s342 + $0x408] sm:$0xf]
        %v966 = vld [vmem:[%s342 + $0x40c] sm:$0xff]
        %v967 = vld [vmem:[%s342 + $0x414] sm:$0xff]
        %v968 = vld [vmem:[%s342 + $0x41c] sm:$0xff]
        %v969 = vld [vmem:[%s342 + $0x424] sm:$0xf]
        %v970 = vld [vmem:[%s342 + $0x428] sm:$0xff]
        %v971 = vld [vmem:[%s342 + $0x430] sm:$0xff]
        %v972 = vld [vmem:[%s342 + $0x438] sm:$0xff]
        %v973 = vld [vmem:[%s342 + $0x440] sm:$0xf]
        %v974 = vld [vmem:[%s342 + $0x444] sm:$0xff]
        %v975 = vld [vmem:[%s342 + $0x44c] sm:$0xff]
        %v976 = vld [vmem:[%s342 + $0x454] sm:$0xff]
        %v977 = vld [vmem:[%s342 + $0x45c] sm:$0xf]
        %v978 = vld [vmem:[%s342 + $0x460] sm:$0xff]
        %v979 = vld [vmem:[%s342 + $0x468] sm:$0xff]
        %v980 = vld [vmem:[%s342 + $0x470] sm:$0xff]
        %v981 = vld [vmem:[%s342 + $0x478] sm:$0xf]
        %v982 = vld [vmem:[%s342 + $0x47c] sm:$0xff]
        %v983 = vld [vmem:[%s342 + $0x484] sm:$0xff]
        %v984 = vld [vmem:[%s342 + $0x48c] sm:$0xff]
        %v985 = vld [vmem:[%s342 + $0x494] sm:$0xf]
        %v986 = vld [vmem:[%s342 + $0x498] sm:$0xff]
        %v987 = vld [vmem:[%s342 + $0x4a0] sm:$0xff]
        %v988 = vld [vmem:[%s342 + $0x4a8] sm:$0xff]
        %v989 = vld [vmem:[%s342 + $0x4b0] sm:$0xf]
        %v990 = vld [vmem:[%s342 + $0x4b4] sm:$0xff]
        %v991 = vld [vmem:[%s342 + $0x4bc] sm:$0xff]
        %v992 = vld [vmem:[%s342 + $0x4c4] sm:$0xff]
        %v993 = vld [vmem:[%s342 + $0x4cc] sm:$0xf]
        %v994 = vld [vmem:[%s342 + $0x4d0] sm:$0xff]
        %v995 = vld [vmem:[%s342 + $0x4d8] sm:$0xff]
        %v996 = vld [vmem:[%s342 + $0x4e0] sm:$0xff]
        %v997 = vld [vmem:[%s342 + $0x4e8] sm:$0xf]
        %v998 = vld [vmem:[%s342 + $0x4ec] sm:$0xff]
        %v999 = vld [vmem:[%s342 + $0x4f4] sm:$0xff]
        %v1000 = vld [vmem:[%s342 + $0x4fc] sm:$0xff]
        %v1001 = vld [vmem:[%s342 + $0x504] sm:$0xf]
        %v1002 = vld [vmem:[%s342 + $0x508] sm:$0xff]
        %v1003 = vld [vmem:[%s342 + $0x510] sm:$0xff]
        %v1004 = vld [vmem:[%s342 + $0x518] sm:$0xff]
        %v1005 = vld [vmem:[%s342 + $0x520] sm:$0xf]
        %v1006 = vld [vmem:[%s342 + $0x524] sm:$0xff]
        %v1007 = vld [vmem:[%s342 + $0x52c] sm:$0xff]
        %v1008 = vld [vmem:[%s342 + $0x534] sm:$0xff]
        %v1009 = vld [vmem:[%s342 + $0x53c] sm:$0xf]
        %v1010 = vld [vmem:[%s342 + $0x540] sm:$0xff]
        %v1011 = vld [vmem:[%s342 + $0x548] sm:$0xff]
        %v1012 = vld [vmem:[%s342 + $0x550] sm:$0xff]
        %v1013 = vld [vmem:[%s342 + $0x558] sm:$0xf]
        %v1014 = vunpack.c.l.bf16 %v622
        %v1015 = vunpack.c.h.bf16 %v622
        %v1016 = vunpack.c.l.bf16 %v623
        %v1017 = vunpack.c.h.bf16 %v623
        %v1018 = vunpack.c.l.bf16 %v624
        %v1019 = vunpack.c.h.bf16 %v624
        %v1020 = vunpack.c.l.bf16 %v625
        %v1021 = vunpack.c.l.bf16 %v626
        %v1022 = vunpack.c.h.bf16 %v626
        %v1023 = vunpack.c.l.bf16 %v627
        %v1024 = vunpack.c.h.bf16 %v627
        %v1025 = vunpack.c.l.bf16 %v628
        %v1026 = vunpack.c.h.bf16 %v628
        %v1027 = vunpack.c.l.bf16 %v629
        %v1028 = vunpack.c.l.bf16 %v630
        %v1029 = vunpack.c.h.bf16 %v630
        %v1030 = vunpack.c.l.bf16 %v631
        %v1031 = vunpack.c.h.bf16 %v631
        %v1032 = vunpack.c.l.bf16 %v632
        %v1033 = vunpack.c.h.bf16 %v632
        %v1034 = vunpack.c.l.bf16 %v633
        %v1035 = vunpack.c.l.bf16 %v634
        %v1036 = vunpack.c.h.bf16 %v634
        %v1037 = vunpack.c.l.bf16 %v635
        %v1038 = vunpack.c.h.bf16 %v635
        %v1039 = vunpack.c.l.bf16 %v636
        %v1040 = vunpack.c.h.bf16 %v636
        %v1041 = vunpack.c.l.bf16 %v637
        %v1042 = vunpack.c.l.bf16 %v638
        %v1043 = vunpack.c.h.bf16 %v638
        %v1044 = vunpack.c.l.bf16 %v639
        %v1045 = vunpack.c.h.bf16 %v639
        %v1046 = vunpack.c.l.bf16 %v640
        %v1047 = vunpack.c.h.bf16 %v640
        %v1048 = vunpack.c.l.bf16 %v641
        %v1049 = vunpack.c.l.bf16 %v642
        %v1050 = vunpack.c.h.bf16 %v642
        %v1051 = vunpack.c.l.bf16 %v643
        %v1052 = vunpack.c.h.bf16 %v643
        %v1053 = vunpack.c.l.bf16 %v644
        %v1054 = vunpack.c.h.bf16 %v644
        %v1055 = vunpack.c.l.bf16 %v645
        %v1056 = vunpack.c.l.bf16 %v646
        %v1057 = vunpack.c.h.bf16 %v646
        %v1058 = vunpack.c.l.bf16 %v647
        %v1059 = vunpack.c.h.bf16 %v647
        %v1060 = vunpack.c.l.bf16 %v648
        %v1061 = vunpack.c.h.bf16 %v648
        %v1062 = vunpack.c.l.bf16 %v649
        %v1063 = vunpack.c.l.bf16 %v650
        %v1064 = vunpack.c.h.bf16 %v650
        %v1065 = vunpack.c.l.bf16 %v651
        %v1066 = vunpack.c.h.bf16 %v651
        %v1067 = vunpack.c.l.bf16 %v652
        %v1068 = vunpack.c.h.bf16 %v652
        %v1069 = vunpack.c.l.bf16 %v653
        %v1070 = vunpack.c.l.bf16 %v654
        %v1071 = vunpack.c.h.bf16 %v654
        %v1072 = vunpack.c.l.bf16 %v655
        %v1073 = vunpack.c.h.bf16 %v655
        %v1074 = vunpack.c.l.bf16 %v656
        %v1075 = vunpack.c.h.bf16 %v656
        %v1076 = vunpack.c.l.bf16 %v657
        %v1077 = vunpack.c.l.bf16 %v658
        %v1078 = vunpack.c.h.bf16 %v658
        %v1079 = vunpack.c.l.bf16 %v659
        %v1080 = vunpack.c.h.bf16 %v659
        %v1081 = vunpack.c.l.bf16 %v660
        %v1082 = vunpack.c.h.bf16 %v660
        %v1083 = vunpack.c.l.bf16 %v661
        %v1084 = vunpack.c.l.bf16 %v662
        %v1085 = vunpack.c.h.bf16 %v662
        %v1086 = vunpack.c.l.bf16 %v663
        %v1087 = vunpack.c.h.bf16 %v663
        %v1088 = vunpack.c.l.bf16 %v664
        %v1089 = vunpack.c.h.bf16 %v664
        %v1090 = vunpack.c.l.bf16 %v665
        %v1091 = vunpack.c.l.bf16 %v666
        %v1092 = vunpack.c.h.bf16 %v666
        %v1093 = vunpack.c.l.bf16 %v667
        %v1094 = vunpack.c.h.bf16 %v667
        %v1095 = vunpack.c.l.bf16 %v668
        %v1096 = vunpack.c.h.bf16 %v668
        %v1097 = vunpack.c.l.bf16 %v669
        %v1098 = vunpack.c.l.bf16 %v670
        %v1099 = vunpack.c.h.bf16 %v670
        %v1100 = vunpack.c.l.bf16 %v671
        %v1101 = vunpack.c.h.bf16 %v671
        %v1102 = vunpack.c.l.bf16 %v672
        %v1103 = vunpack.c.h.bf16 %v672
        %v1104 = vunpack.c.l.bf16 %v673
        %v1105 = vunpack.c.l.bf16 %v674
        %v1106 = vunpack.c.h.bf16 %v674
        %v1107 = vunpack.c.l.bf16 %v675
        %v1108 = vunpack.c.h.bf16 %v675
        %v1109 = vunpack.c.l.bf16 %v676
        %v1110 = vunpack.c.h.bf16 %v676
        %v1111 = vunpack.c.l.bf16 %v677
        %v1112 = vunpack.c.l.bf16 %v678
        %v1113 = vunpack.c.h.bf16 %v678
        %v1114 = vunpack.c.l.bf16 %v679
        %v1115 = vunpack.c.h.bf16 %v679
        %v1116 = vunpack.c.l.bf16 %v680
        %v1117 = vunpack.c.h.bf16 %v680
        %v1118 = vunpack.c.l.bf16 %v681
        %v1119 = vunpack.c.l.bf16 %v682
        %v1120 = vunpack.c.h.bf16 %v682
        %v1121 = vunpack.c.l.bf16 %v683
        %v1122 = vunpack.c.h.bf16 %v683
        %v1123 = vunpack.c.l.bf16 %v684
        %v1124 = vunpack.c.h.bf16 %v684
        %v1125 = vunpack.c.l.bf16 %v685
        %v1126 = vunpack.c.l.bf16 %v686
        %v1127 = vunpack.c.h.bf16 %v686
        %v1128 = vunpack.c.l.bf16 %v687
        %v1129 = vunpack.c.h.bf16 %v687
        %v1130 = vunpack.c.l.bf16 %v688
        %v1131 = vunpack.c.h.bf16 %v688
        %v1132 = vunpack.c.l.bf16 %v689
        %v1133 = vunpack.c.l.bf16 %v690
        %v1134 = vunpack.c.h.bf16 %v690
        %v1135 = vunpack.c.l.bf16 %v691
        %v1136 = vunpack.c.h.bf16 %v691
        %v1137 = vunpack.c.l.bf16 %v692
        %v1138 = vunpack.c.h.bf16 %v692
        %v1139 = vunpack.c.l.bf16 %v693
        %v1140 = vunpack.c.l.bf16 %v694
        %v1141 = vunpack.c.h.bf16 %v694
        %v1142 = vunpack.c.l.bf16 %v695
        %v1143 = vunpack.c.h.bf16 %v695
        %v1144 = vunpack.c.l.bf16 %v696
        %v1145 = vunpack.c.h.bf16 %v696
        %v1146 = vunpack.c.l.bf16 %v697
        %v1147 = vunpack.c.l.bf16 %v698
        %v1148 = vunpack.c.h.bf16 %v698
        %v1149 = vunpack.c.l.bf16 %v699
        %v1150 = vunpack.c.h.bf16 %v699
        %v1151 = vunpack.c.l.bf16 %v700
        %v1152 = vunpack.c.h.bf16 %v700
        %v1153 = vunpack.c.l.bf16 %v701
        %v1154 = vunpack.c.l.bf16 %v702
        %v1155 = vunpack.c.h.bf16 %v702
        %v1156 = vunpack.c.l.bf16 %v703
        %v1157 = vunpack.c.h.bf16 %v703
        %v1158 = vunpack.c.l.bf16 %v704
        %v1159 = vunpack.c.h.bf16 %v704
        %v1160 = vunpack.c.l.bf16 %v705
        %v1161 = vunpack.c.l.bf16 %v706
        %v1162 = vunpack.c.h.bf16 %v706
        %v1163 = vunpack.c.l.bf16 %v707
        %v1164 = vunpack.c.h.bf16 %v707
        %v1165 = vunpack.c.l.bf16 %v708
        %v1166 = vunpack.c.h.bf16 %v708
        %v1167 = vunpack.c.l.bf16 %v709
        %v1168 = vunpack.c.l.bf16 %v710
        %v1169 = vunpack.c.h.bf16 %v710
        %v1170 = vunpack.c.l.bf16 %v711
        %v1171 = vunpack.c.h.bf16 %v711
        %v1172 = vunpack.c.l.bf16 %v712
        %v1173 = vunpack.c.h.bf16 %v712
        %v1174 = vunpack.c.l.bf16 %v713
        %v1175 = vunpack.c.l.bf16 %v714
        %v1176 = vunpack.c.h.bf16 %v714
        %v1177 = vunpack.c.l.bf16 %v715
        %v1178 = vunpack.c.h.bf16 %v715
        %v1179 = vunpack.c.l.bf16 %v716
        %v1180 = vunpack.c.h.bf16 %v716
        %v1181 = vunpack.c.l.bf16 %v717
        %v1182 = vunpack.c.l.bf16 %v718
        %v1183 = vunpack.c.h.bf16 %v718
        %v1184 = vunpack.c.l.bf16 %v719
        %v1185 = vunpack.c.h.bf16 %v719
        %v1186 = vunpack.c.l.bf16 %v720
        %v1187 = vunpack.c.h.bf16 %v720
        %v1188 = vunpack.c.l.bf16 %v721
        %v1189 = vunpack.c.l.bf16 %v722
        %v1190 = vunpack.c.h.bf16 %v722
        %v1191 = vunpack.c.l.bf16 %v723
        %v1192 = vunpack.c.h.bf16 %v723
        %v1193 = vunpack.c.l.bf16 %v724
        %v1194 = vunpack.c.h.bf16 %v724
        %v1195 = vunpack.c.l.bf16 %v725
        %v1196 = vunpack.c.l.bf16 %v726
        %v1197 = vunpack.c.h.bf16 %v726
        %v1198 = vunpack.c.l.bf16 %v727
        %v1199 = vunpack.c.h.bf16 %v727
        %v1200 = vunpack.c.l.bf16 %v728
        %v1201 = vunpack.c.h.bf16 %v728
        %v1202 = vunpack.c.l.bf16 %v729
        %v1203 = vunpack.c.l.bf16 %v730
        %v1204 = vunpack.c.h.bf16 %v730
        %v1205 = vunpack.c.l.bf16 %v731
        %v1206 = vunpack.c.h.bf16 %v731
        %v1207 = vunpack.c.l.bf16 %v732
        %v1208 = vunpack.c.h.bf16 %v732
        %v1209 = vunpack.c.l.bf16 %v733
        %v1210 = vunpack.c.l.bf16 %v734
        %v1211 = vunpack.c.h.bf16 %v734
        %v1212 = vunpack.c.l.bf16 %v735
        %v1213 = vunpack.c.h.bf16 %v735
        %v1214 = vunpack.c.l.bf16 %v736
        %v1215 = vunpack.c.h.bf16 %v736
        %v1216 = vunpack.c.l.bf16 %v737
        %v1217 = vunpack.c.l.bf16 %v738
        %v1218 = vunpack.c.h.bf16 %v738
        %v1219 = vunpack.c.l.bf16 %v739
        %v1220 = vunpack.c.h.bf16 %v739
        %v1221 = vunpack.c.l.bf16 %v740
        %v1222 = vunpack.c.h.bf16 %v740
        %v1223 = vunpack.c.l.bf16 %v741
        %v1224 = vunpack.c.l.bf16 %v742
        %v1225 = vunpack.c.h.bf16 %v742
        %v1226 = vunpack.c.l.bf16 %v743
        %v1227 = vunpack.c.h.bf16 %v743
        %v1228 = vunpack.c.l.bf16 %v744
        %v1229 = vunpack.c.h.bf16 %v744
        %v1230 = vunpack.c.l.bf16 %v745
        %v1231 = vunpack.c.l.bf16 %v746
        %v1232 = vunpack.c.h.bf16 %v746
        %v1233 = vunpack.c.l.bf16 %v747
        %v1234 = vunpack.c.h.bf16 %v747
        %v1235 = vunpack.c.l.bf16 %v748
        %v1236 = vunpack.c.h.bf16 %v748
        %v1237 = vunpack.c.l.bf16 %v749
        %v1238 = vunpack.c.l.bf16 %v750
        %v1239 = vunpack.c.h.bf16 %v750
        %v1240 = vunpack.c.l.bf16 %v751
        %v1241 = vunpack.c.h.bf16 %v751
        %v1242 = vunpack.c.l.bf16 %v752
        %v1243 = vunpack.c.h.bf16 %v752
        %v1244 = vunpack.c.l.bf16 %v753
        %v1245 = vunpack.c.l.bf16 %v754
        %v1246 = vunpack.c.h.bf16 %v754
        %v1247 = vunpack.c.l.bf16 %v755
        %v1248 = vunpack.c.h.bf16 %v755
        %v1249 = vunpack.c.l.bf16 %v756
        %v1250 = vunpack.c.h.bf16 %v756
        %v1251 = vunpack.c.l.bf16 %v757
        %v1252 = vunpack.c.l.bf16 %v758
        %v1253 = vunpack.c.h.bf16 %v758
        %v1254 = vunpack.c.l.bf16 %v759
        %v1255 = vunpack.c.h.bf16 %v759
        %v1256 = vunpack.c.l.bf16 %v760
        %v1257 = vunpack.c.h.bf16 %v760
        %v1258 = vunpack.c.l.bf16 %v761
        %v1259 = vunpack.c.l.bf16 %v762
        %v1260 = vunpack.c.h.bf16 %v762
        %v1261 = vunpack.c.l.bf16 %v763
        %v1262 = vunpack.c.h.bf16 %v763
        %v1263 = vunpack.c.l.bf16 %v764
        %v1264 = vunpack.c.h.bf16 %v764
        %v1265 = vunpack.c.l.bf16 %v765
        %v1266 = vunpack.c.l.bf16 %v766
        %v1267 = vunpack.c.h.bf16 %v766
        %v1268 = vunpack.c.l.bf16 %v767
        %v1269 = vunpack.c.h.bf16 %v767
        %v1270 = vunpack.c.l.bf16 %v768
        %v1271 = vunpack.c.h.bf16 %v768
        %v1272 = vunpack.c.l.bf16 %v769
        %v1273 = vunpack.c.l.bf16 %v770
        %v1274 = vunpack.c.h.bf16 %v770
        %v1275 = vunpack.c.l.bf16 %v771
        %v1276 = vunpack.c.h.bf16 %v771
        %v1277 = vunpack.c.l.bf16 %v772
        %v1278 = vunpack.c.h.bf16 %v772
        %v1279 = vunpack.c.l.bf16 %v773
        %v1280 = vunpack.c.l.bf16 %v774
        %v1281 = vunpack.c.h.bf16 %v774
        %v1282 = vunpack.c.l.bf16 %v775
        %v1283 = vunpack.c.h.bf16 %v775
        %v1284 = vunpack.c.l.bf16 %v776
        %v1285 = vunpack.c.h.bf16 %v776
        %v1286 = vunpack.c.l.bf16 %v777
        %v1287 = vunpack.c.l.bf16 %v778
        %v1288 = vunpack.c.h.bf16 %v778
        %v1289 = vunpack.c.l.bf16 %v779
        %v1290 = vunpack.c.h.bf16 %v779
        %v1291 = vunpack.c.l.bf16 %v780
        %v1292 = vunpack.c.h.bf16 %v780
        %v1293 = vunpack.c.l.bf16 %v781
        %v1294 = vunpack.c.l.bf16 %v782
        %v1295 = vunpack.c.h.bf16 %v782
        %v1296 = vunpack.c.l.bf16 %v783
        %v1297 = vunpack.c.h.bf16 %v783
        %v1298 = vunpack.c.l.bf16 %v784
        %v1299 = vunpack.c.h.bf16 %v784
        %v1300 = vunpack.c.l.bf16 %v785
        %v1301 = vunpack.c.l.bf16 %v786
        %v1302 = vunpack.c.h.bf16 %v786
        %v1303 = vunpack.c.l.bf16 %v787
        %v1304 = vunpack.c.h.bf16 %v787
        %v1305 = vunpack.c.l.bf16 %v788
        %v1306 = vunpack.c.h.bf16 %v788
        %v1307 = vunpack.c.l.bf16 %v789
        %v1308 = vunpack.c.l.bf16 %v790
        %v1309 = vunpack.c.h.bf16 %v790
        %v1310 = vunpack.c.l.bf16 %v791
        %v1311 = vunpack.c.h.bf16 %v791
        %v1312 = vunpack.c.l.bf16 %v792
        %v1313 = vunpack.c.h.bf16 %v792
        %v1314 = vunpack.c.l.bf16 %v793
        %v1315 = vunpack.c.l.bf16 %v794
        %v1316 = vunpack.c.h.bf16 %v794
        %v1317 = vunpack.c.l.bf16 %v795
        %v1318 = vunpack.c.h.bf16 %v795
        %v1319 = vunpack.c.l.bf16 %v796
        %v1320 = vunpack.c.h.bf16 %v796
        %v1321 = vunpack.c.l.bf16 %v797
        %v1322 = vunpack.c.l.bf16 %v798
        %v1323 = vunpack.c.h.bf16 %v798
        %v1324 = vunpack.c.l.bf16 %v799
        %v1325 = vunpack.c.h.bf16 %v799
        %v1326 = vunpack.c.l.bf16 %v800
        %v1327 = vunpack.c.h.bf16 %v800
        %v1328 = vunpack.c.l.bf16 %v801
        %v1329 = vunpack.c.l.bf16 %v802
        %v1330 = vunpack.c.h.bf16 %v802
        %v1331 = vunpack.c.l.bf16 %v803
        %v1332 = vunpack.c.h.bf16 %v803
        %v1333 = vunpack.c.l.bf16 %v804
        %v1334 = vunpack.c.h.bf16 %v804
        %v1335 = vunpack.c.l.bf16 %v805
        %v1336 = vunpack.c.l.bf16 %v806
        %v1337 = vunpack.c.h.bf16 %v806
        %v1338 = vunpack.c.l.bf16 %v807
        %v1339 = vunpack.c.h.bf16 %v807
        %v1340 = vunpack.c.l.bf16 %v808
        %v1341 = vunpack.c.h.bf16 %v808
        %v1342 = vunpack.c.l.bf16 %v809
        %v1343 = vunpack.c.l.bf16 %v810
        %v1344 = vunpack.c.h.bf16 %v810
        %v1345 = vunpack.c.l.bf16 %v811
        %v1346 = vunpack.c.h.bf16 %v811
        %v1347 = vunpack.c.l.bf16 %v812
        %v1348 = vunpack.c.h.bf16 %v812
        %v1349 = vunpack.c.l.bf16 %v813
        %v1350 = vunpack.c.l.bf16 %v814
        %v1351 = vunpack.c.h.bf16 %v814
        %v1352 = vunpack.c.l.bf16 %v815
        %v1353 = vunpack.c.h.bf16 %v815
        %v1354 = vunpack.c.l.bf16 %v816
        %v1355 = vunpack.c.h.bf16 %v816
        %v1356 = vunpack.c.l.bf16 %v817
        %v1357 = vunpack.c.l.bf16 %v818
        %v1358 = vunpack.c.h.bf16 %v818
        %v1359 = vunpack.c.l.bf16 %v819
        %v1360 = vunpack.c.h.bf16 %v819
        %v1361 = vunpack.c.l.bf16 %v820
        %v1362 = vunpack.c.h.bf16 %v820
        %v1363 = vunpack.c.l.bf16 %v821
        %v1364 = vunpack.c.l.bf16 %v822
        %v1365 = vunpack.c.h.bf16 %v822
        %v1366 = vunpack.c.l.bf16 %v823
        %v1367 = vunpack.c.h.bf16 %v823
        %v1368 = vunpack.c.l.bf16 %v824
        %v1369 = vunpack.c.h.bf16 %v824
        %v1370 = vunpack.c.l.bf16 %v825
        %v1371 = vunpack.c.l.bf16 %v826
        %v1372 = vunpack.c.h.bf16 %v826
        %v1373 = vunpack.c.l.bf16 %v827
        %v1374 = vunpack.c.h.bf16 %v827
        %v1375 = vunpack.c.l.bf16 %v828
        %v1376 = vunpack.c.h.bf16 %v828
        %v1377 = vunpack.c.l.bf16 %v829
        %v1378 = vunpack.c.l.bf16 %v830
        %v1379 = vunpack.c.h.bf16 %v830
        %v1380 = vunpack.c.l.bf16 %v831
        %v1381 = vunpack.c.h.bf16 %v831
        %v1382 = vunpack.c.l.bf16 %v832
        %v1383 = vunpack.c.h.bf16 %v832
        %v1384 = vunpack.c.l.bf16 %v833
        %v1385 = vunpack.c.l.bf16 %v834
        %v1386 = vunpack.c.h.bf16 %v834
        %v1387 = vunpack.c.l.bf16 %v835
        %v1388 = vunpack.c.h.bf16 %v835
        %v1389 = vunpack.c.l.bf16 %v836
        %v1390 = vunpack.c.h.bf16 %v836
        %v1391 = vunpack.c.l.bf16 %v837
        %v1392 = vunpack.c.l.bf16 %v838
        %v1393 = vunpack.c.h.bf16 %v838
        %v1394 = vunpack.c.l.bf16 %v839
        %v1395 = vunpack.c.h.bf16 %v839
        %v1396 = vunpack.c.l.bf16 %v840
        %v1397 = vunpack.c.h.bf16 %v840
        %v1398 = vunpack.c.l.bf16 %v841
        %v1399 = vunpack.c.l.bf16 %v842
        %v1400 = vunpack.c.h.bf16 %v842
        %v1401 = vunpack.c.l.bf16 %v843
        %v1402 = vunpack.c.h.bf16 %v843
        %v1403 = vunpack.c.l.bf16 %v844
        %v1404 = vunpack.c.h.bf16 %v844
        %v1405 = vunpack.c.l.bf16 %v845
        %v1406 = vunpack.c.l.bf16 %v846
        %v1407 = vunpack.c.h.bf16 %v846
        %v1408 = vunpack.c.l.bf16 %v847
        %v1409 = vunpack.c.h.bf16 %v847
        %v1410 = vunpack.c.l.bf16 %v848
        %v1411 = vunpack.c.h.bf16 %v848
        %v1412 = vunpack.c.l.bf16 %v849
        %v1413 = vunpack.c.l.bf16 %v850
        %v1414 = vunpack.c.h.bf16 %v850
        %v1415 = vunpack.c.l.bf16 %v851
        %v1416 = vunpack.c.h.bf16 %v851
        %v1417 = vunpack.c.l.bf16 %v852
        %v1418 = vunpack.c.h.bf16 %v852
        %v1419 = vunpack.c.l.bf16 %v853
        %v1420 = vunpack.c.l.bf16 %v854
        %v1421 = vunpack.c.h.bf16 %v854
        %v1422 = vunpack.c.l.bf16 %v855
        %v1423 = vunpack.c.h.bf16 %v855
        %v1424 = vunpack.c.l.bf16 %v856
        %v1425 = vunpack.c.h.bf16 %v856
        %v1426 = vunpack.c.l.bf16 %v857
        %v1427 = vunpack.c.l.bf16 %v858
        %v1428 = vunpack.c.h.bf16 %v858
        %v1429 = vunpack.c.l.bf16 %v859
        %v1430 = vunpack.c.h.bf16 %v859
        %v1431 = vunpack.c.l.bf16 %v860
        %v1432 = vunpack.c.h.bf16 %v860
        %v1433 = vunpack.c.l.bf16 %v861
        %v1434 = vunpack.c.l.bf16 %v862
        %v1435 = vunpack.c.h.bf16 %v862
        %v1436 = vunpack.c.l.bf16 %v863
        %v1437 = vunpack.c.h.bf16 %v863
        %v1438 = vunpack.c.l.bf16 %v864
        %v1439 = vunpack.c.h.bf16 %v864
        %v1440 = vunpack.c.l.bf16 %v865
        %v1441 = vunpack.c.l.bf16 %v866
        %v1442 = vunpack.c.h.bf16 %v866
        %v1443 = vunpack.c.l.bf16 %v867
        %v1444 = vunpack.c.h.bf16 %v867
        %v1445 = vunpack.c.l.bf16 %v868
        %v1446 = vunpack.c.h.bf16 %v868
        %v1447 = vunpack.c.l.bf16 %v869
        %v1448 = vunpack.c.l.bf16 %v870
        %v1449 = vunpack.c.h.bf16 %v870
        %v1450 = vunpack.c.l.bf16 %v871
        %v1451 = vunpack.c.h.bf16 %v871
        %v1452 = vunpack.c.l.bf16 %v872
        %v1453 = vunpack.c.h.bf16 %v872
        %v1454 = vunpack.c.l.bf16 %v873
        %v1455 = vunpack.c.l.bf16 %v874
        %v1456 = vunpack.c.h.bf16 %v874
        %v1457 = vunpack.c.l.bf16 %v875
        %v1458 = vunpack.c.h.bf16 %v875
        %v1459 = vunpack.c.l.bf16 %v876
        %v1460 = vunpack.c.h.bf16 %v876
        %v1461 = vunpack.c.l.bf16 %v877
        %v1462 = vunpack.c.l.bf16 %v878
        %v1463 = vunpack.c.h.bf16 %v878
        %v1464 = vunpack.c.l.bf16 %v879
        %v1465 = vunpack.c.h.bf16 %v879
        %v1466 = vunpack.c.l.bf16 %v880
        %v1467 = vunpack.c.h.bf16 %v880
        %v1468 = vunpack.c.l.bf16 %v881
        %v1469 = vunpack.c.l.bf16 %v882
        %v1470 = vunpack.c.h.bf16 %v882
        %v1471 = vunpack.c.l.bf16 %v883
        %v1472 = vunpack.c.h.bf16 %v883
        %v1473 = vunpack.c.l.bf16 %v884
        %v1474 = vunpack.c.h.bf16 %v884
        %v1475 = vunpack.c.l.bf16 %v885
        %v1476 = vunpack.c.l.bf16 %v886
        %v1477 = vunpack.c.h.bf16 %v886
        %v1478 = vunpack.c.l.bf16 %v887
        %v1479 = vunpack.c.h.bf16 %v887
        %v1480 = vunpack.c.l.bf16 %v888
        %v1481 = vunpack.c.h.bf16 %v888
        %v1482 = vunpack.c.l.bf16 %v889
        %v1483 = vunpack.c.l.bf16 %v890
        %v1484 = vunpack.c.h.bf16 %v890
        %v1485 = vunpack.c.l.bf16 %v891
        %v1486 = vunpack.c.h.bf16 %v891
        %v1487 = vunpack.c.l.bf16 %v892
        %v1488 = vunpack.c.h.bf16 %v892
        %v1489 = vunpack.c.l.bf16 %v893
        %v1490 = vunpack.c.l.bf16 %v894
        %v1491 = vunpack.c.h.bf16 %v894
        %v1492 = vunpack.c.l.bf16 %v895
        %v1493 = vunpack.c.h.bf16 %v895
        %v1494 = vunpack.c.l.bf16 %v896
        %v1495 = vunpack.c.h.bf16 %v896
        %v1496 = vunpack.c.l.bf16 %v897
        %v1497 = vunpack.c.l.bf16 %v898
        %v1498 = vunpack.c.h.bf16 %v898
        %v1499 = vunpack.c.l.bf16 %v899
        %v1500 = vunpack.c.h.bf16 %v899
        %v1501 = vunpack.c.l.bf16 %v900
        %v1502 = vunpack.c.h.bf16 %v900
        %v1503 = vunpack.c.l.bf16 %v901
        %v1504 = vunpack.c.l.bf16 %v902
        %v1505 = vunpack.c.h.bf16 %v902
        %v1506 = vunpack.c.l.bf16 %v903
        %v1507 = vunpack.c.h.bf16 %v903
        %v1508 = vunpack.c.l.bf16 %v904
        %v1509 = vunpack.c.h.bf16 %v904
        %v1510 = vunpack.c.l.bf16 %v905
        %v1511 = vunpack.c.l.bf16 %v906
        %v1512 = vunpack.c.h.bf16 %v906
        %v1513 = vunpack.c.l.bf16 %v907
        %v1514 = vunpack.c.h.bf16 %v907
        %v1515 = vunpack.c.l.bf16 %v908
        %v1516 = vunpack.c.h.bf16 %v908
        %v1517 = vunpack.c.l.bf16 %v909
        %v1518 = vunpack.c.l.bf16 %v910
        %v1519 = vunpack.c.h.bf16 %v910
        %v1520 = vunpack.c.l.bf16 %v911
        %v1521 = vunpack.c.h.bf16 %v911
        %v1522 = vunpack.c.l.bf16 %v912
        %v1523 = vunpack.c.h.bf16 %v912
        %v1524 = vunpack.c.l.bf16 %v913
        %v1525 = vunpack.c.l.bf16 %v914
        %v1526 = vunpack.c.h.bf16 %v914
        %v1527 = vunpack.c.l.bf16 %v915
        %v1528 = vunpack.c.h.bf16 %v915
        %v1529 = vunpack.c.l.bf16 %v916
        %v1530 = vunpack.c.h.bf16 %v916
        %v1531 = vunpack.c.l.bf16 %v917
        %v1532 = vunpack.c.l.bf16 %v918
        %v1533 = vunpack.c.h.bf16 %v918
        %v1534 = vunpack.c.l.bf16 %v919
        %v1535 = vunpack.c.h.bf16 %v919
        %v1536 = vunpack.c.l.bf16 %v920
        %v1537 = vunpack.c.h.bf16 %v920
        %v1538 = vunpack.c.l.bf16 %v921
        %v1539 = vunpack.c.l.bf16 %v922
        %v1540 = vunpack.c.h.bf16 %v922
        %v1541 = vunpack.c.l.bf16 %v923
        %v1542 = vunpack.c.h.bf16 %v923
        %v1543 = vunpack.c.l.bf16 %v924
        %v1544 = vunpack.c.h.bf16 %v924
        %v1545 = vunpack.c.l.bf16 %v925
        %v1546 = vunpack.c.l.bf16 %v926
        %v1547 = vunpack.c.h.bf16 %v926
        %v1548 = vunpack.c.l.bf16 %v927
        %v1549 = vunpack.c.h.bf16 %v927
        %v1550 = vunpack.c.l.bf16 %v928
        %v1551 = vunpack.c.h.bf16 %v928
        %v1552 = vunpack.c.l.bf16 %v929
        %v1553 = vunpack.c.l.bf16 %v930
        %v1554 = vunpack.c.h.bf16 %v930
        %v1555 = vunpack.c.l.bf16 %v931
        %v1556 = vunpack.c.h.bf16 %v931
        %v1557 = vunpack.c.l.bf16 %v932
        %v1558 = vunpack.c.h.bf16 %v932
        %v1559 = vunpack.c.l.bf16 %v933
        %v1560 = vunpack.c.l.bf16 %v934
        %v1561 = vunpack.c.h.bf16 %v934
        %v1562 = vunpack.c.l.bf16 %v935
        %v1563 = vunpack.c.h.bf16 %v935
        %v1564 = vunpack.c.l.bf16 %v936
        %v1565 = vunpack.c.h.bf16 %v936
        %v1566 = vunpack.c.l.bf16 %v937
        %v1567 = vunpack.c.l.bf16 %v938
        %v1568 = vunpack.c.h.bf16 %v938
        %v1569 = vunpack.c.l.bf16 %v939
        %v1570 = vunpack.c.h.bf16 %v939
        %v1571 = vunpack.c.l.bf16 %v940
        %v1572 = vunpack.c.h.bf16 %v940
        %v1573 = vunpack.c.l.bf16 %v941
        %v1574 = vunpack.c.l.bf16 %v942
        %v1575 = vunpack.c.h.bf16 %v942
        %v1576 = vunpack.c.l.bf16 %v943
        %v1577 = vunpack.c.h.bf16 %v943
        %v1578 = vunpack.c.l.bf16 %v944
        %v1579 = vunpack.c.h.bf16 %v944
        %v1580 = vunpack.c.l.bf16 %v945
        %v1581 = vunpack.c.l.bf16 %v946
        %v1582 = vunpack.c.h.bf16 %v946
        %v1583 = vunpack.c.l.bf16 %v947
        %v1584 = vunpack.c.h.bf16 %v947
        %v1585 = vunpack.c.l.bf16 %v948
        %v1586 = vunpack.c.h.bf16 %v948
        %v1587 = vunpack.c.l.bf16 %v949
        %v1588 = vunpack.c.l.bf16 %v950
        %v1589 = vunpack.c.h.bf16 %v950
        %v1590 = vunpack.c.l.bf16 %v951
        %v1591 = vunpack.c.h.bf16 %v951
        %v1592 = vunpack.c.l.bf16 %v952
        %v1593 = vunpack.c.h.bf16 %v952
        %v1594 = vunpack.c.l.bf16 %v953
        %v1595 = vunpack.c.l.bf16 %v954
        %v1596 = vunpack.c.h.bf16 %v954
        %v1597 = vunpack.c.l.bf16 %v955
        %v1598 = vunpack.c.h.bf16 %v955
        %v1599 = vunpack.c.l.bf16 %v956
        %v1600 = vunpack.c.h.bf16 %v956
        %v1601 = vunpack.c.l.bf16 %v957
        %v1602 = vunpack.c.l.bf16 %v958
        %v1603 = vunpack.c.h.bf16 %v958
        %v1604 = vunpack.c.l.bf16 %v959
        %v1605 = vunpack.c.h.bf16 %v959
        %v1606 = vunpack.c.l.bf16 %v960
        %v1607 = vunpack.c.h.bf16 %v960
        %v1608 = vunpack.c.l.bf16 %v961
        %v1609 = vunpack.c.l.bf16 %v962
        %v1610 = vunpack.c.h.bf16 %v962
        %v1611 = vunpack.c.l.bf16 %v963
        %v1612 = vunpack.c.h.bf16 %v963
        %v1613 = vunpack.c.l.bf16 %v964
        %v1614 = vunpack.c.h.bf16 %v964
        %v1615 = vunpack.c.l.bf16 %v965
        %v1616 = vunpack.c.l.bf16 %v966
        %v1617 = vunpack.c.h.bf16 %v966
        %v1618 = vunpack.c.l.bf16 %v967
        %v1619 = vunpack.c.h.bf16 %v967
        %v1620 = vunpack.c.l.bf16 %v968
        %v1621 = vunpack.c.h.bf16 %v968
        %v1622 = vunpack.c.l.bf16 %v969
        %v1623 = vunpack.c.l.bf16 %v970
        %v1624 = vunpack.c.h.bf16 %v970
        %v1625 = vunpack.c.l.bf16 %v971
        %v1626 = vunpack.c.h.bf16 %v971
        %v1627 = vunpack.c.l.bf16 %v972
        %v1628 = vunpack.c.h.bf16 %v972
        %v1629 = vunpack.c.l.bf16 %v973
        %v1630 = vunpack.c.l.bf16 %v974
        %v1631 = vunpack.c.h.bf16 %v974
        %v1632 = vunpack.c.l.bf16 %v975
        %v1633 = vunpack.c.h.bf16 %v975
        %v1634 = vunpack.c.l.bf16 %v976
        %v1635 = vunpack.c.h.bf16 %v976
        %v1636 = vunpack.c.l.bf16 %v977
        %v1637 = vunpack.c.l.bf16 %v978
        %v1638 = vunpack.c.h.bf16 %v978
        %v1639 = vunpack.c.l.bf16 %v979
        %v1640 = vunpack.c.h.bf16 %v979
        %v1641 = vunpack.c.l.bf16 %v980
        %v1642 = vunpack.c.h.bf16 %v980
        %v1643 = vunpack.c.l.bf16 %v981
        %v1644 = vunpack.c.l.bf16 %v982
        %v1645 = vunpack.c.h.bf16 %v982
        %v1646 = vunpack.c.l.bf16 %v983
        %v1647 = vunpack.c.h.bf16 %v983
        %v1648 = vunpack.c.l.bf16 %v984
        %v1649 = vunpack.c.h.bf16 %v984
        %v1650 = vunpack.c.l.bf16 %v985
        %v1651 = vunpack.c.l.bf16 %v986
        %v1652 = vunpack.c.h.bf16 %v986
        %v1653 = vunpack.c.l.bf16 %v987
        %v1654 = vunpack.c.h.bf16 %v987
        %v1655 = vunpack.c.l.bf16 %v988
        %v1656 = vunpack.c.h.bf16 %v988
        %v1657 = vunpack.c.l.bf16 %v989
        %v1658 = vunpack.c.l.bf16 %v990
        %v1659 = vunpack.c.h.bf16 %v990
        %v1660 = vunpack.c.l.bf16 %v991
        %v1661 = vunpack.c.h.bf16 %v991
        %v1662 = vunpack.c.l.bf16 %v992
        %v1663 = vunpack.c.h.bf16 %v992
        %v1664 = vunpack.c.l.bf16 %v993
        %v1665 = vunpack.c.l.bf16 %v994
        %v1666 = vunpack.c.h.bf16 %v994
        %v1667 = vunpack.c.l.bf16 %v995
        %v1668 = vunpack.c.h.bf16 %v995
        %v1669 = vunpack.c.l.bf16 %v996
        %v1670 = vunpack.c.h.bf16 %v996
        %v1671 = vunpack.c.l.bf16 %v997
        %v1672 = vunpack.c.l.bf16 %v998
        %v1673 = vunpack.c.h.bf16 %v998
        %v1674 = vunpack.c.l.bf16 %v999
        %v1675 = vunpack.c.h.bf16 %v999
        %v1676 = vunpack.c.l.bf16 %v1000
        %v1677 = vunpack.c.h.bf16 %v1000
        %v1678 = vunpack.c.l.bf16 %v1001
        %v1679 = vunpack.c.l.bf16 %v1002
        %v1680 = vunpack.c.h.bf16 %v1002
        %v1681 = vunpack.c.l.bf16 %v1003
        %v1682 = vunpack.c.h.bf16 %v1003
        %v1683 = vunpack.c.l.bf16 %v1004
        %v1684 = vunpack.c.h.bf16 %v1004
        %v1685 = vunpack.c.l.bf16 %v1005
        %v1686 = vunpack.c.l.bf16 %v1006
        %v1687 = vunpack.c.h.bf16 %v1006
        %v1688 = vunpack.c.l.bf16 %v1007
        %v1689 = vunpack.c.h.bf16 %v1007
        %v1690 = vunpack.c.l.bf16 %v1008
        %v1691 = vunpack.c.h.bf16 %v1008
        %v1692 = vunpack.c.l.bf16 %v1009
        %v1693 = vunpack.c.l.bf16 %v1010
        %v1694 = vunpack.c.h.bf16 %v1010
        %v1695 = vunpack.c.l.bf16 %v1011
        %v1696 = vunpack.c.h.bf16 %v1011
        %v1697 = vunpack.c.l.bf16 %v1012
        %v1698 = vunpack.c.h.bf16 %v1012
        %v1699 = vunpack.c.l.bf16 %v1013
        %v1700 = vmul.f32 %v1014, %v1357
        %v1701 = vmul.f32 %v1015, %v1358
        %v1702 = vmul.f32 %v1016, %v1359
        %v1703 = vmul.f32 %v1017, %v1360
        %v1704 = vmul.f32 %v1018, %v1361
        %v1705 = vmul.f32 %v1019, %v1362
        %v1706 = vmul.f32 %v1020, %v1363
        %v1707 = vmul.f32 %v1021, %v1364
        %v1708 = vmul.f32 %v1022, %v1365
        %v1709 = vmul.f32 %v1023, %v1366
        %v1710 = vmul.f32 %v1024, %v1367
        %v1711 = vmul.f32 %v1025, %v1368
        %v1712 = vmul.f32 %v1026, %v1369
        %v1713 = vmul.f32 %v1027, %v1370
        %v1714 = vmul.f32 %v1028, %v1371
        %v1715 = vmul.f32 %v1029, %v1372
        %v1716 = vmul.f32 %v1030, %v1373
        %v1717 = vmul.f32 %v1031, %v1374
        %v1718 = vmul.f32 %v1032, %v1375
        %v1719 = vmul.f32 %v1033, %v1376
        %v1720 = vmul.f32 %v1034, %v1377
        %v1721 = vmul.f32 %v1035, %v1378
        %v1722 = vmul.f32 %v1036, %v1379
        %v1723 = vmul.f32 %v1037, %v1380
        %v1724 = vmul.f32 %v1038, %v1381
        %v1725 = vmul.f32 %v1039, %v1382
        %v1726 = vmul.f32 %v1040, %v1383
        %v1727 = vmul.f32 %v1041, %v1384
        %v1728 = vmul.f32 %v1042, %v1385
        %v1729 = vmul.f32 %v1043, %v1386
        %v1730 = vmul.f32 %v1044, %v1387
        %v1731 = vmul.f32 %v1045, %v1388
        %v1732 = vmul.f32 %v1046, %v1389
        %v1733 = vmul.f32 %v1047, %v1390
        %v1734 = vmul.f32 %v1048, %v1391
        %v1735 = vmul.f32 %v1049, %v1392
        %v1736 = vmul.f32 %v1050, %v1393
        %v1737 = vmul.f32 %v1051, %v1394
        %v1738 = vmul.f32 %v1052, %v1395
        %v1739 = vmul.f32 %v1053, %v1396
        %v1740 = vmul.f32 %v1054, %v1397
        %v1741 = vmul.f32 %v1055, %v1398
        %v1742 = vmul.f32 %v1056, %v1399
        %v1743 = vmul.f32 %v1057, %v1400
        %v1744 = vmul.f32 %v1058, %v1401
        %v1745 = vmul.f32 %v1059, %v1402
        %v1746 = vmul.f32 %v1060, %v1403
        %v1747 = vmul.f32 %v1061, %v1404
        %v1748 = vmul.f32 %v1062, %v1405
        %v1749 = vmul.f32 %v1063, %v1406
        %v1750 = vmul.f32 %v1064, %v1407
        %v1751 = vmul.f32 %v1065, %v1408
        %v1752 = vmul.f32 %v1066, %v1409
        %v1753 = vmul.f32 %v1067, %v1410
        %v1754 = vmul.f32 %v1068, %v1411
        %v1755 = vmul.f32 %v1069, %v1412
        %v1756 = vmul.f32 %v1070, %v1413
        %v1757 = vmul.f32 %v1071, %v1414
        %v1758 = vmul.f32 %v1072, %v1415
        %v1759 = vmul.f32 %v1073, %v1416
        %v1760 = vmul.f32 %v1074, %v1417
        %v1761 = vmul.f32 %v1075, %v1418
        %v1762 = vmul.f32 %v1076, %v1419
        %v1763 = vmul.f32 %v1077, %v1420
        %v1764 = vmul.f32 %v1078, %v1421
        %v1765 = vmul.f32 %v1079, %v1422
        %v1766 = vmul.f32 %v1080, %v1423
        %v1767 = vmul.f32 %v1081, %v1424
        %v1768 = vmul.f32 %v1082, %v1425
        %v1769 = vmul.f32 %v1083, %v1426
        %v1770 = vmul.f32 %v1084, %v1427
        %v1771 = vmul.f32 %v1085, %v1428
        %v1772 = vmul.f32 %v1086, %v1429
        %v1773 = vmul.f32 %v1087, %v1430
        %v1774 = vmul.f32 %v1088, %v1431
        %v1775 = vmul.f32 %v1089, %v1432
        %v1776 = vmul.f32 %v1090, %v1433
        %v1777 = vmul.f32 %v1091, %v1434
        %v1778 = vmul.f32 %v1092, %v1435
        %v1779 = vmul.f32 %v1093, %v1436
        %v1780 = vmul.f32 %v1094, %v1437
        %v1781 = vmul.f32 %v1095, %v1438
        %v1782 = vmul.f32 %v1096, %v1439
        %v1783 = vmul.f32 %v1097, %v1440
        %v1784 = vmul.f32 %v1098, %v1441
        %v1785 = vmul.f32 %v1099, %v1442
        %v1786 = vmul.f32 %v1100, %v1443
        %v1787 = vmul.f32 %v1101, %v1444
        %v1788 = vmul.f32 %v1102, %v1445
        %v1789 = vmul.f32 %v1103, %v1446
        %v1790 = vmul.f32 %v1104, %v1447
        %v1791 = vmul.f32 %v1105, %v1448
        %v1792 = vmul.f32 %v1106, %v1449
        %v1793 = vmul.f32 %v1107, %v1450
        %v1794 = vmul.f32 %v1108, %v1451
        %v1795 = vmul.f32 %v1109, %v1452
        %v1796 = vmul.f32 %v1110, %v1453
        %v1797 = vmul.f32 %v1111, %v1454
        %v1798 = vmul.f32 %v1112, %v1455
        %v1799 = vmul.f32 %v1113, %v1456
        %v1800 = vmul.f32 %v1114, %v1457
        %v1801 = vmul.f32 %v1115, %v1458
        %v1802 = vmul.f32 %v1116, %v1459
        %v1803 = vmul.f32 %v1117, %v1460
        %v1804 = vmul.f32 %v1118, %v1461
        %v1805 = vmul.f32 %v1119, %v1462
        %v1806 = vmul.f32 %v1120, %v1463
        %v1807 = vmul.f32 %v1121, %v1464
        %v1808 = vmul.f32 %v1122, %v1465
        %v1809 = vmul.f32 %v1123, %v1466
        %v1810 = vmul.f32 %v1124, %v1467
        %v1811 = vmul.f32 %v1125, %v1468
        %v1812 = vmul.f32 %v1126, %v1469
        %v1813 = vmul.f32 %v1127, %v1470
        %v1814 = vmul.f32 %v1128, %v1471
        %v1815 = vmul.f32 %v1129, %v1472
        %v1816 = vmul.f32 %v1130, %v1473
        %v1817 = vmul.f32 %v1131, %v1474
        %v1818 = vmul.f32 %v1132, %v1475
        %v1819 = vmul.f32 %v1133, %v1476
        %v1820 = vmul.f32 %v1134, %v1477
        %v1821 = vmul.f32 %v1135, %v1478
        %v1822 = vmul.f32 %v1136, %v1479
        %v1823 = vmul.f32 %v1137, %v1480
        %v1824 = vmul.f32 %v1138, %v1481
        %v1825 = vmul.f32 %v1139, %v1482
        %v1826 = vmul.f32 %v1140, %v1483
        %v1827 = vmul.f32 %v1141, %v1484
        %v1828 = vmul.f32 %v1142, %v1485
        %v1829 = vmul.f32 %v1143, %v1486
        %v1830 = vmul.f32 %v1144, %v1487
        %v1831 = vmul.f32 %v1145, %v1488
        %v1832 = vmul.f32 %v1146, %v1489
        %v1833 = vmul.f32 %v1147, %v1490
        %v1834 = vmul.f32 %v1148, %v1491
        %v1835 = vmul.f32 %v1149, %v1492
        %v1836 = vmul.f32 %v1150, %v1493
        %v1837 = vmul.f32 %v1151, %v1494
        %v1838 = vmul.f32 %v1152, %v1495
        %v1839 = vmul.f32 %v1153, %v1496
        %v1840 = vmul.f32 %v1154, %v1497
        %v1841 = vmul.f32 %v1155, %v1498
        %v1842 = vmul.f32 %v1156, %v1499
        %v1843 = vmul.f32 %v1157, %v1500
        %v1844 = vmul.f32 %v1158, %v1501
        %v1845 = vmul.f32 %v1159, %v1502
        %v1846 = vmul.f32 %v1160, %v1503
        %v1847 = vmul.f32 %v1161, %v1504
        %v1848 = vmul.f32 %v1162, %v1505
        %v1849 = vmul.f32 %v1163, %v1506
        %v1850 = vmul.f32 %v1164, %v1507
        %v1851 = vmul.f32 %v1165, %v1508
        %v1852 = vmul.f32 %v1166, %v1509
        %v1853 = vmul.f32 %v1167, %v1510
        %v1854 = vmul.f32 %v1168, %v1511
        %v1855 = vmul.f32 %v1169, %v1512
        %v1856 = vmul.f32 %v1170, %v1513
        %v1857 = vmul.f32 %v1171, %v1514
        %v1858 = vmul.f32 %v1172, %v1515
        %v1859 = vmul.f32 %v1173, %v1516
        %v1860 = vmul.f32 %v1174, %v1517
        %v1861 = vmul.f32 %v1175, %v1518
        %v1862 = vmul.f32 %v1176, %v1519
        %v1863 = vmul.f32 %v1177, %v1520
        %v1864 = vmul.f32 %v1178, %v1521
        %v1865 = vmul.f32 %v1179, %v1522
        %v1866 = vmul.f32 %v1180, %v1523
        %v1867 = vmul.f32 %v1181, %v1524
        %v1868 = vmul.f32 %v1182, %v1525
        %v1869 = vmul.f32 %v1183, %v1526
        %v1870 = vmul.f32 %v1184, %v1527
        %v1871 = vmul.f32 %v1185, %v1528
        %v1872 = vmul.f32 %v1186, %v1529
        %v1873 = vmul.f32 %v1187, %v1530
        %v1874 = vmul.f32 %v1188, %v1531
        %v1875 = vmul.f32 %v1189, %v1532
        %v1876 = vmul.f32 %v1190, %v1533
        %v1877 = vmul.f32 %v1191, %v1534
        %v1878 = vmul.f32 %v1192, %v1535
        %v1879 = vmul.f32 %v1193, %v1536
        %v1880 = vmul.f32 %v1194, %v1537
        %v1881 = vmul.f32 %v1195, %v1538
        %v1882 = vmul.f32 %v1196, %v1539
        %v1883 = vmul.f32 %v1197, %v1540
        %v1884 = vmul.f32 %v1198, %v1541
        %v1885 = vmul.f32 %v1199, %v1542
        %v1886 = vmul.f32 %v1200, %v1543
        %v1887 = vmul.f32 %v1201, %v1544
        %v1888 = vmul.f32 %v1202, %v1545
        %v1889 = vmul.f32 %v1203, %v1546
        %v1890 = vmul.f32 %v1204, %v1547
        %v1891 = vmul.f32 %v1205, %v1548
        %v1892 = vmul.f32 %v1206, %v1549
        %v1893 = vmul.f32 %v1207, %v1550
        %v1894 = vmul.f32 %v1208, %v1551
        %v1895 = vmul.f32 %v1209, %v1552
        %v1896 = vmul.f32 %v1210, %v1553
        %v1897 = vmul.f32 %v1211, %v1554
        %v1898 = vmul.f32 %v1212, %v1555
        %v1899 = vmul.f32 %v1213, %v1556
        %v1900 = vmul.f32 %v1214, %v1557
        %v1901 = vmul.f32 %v1215, %v1558
        %v1902 = vmul.f32 %v1216, %v1559
        %v1903 = vmul.f32 %v1217, %v1560
        %v1904 = vmul.f32 %v1218, %v1561
        %v1905 = vmul.f32 %v1219, %v1562
        %v1906 = vmul.f32 %v1220, %v1563
        %v1907 = vmul.f32 %v1221, %v1564
        %v1908 = vmul.f32 %v1222, %v1565
        %v1909 = vmul.f32 %v1223, %v1566
        %v1910 = vmul.f32 %v1224, %v1567
        %v1911 = vmul.f32 %v1225, %v1568
        %v1912 = vmul.f32 %v1226, %v1569
        %v1913 = vmul.f32 %v1227, %v1570
        %v1914 = vmul.f32 %v1228, %v1571
        %v1915 = vmul.f32 %v1229, %v1572
        %v1916 = vmul.f32 %v1230, %v1573
        %v1917 = vmul.f32 %v1231, %v1574
        %v1918 = vmul.f32 %v1232, %v1575
        %v1919 = vmul.f32 %v1233, %v1576
        %v1920 = vmul.f32 %v1234, %v1577
        %v1921 = vmul.f32 %v1235, %v1578
        %v1922 = vmul.f32 %v1236, %v1579
        %v1923 = vmul.f32 %v1237, %v1580
        %v1924 = vmul.f32 %v1238, %v1581
        %v1925 = vmul.f32 %v1239, %v1582
        %v1926 = vmul.f32 %v1240, %v1583
        %v1927 = vmul.f32 %v1241, %v1584
        %v1928 = vmul.f32 %v1242, %v1585
        %v1929 = vmul.f32 %v1243, %v1586
        %v1930 = vmul.f32 %v1244, %v1587
        %v1931 = vmul.f32 %v1245, %v1588
        %v1932 = vmul.f32 %v1246, %v1589
        %v1933 = vmul.f32 %v1247, %v1590
        %v1934 = vmul.f32 %v1248, %v1591
        %v1935 = vmul.f32 %v1249, %v1592
        %v1936 = vmul.f32 %v1250, %v1593
        %v1937 = vmul.f32 %v1251, %v1594
        %v1938 = vmul.f32 %v1252, %v1595
        %v1939 = vmul.f32 %v1253, %v1596
        %v1940 = vmul.f32 %v1254, %v1597
        %v1941 = vmul.f32 %v1255, %v1598
        %v1942 = vmul.f32 %v1256, %v1599
        %v1943 = vmul.f32 %v1257, %v1600
        %v1944 = vmul.f32 %v1258, %v1601
        %v1945 = vmul.f32 %v1259, %v1602
        %v1946 = vmul.f32 %v1260, %v1603
        %v1947 = vmul.f32 %v1261, %v1604
        %v1948 = vmul.f32 %v1262, %v1605
        %v1949 = vmul.f32 %v1263, %v1606
        %v1950 = vmul.f32 %v1264, %v1607
        %v1951 = vmul.f32 %v1265, %v1608
        %v1952 = vmul.f32 %v1266, %v1609
        %v1953 = vmul.f32 %v1267, %v1610
        %v1954 = vmul.f32 %v1268, %v1611
        %v1955 = vmul.f32 %v1269, %v1612
        %v1956 = vmul.f32 %v1270, %v1613
        %v1957 = vmul.f32 %v1271, %v1614
        %v1958 = vmul.f32 %v1272, %v1615
        %v1959 = vmul.f32 %v1273, %v1616
        %v1960 = vmul.f32 %v1274, %v1617
        %v1961 = vmul.f32 %v1275, %v1618
        %v1962 = vmul.f32 %v1276, %v1619
        %v1963 = vmul.f32 %v1277, %v1620
        %v1964 = vmul.f32 %v1278, %v1621
        %v1965 = vmul.f32 %v1279, %v1622
        %v1966 = vmul.f32 %v1280, %v1623
        %v1967 = vmul.f32 %v1281, %v1624
        %v1968 = vmul.f32 %v1282, %v1625
        %v1969 = vmul.f32 %v1283, %v1626
        %v1970 = vmul.f32 %v1284, %v1627
        %v1971 = vmul.f32 %v1285, %v1628
        %v1972 = vmul.f32 %v1286, %v1629
        %v1973 = vmul.f32 %v1287, %v1630
        %v1974 = vmul.f32 %v1288, %v1631
        %v1975 = vmul.f32 %v1289, %v1632
        %v1976 = vmul.f32 %v1290, %v1633
        %v1977 = vmul.f32 %v1291, %v1634
        %v1978 = vmul.f32 %v1292, %v1635
        %v1979 = vmul.f32 %v1293, %v1636
        %v1980 = vmul.f32 %v1294, %v1637
        %v1981 = vmul.f32 %v1295, %v1638
        %v1982 = vmul.f32 %v1296, %v1639
        %v1983 = vmul.f32 %v1297, %v1640
        %v1984 = vmul.f32 %v1298, %v1641
        %v1985 = vmul.f32 %v1299, %v1642
        %v1986 = vmul.f32 %v1300, %v1643
        %v1987 = vmul.f32 %v1301, %v1644
        %v1988 = vmul.f32 %v1302, %v1645
        %v1989 = vmul.f32 %v1303, %v1646
        %v1990 = vmul.f32 %v1304, %v1647
        %v1991 = vmul.f32 %v1305, %v1648
        %v1992 = vmul.f32 %v1306, %v1649
        %v1993 = vmul.f32 %v1307, %v1650
        %v1994 = vmul.f32 %v1308, %v1651
        %v1995 = vmul.f32 %v1309, %v1652
        %v1996 = vmul.f32 %v1310, %v1653
        %v1997 = vmul.f32 %v1311, %v1654
        %v1998 = vmul.f32 %v1312, %v1655
        %v1999 = vmul.f32 %v1313, %v1656
        %v2000 = vmul.f32 %v1314, %v1657
        %v2001 = vmul.f32 %v1315, %v1658
        %v2002 = vmul.f32 %v1316, %v1659
        %v2003 = vmul.f32 %v1317, %v1660
        %v2004 = vmul.f32 %v1318, %v1661
        %v2005 = vmul.f32 %v1319, %v1662
        %v2006 = vmul.f32 %v1320, %v1663
        %v2007 = vmul.f32 %v1321, %v1664
        %v2008 = vmul.f32 %v1322, %v1665
        %v2009 = vmul.f32 %v1323, %v1666
        %v2010 = vmul.f32 %v1324, %v1667
        %v2011 = vmul.f32 %v1325, %v1668
        %v2012 = vmul.f32 %v1326, %v1669
        %v2013 = vmul.f32 %v1327, %v1670
        %v2014 = vmul.f32 %v1328, %v1671
        %v2015 = vmul.f32 %v1329, %v1672
        %v2016 = vmul.f32 %v1330, %v1673
        %v2017 = vmul.f32 %v1331, %v1674
        %v2018 = vmul.f32 %v1332, %v1675
        %v2019 = vmul.f32 %v1333, %v1676
        %v2020 = vmul.f32 %v1334, %v1677
        %v2021 = vmul.f32 %v1335, %v1678
        %v2022 = vmul.f32 %v1336, %v1679
        %v2023 = vmul.f32 %v1337, %v1680
        %v2024 = vmul.f32 %v1338, %v1681
        %v2025 = vmul.f32 %v1339, %v1682
        %v2026 = vmul.f32 %v1340, %v1683
        %v2027 = vmul.f32 %v1341, %v1684
        %v2028 = vmul.f32 %v1342, %v1685
        %v2029 = vmul.f32 %v1343, %v1686
        %v2030 = vmul.f32 %v1344, %v1687
        %v2031 = vmul.f32 %v1345, %v1688
        %v2032 = vmul.f32 %v1346, %v1689
        %v2033 = vmul.f32 %v1347, %v1690
        %v2034 = vmul.f32 %v1348, %v1691
        %v2035 = vmul.f32 %v1349, %v1692
        %v2036 = vmul.f32 %v1350, %v1693
        %v2037 = vmul.f32 %v1351, %v1694
        %v2038 = vmul.f32 %v1352, %v1695
        %v2039 = vmul.f32 %v1353, %v1696
        %v2040 = vmul.f32 %v1354, %v1697
        %v2041 = vmul.f32 %v1355, %v1698
        %v2042 = vmul.f32 %v1356, %v1699
        %v2043 = vpack.c.bf16 %v1701, %v1700
        %v2044 = vpack.c.bf16 %v1703, %v1702
        %v2045 = vpack.c.bf16 %v1705, %v1704
        %v2046 = vpack.c.bf16 %v1706, %v1706
        %v2047 = vpack.c.bf16 %v1708, %v1707
        %v2048 = vpack.c.bf16 %v1710, %v1709
        %v2049 = vpack.c.bf16 %v1712, %v1711
        %v2050 = vpack.c.bf16 %v1713, %v1713
        %v2051 = vpack.c.bf16 %v1715, %v1714
        %v2052 = vpack.c.bf16 %v1717, %v1716
        %v2053 = vpack.c.bf16 %v1719, %v1718
        %v2054 = vpack.c.bf16 %v1720, %v1720
        %v2055 = vpack.c.bf16 %v1722, %v1721
        %v2056 = vpack.c.bf16 %v1724, %v1723
        %v2057 = vpack.c.bf16 %v1726, %v1725
        %v2058 = vpack.c.bf16 %v1727, %v1727
        %v2059 = vpack.c.bf16 %v1729, %v1728
        %v2060 = vpack.c.bf16 %v1731, %v1730
        %v2061 = vpack.c.bf16 %v1733, %v1732
        %v2062 = vpack.c.bf16 %v1734, %v1734
        %v2063 = vpack.c.bf16 %v1736, %v1735
        %v2064 = vpack.c.bf16 %v1738, %v1737
        %v2065 = vpack.c.bf16 %v1740, %v1739
        %v2066 = vpack.c.bf16 %v1741, %v1741
        %v2067 = vpack.c.bf16 %v1743, %v1742
        %v2068 = vpack.c.bf16 %v1745, %v1744
        %v2069 = vpack.c.bf16 %v1747, %v1746
        %v2070 = vpack.c.bf16 %v1748, %v1748
        %v2071 = vpack.c.bf16 %v1750, %v1749
        %v2072 = vpack.c.bf16 %v1752, %v1751
        %v2073 = vpack.c.bf16 %v1754, %v1753
        %v2074 = vpack.c.bf16 %v1755, %v1755
        %v2075 = vpack.c.bf16 %v1757, %v1756
        %v2076 = vpack.c.bf16 %v1759, %v1758
        %v2077 = vpack.c.bf16 %v1761, %v1760
        %v2078 = vpack.c.bf16 %v1762, %v1762
        %v2079 = vpack.c.bf16 %v1764, %v1763
        %v2080 = vpack.c.bf16 %v1766, %v1765
        %v2081 = vpack.c.bf16 %v1768, %v1767
        %v2082 = vpack.c.bf16 %v1769, %v1769
        %v2083 = vpack.c.bf16 %v1771, %v1770
        %v2084 = vpack.c.bf16 %v1773, %v1772
        %v2085 = vpack.c.bf16 %v1775, %v1774
        %v2086 = vpack.c.bf16 %v1776, %v1776
        %v2087 = vpack.c.bf16 %v1778, %v1777
        %v2088 = vpack.c.bf16 %v1780, %v1779
        %v2089 = vpack.c.bf16 %v1782, %v1781
        %v2090 = vpack.c.bf16 %v1783, %v1783
        %v2091 = vpack.c.bf16 %v1785, %v1784
        %v2092 = vpack.c.bf16 %v1787, %v1786
        %v2093 = vpack.c.bf16 %v1789, %v1788
        %v2094 = vpack.c.bf16 %v1790, %v1790
        %v2095 = vpack.c.bf16 %v1792, %v1791
        %v2096 = vpack.c.bf16 %v1794, %v1793
        %v2097 = vpack.c.bf16 %v1796, %v1795
        %v2098 = vpack.c.bf16 %v1797, %v1797
        %v2099 = vpack.c.bf16 %v1799, %v1798
        %v2100 = vpack.c.bf16 %v1801, %v1800
        %v2101 = vpack.c.bf16 %v1803, %v1802
        %v2102 = vpack.c.bf16 %v1804, %v1804
        %v2103 = vpack.c.bf16 %v1806, %v1805
        %v2104 = vpack.c.bf16 %v1808, %v1807
        %v2105 = vpack.c.bf16 %v1810, %v1809
        %v2106 = vpack.c.bf16 %v1811, %v1811
        %v2107 = vpack.c.bf16 %v1813, %v1812
        %v2108 = vpack.c.bf16 %v1815, %v1814
        %v2109 = vpack.c.bf16 %v1817, %v1816
        %v2110 = vpack.c.bf16 %v1818, %v1818
        %v2111 = vpack.c.bf16 %v1820, %v1819
        %v2112 = vpack.c.bf16 %v1822, %v1821
        %v2113 = vpack.c.bf16 %v1824, %v1823
        %v2114 = vpack.c.bf16 %v1825, %v1825
        %v2115 = vpack.c.bf16 %v1827, %v1826
        %v2116 = vpack.c.bf16 %v1829, %v1828
        %v2117 = vpack.c.bf16 %v1831, %v1830
        %v2118 = vpack.c.bf16 %v1832, %v1832
        %v2119 = vpack.c.bf16 %v1834, %v1833
        %v2120 = vpack.c.bf16 %v1836, %v1835
        %v2121 = vpack.c.bf16 %v1838, %v1837
        %v2122 = vpack.c.bf16 %v1839, %v1839
        %v2123 = vpack.c.bf16 %v1841, %v1840
        %v2124 = vpack.c.bf16 %v1843, %v1842
        %v2125 = vpack.c.bf16 %v1845, %v1844
        %v2126 = vpack.c.bf16 %v1846, %v1846
        %v2127 = vpack.c.bf16 %v1848, %v1847
        %v2128 = vpack.c.bf16 %v1850, %v1849
        %v2129 = vpack.c.bf16 %v1852, %v1851
        %v2130 = vpack.c.bf16 %v1853, %v1853
        %v2131 = vpack.c.bf16 %v1855, %v1854
        %v2132 = vpack.c.bf16 %v1857, %v1856
        %v2133 = vpack.c.bf16 %v1859, %v1858
        %v2134 = vpack.c.bf16 %v1860, %v1860
        %v2135 = vpack.c.bf16 %v1862, %v1861
        %v2136 = vpack.c.bf16 %v1864, %v1863
        %v2137 = vpack.c.bf16 %v1866, %v1865
        %v2138 = vpack.c.bf16 %v1867, %v1867
        %v2139 = vpack.c.bf16 %v1869, %v1868
        %v2140 = vpack.c.bf16 %v1871, %v1870
        %v2141 = vpack.c.bf16 %v1873, %v1872
        %v2142 = vpack.c.bf16 %v1874, %v1874
        %v2143 = vpack.c.bf16 %v1876, %v1875
        %v2144 = vpack.c.bf16 %v1878, %v1877
        %v2145 = vpack.c.bf16 %v1880, %v1879
        %v2146 = vpack.c.bf16 %v1881, %v1881
        %v2147 = vpack.c.bf16 %v1883, %v1882
        %v2148 = vpack.c.bf16 %v1885, %v1884
        %v2149 = vpack.c.bf16 %v1887, %v1886
        %v2150 = vpack.c.bf16 %v1888, %v1888
        %v2151 = vpack.c.bf16 %v1890, %v1889
        %v2152 = vpack.c.bf16 %v1892, %v1891
        %v2153 = vpack.c.bf16 %v1894, %v1893
        %v2154 = vpack.c.bf16 %v1895, %v1895
        %v2155 = vpack.c.bf16 %v1897, %v1896
        %v2156 = vpack.c.bf16 %v1899, %v1898
        %v2157 = vpack.c.bf16 %v1901, %v1900
        %v2158 = vpack.c.bf16 %v1902, %v1902
        %v2159 = vpack.c.bf16 %v1904, %v1903
        %v2160 = vpack.c.bf16 %v1906, %v1905
        %v2161 = vpack.c.bf16 %v1908, %v1907
        %v2162 = vpack.c.bf16 %v1909, %v1909
        %v2163 = vpack.c.bf16 %v1911, %v1910
        %v2164 = vpack.c.bf16 %v1913, %v1912
        %v2165 = vpack.c.bf16 %v1915, %v1914
        %v2166 = vpack.c.bf16 %v1916, %v1916
        %v2167 = vpack.c.bf16 %v1918, %v1917
        %v2168 = vpack.c.bf16 %v1920, %v1919
        %v2169 = vpack.c.bf16 %v1922, %v1921
        %v2170 = vpack.c.bf16 %v1923, %v1923
        %v2171 = vpack.c.bf16 %v1925, %v1924
        %v2172 = vpack.c.bf16 %v1927, %v1926
        %v2173 = vpack.c.bf16 %v1929, %v1928
        %v2174 = vpack.c.bf16 %v1930, %v1930
        %v2175 = vpack.c.bf16 %v1932, %v1931
        %v2176 = vpack.c.bf16 %v1934, %v1933
        %v2177 = vpack.c.bf16 %v1936, %v1935
        %v2178 = vpack.c.bf16 %v1937, %v1937
        %v2179 = vpack.c.bf16 %v1939, %v1938
        %v2180 = vpack.c.bf16 %v1941, %v1940
        %v2181 = vpack.c.bf16 %v1943, %v1942
        %v2182 = vpack.c.bf16 %v1944, %v1944
        %v2183 = vpack.c.bf16 %v1946, %v1945
        %v2184 = vpack.c.bf16 %v1948, %v1947
        %v2185 = vpack.c.bf16 %v1950, %v1949
        %v2186 = vpack.c.bf16 %v1951, %v1951
        %v2187 = vpack.c.bf16 %v1953, %v1952
        %v2188 = vpack.c.bf16 %v1955, %v1954
        %v2189 = vpack.c.bf16 %v1957, %v1956
        %v2190 = vpack.c.bf16 %v1958, %v1958
        %v2191 = vpack.c.bf16 %v1960, %v1959
        %v2192 = vpack.c.bf16 %v1962, %v1961
        %v2193 = vpack.c.bf16 %v1964, %v1963
        %v2194 = vpack.c.bf16 %v1965, %v1965
        %v2195 = vpack.c.bf16 %v1967, %v1966
        %v2196 = vpack.c.bf16 %v1969, %v1968
        %v2197 = vpack.c.bf16 %v1971, %v1970
        %v2198 = vpack.c.bf16 %v1972, %v1972
        %v2199 = vpack.c.bf16 %v1974, %v1973
        %v2200 = vpack.c.bf16 %v1976, %v1975
        %v2201 = vpack.c.bf16 %v1978, %v1977
        %v2202 = vpack.c.bf16 %v1979, %v1979
        %v2203 = vpack.c.bf16 %v1981, %v1980
        %v2204 = vpack.c.bf16 %v1983, %v1982
        %v2205 = vpack.c.bf16 %v1985, %v1984
        %v2206 = vpack.c.bf16 %v1986, %v1986
        %v2207 = vpack.c.bf16 %v1988, %v1987
        %v2208 = vpack.c.bf16 %v1990, %v1989
        %v2209 = vpack.c.bf16 %v1992, %v1991
        %v2210 = vpack.c.bf16 %v1993, %v1993
        %v2211 = vpack.c.bf16 %v1995, %v1994
        %v2212 = vpack.c.bf16 %v1997, %v1996
        %v2213 = vpack.c.bf16 %v1999, %v1998
        %v2214 = vpack.c.bf16 %v2000, %v2000
        %v2215 = vpack.c.bf16 %v2002, %v2001
        %v2216 = vpack.c.bf16 %v2004, %v2003
        %v2217 = vpack.c.bf16 %v2006, %v2005
        %v2218 = vpack.c.bf16 %v2007, %v2007
        %v2219 = vpack.c.bf16 %v2009, %v2008
        %v2220 = vpack.c.bf16 %v2011, %v2010
        %v2221 = vpack.c.bf16 %v2013, %v2012
        %v2222 = vpack.c.bf16 %v2014, %v2014
        %v2223 = vpack.c.bf16 %v2016, %v2015
        %v2224 = vpack.c.bf16 %v2018, %v2017
        %v2225 = vpack.c.bf16 %v2020, %v2019
        %v2226 = vpack.c.bf16 %v2021, %v2021
        %v2227 = vpack.c.bf16 %v2023, %v2022
        %v2228 = vpack.c.bf16 %v2025, %v2024
        %v2229 = vpack.c.bf16 %v2027, %v2026
        %v2230 = vpack.c.bf16 %v2028, %v2028
        %v2231 = vpack.c.bf16 %v2030, %v2029
        %v2232 = vpack.c.bf16 %v2032, %v2031
        %v2233 = vpack.c.bf16 %v2034, %v2033
        %v2234 = vpack.c.bf16 %v2035, %v2035
        %v2235 = vpack.c.bf16 %v2037, %v2036
        %v2236 = vpack.c.bf16 %v2039, %v2038
        %v2237 = vpack.c.bf16 %v2041, %v2040
        %v2238 = vpack.c.bf16 %v2042, %v2042
        %v2239 = vunpack.c.l.bf16 %v426
        %v2240 = vunpack.c.h.bf16 %v426
        %v2241 = vunpack.c.l.bf16 %v427
        %v2242 = vunpack.c.h.bf16 %v427
        %v2243 = vunpack.c.l.bf16 %v428
        %v2244 = vunpack.c.h.bf16 %v428
        %v2245 = vunpack.c.l.bf16 %v429
        %v2246 = vunpack.c.l.bf16 %v430
        %v2247 = vunpack.c.h.bf16 %v430
        %v2248 = vunpack.c.l.bf16 %v431
        %v2249 = vunpack.c.h.bf16 %v431
        %v2250 = vunpack.c.l.bf16 %v432
        %v2251 = vunpack.c.h.bf16 %v432
        %v2252 = vunpack.c.l.bf16 %v433
        %v2253 = vunpack.c.l.bf16 %v434
        %v2254 = vunpack.c.h.bf16 %v434
        %v2255 = vunpack.c.l.bf16 %v435
        %v2256 = vunpack.c.h.bf16 %v435
        %v2257 = vunpack.c.l.bf16 %v436
        %v2258 = vunpack.c.h.bf16 %v436
        %v2259 = vunpack.c.l.bf16 %v437
        %v2260 = vunpack.c.l.bf16 %v438
        %v2261 = vunpack.c.h.bf16 %v438
        %v2262 = vunpack.c.l.bf16 %v439
        %v2263 = vunpack.c.h.bf16 %v439
        %v2264 = vunpack.c.l.bf16 %v440
        %v2265 = vunpack.c.h.bf16 %v440
        %v2266 = vunpack.c.l.bf16 %v441
        %v2267 = vunpack.c.l.bf16 %v442
        %v2268 = vunpack.c.h.bf16 %v442
        %v2269 = vunpack.c.l.bf16 %v443
        %v2270 = vunpack.c.h.bf16 %v443
        %v2271 = vunpack.c.l.bf16 %v444
        %v2272 = vunpack.c.h.bf16 %v444
        %v2273 = vunpack.c.l.bf16 %v445
        %v2274 = vunpack.c.l.bf16 %v446
        %v2275 = vunpack.c.h.bf16 %v446
        %v2276 = vunpack.c.l.bf16 %v447
        %v2277 = vunpack.c.h.bf16 %v447
        %v2278 = vunpack.c.l.bf16 %v448
        %v2279 = vunpack.c.h.bf16 %v448
        %v2280 = vunpack.c.l.bf16 %v449
        %v2281 = vunpack.c.l.bf16 %v450
        %v2282 = vunpack.c.h.bf16 %v450
        %v2283 = vunpack.c.l.bf16 %v451
        %v2284 = vunpack.c.h.bf16 %v451
        %v2285 = vunpack.c.l.bf16 %v452
        %v2286 = vunpack.c.h.bf16 %v452
        %v2287 = vunpack.c.l.bf16 %v453
        %v2288 = vunpack.c.l.bf16 %v454
        %v2289 = vunpack.c.h.bf16 %v454
        %v2290 = vunpack.c.l.bf16 %v455
        %v2291 = vunpack.c.h.bf16 %v455
        %v2292 = vunpack.c.l.bf16 %v456
        %v2293 = vunpack.c.h.bf16 %v456
        %v2294 = vunpack.c.l.bf16 %v457
        %v2295 = vunpack.c.l.bf16 %v458
        %v2296 = vunpack.c.h.bf16 %v458
        %v2297 = vunpack.c.l.bf16 %v459
        %v2298 = vunpack.c.h.bf16 %v459
        %v2299 = vunpack.c.l.bf16 %v460
        %v2300 = vunpack.c.h.bf16 %v460
        %v2301 = vunpack.c.l.bf16 %v461
        %v2302 = vunpack.c.l.bf16 %v462
        %v2303 = vunpack.c.h.bf16 %v462
        %v2304 = vunpack.c.l.bf16 %v463
        %v2305 = vunpack.c.h.bf16 %v463
        %v2306 = vunpack.c.l.bf16 %v464
        %v2307 = vunpack.c.h.bf16 %v464
        %v2308 = vunpack.c.l.bf16 %v465
        %v2309 = vunpack.c.l.bf16 %v466
        %v2310 = vunpack.c.h.bf16 %v466
        %v2311 = vunpack.c.l.bf16 %v467
        %v2312 = vunpack.c.h.bf16 %v467
        %v2313 = vunpack.c.l.bf16 %v468
        %v2314 = vunpack.c.h.bf16 %v468
        %v2315 = vunpack.c.l.bf16 %v469
        %v2316 = vunpack.c.l.bf16 %v470
        %v2317 = vunpack.c.h.bf16 %v470
        %v2318 = vunpack.c.l.bf16 %v471
        %v2319 = vunpack.c.h.bf16 %v471
        %v2320 = vunpack.c.l.bf16 %v472
        %v2321 = vunpack.c.h.bf16 %v472
        %v2322 = vunpack.c.l.bf16 %v473
        %v2323 = vunpack.c.l.bf16 %v474
        %v2324 = vunpack.c.h.bf16 %v474
        %v2325 = vunpack.c.l.bf16 %v475
        %v2326 = vunpack.c.h.bf16 %v475
        %v2327 = vunpack.c.l.bf16 %v476
        %v2328 = vunpack.c.h.bf16 %v476
        %v2329 = vunpack.c.l.bf16 %v477
        %v2330 = vunpack.c.l.bf16 %v478
        %v2331 = vunpack.c.h.bf16 %v478
        %v2332 = vunpack.c.l.bf16 %v479
        %v2333 = vunpack.c.h.bf16 %v479
        %v2334 = vunpack.c.l.bf16 %v480
        %v2335 = vunpack.c.h.bf16 %v480
        %v2336 = vunpack.c.l.bf16 %v481
        %v2337 = vunpack.c.l.bf16 %v482
        %v2338 = vunpack.c.h.bf16 %v482
        %v2339 = vunpack.c.l.bf16 %v483
        %v2340 = vunpack.c.h.bf16 %v483
        %v2341 = vunpack.c.l.bf16 %v484
        %v2342 = vunpack.c.h.bf16 %v484
        %v2343 = vunpack.c.l.bf16 %v485
        %v2344 = vunpack.c.l.bf16 %v486
        %v2345 = vunpack.c.h.bf16 %v486
        %v2346 = vunpack.c.l.bf16 %v487
        %v2347 = vunpack.c.h.bf16 %v487
        %v2348 = vunpack.c.l.bf16 %v488
        %v2349 = vunpack.c.h.bf16 %v488
        %v2350 = vunpack.c.l.bf16 %v489
        %v2351 = vunpack.c.l.bf16 %v490
        %v2352 = vunpack.c.h.bf16 %v490
        %v2353 = vunpack.c.l.bf16 %v491
        %v2354 = vunpack.c.h.bf16 %v491
        %v2355 = vunpack.c.l.bf16 %v492
        %v2356 = vunpack.c.h.bf16 %v492
        %v2357 = vunpack.c.l.bf16 %v493
        %v2358 = vunpack.c.l.bf16 %v494
        %v2359 = vunpack.c.h.bf16 %v494
        %v2360 = vunpack.c.l.bf16 %v495
        %v2361 = vunpack.c.h.bf16 %v495
        %v2362 = vunpack.c.l.bf16 %v496
        %v2363 = vunpack.c.h.bf16 %v496
        %v2364 = vunpack.c.l.bf16 %v497
        %v2365 = vunpack.c.l.bf16 %v498
        %v2366 = vunpack.c.h.bf16 %v498
        %v2367 = vunpack.c.l.bf16 %v499
        %v2368 = vunpack.c.h.bf16 %v499
        %v2369 = vunpack.c.l.bf16 %v500
        %v2370 = vunpack.c.h.bf16 %v500
        %v2371 = vunpack.c.l.bf16 %v501
        %v2372 = vunpack.c.l.bf16 %v502
        %v2373 = vunpack.c.h.bf16 %v502
        %v2374 = vunpack.c.l.bf16 %v503
        %v2375 = vunpack.c.h.bf16 %v503
        %v2376 = vunpack.c.l.bf16 %v504
        %v2377 = vunpack.c.h.bf16 %v504
        %v2378 = vunpack.c.l.bf16 %v505
        %v2379 = vunpack.c.l.bf16 %v506
        %v2380 = vunpack.c.h.bf16 %v506
        %v2381 = vunpack.c.l.bf16 %v507
        %v2382 = vunpack.c.h.bf16 %v507
        %v2383 = vunpack.c.l.bf16 %v508
        %v2384 = vunpack.c.h.bf16 %v508
        %v2385 = vunpack.c.l.bf16 %v509
        %v2386 = vunpack.c.l.bf16 %v510
        %v2387 = vunpack.c.h.bf16 %v510
        %v2388 = vunpack.c.l.bf16 %v511
        %v2389 = vunpack.c.h.bf16 %v511
        %v2390 = vunpack.c.l.bf16 %v512
        %v2391 = vunpack.c.h.bf16 %v512
        %v2392 = vunpack.c.l.bf16 %v513
        %v2393 = vunpack.c.l.bf16 %v514
        %v2394 = vunpack.c.h.bf16 %v514
        %v2395 = vunpack.c.l.bf16 %v515
        %v2396 = vunpack.c.h.bf16 %v515
        %v2397 = vunpack.c.l.bf16 %v516
        %v2398 = vunpack.c.h.bf16 %v516
        %v2399 = vunpack.c.l.bf16 %v517
        %v2400 = vunpack.c.l.bf16 %v518
        %v2401 = vunpack.c.h.bf16 %v518
        %v2402 = vunpack.c.l.bf16 %v519
        %v2403 = vunpack.c.h.bf16 %v519
        %v2404 = vunpack.c.l.bf16 %v520
        %v2405 = vunpack.c.h.bf16 %v520
        %v2406 = vunpack.c.l.bf16 %v521
        %v2407 = vunpack.c.l.bf16 %v522
        %v2408 = vunpack.c.h.bf16 %v522
        %v2409 = vunpack.c.l.bf16 %v523
        %v2410 = vunpack.c.h.bf16 %v523
        %v2411 = vunpack.c.l.bf16 %v524
        %v2412 = vunpack.c.h.bf16 %v524
        %v2413 = vunpack.c.l.bf16 %v525
        %v2414 = vunpack.c.l.bf16 %v526
        %v2415 = vunpack.c.h.bf16 %v526
        %v2416 = vunpack.c.l.bf16 %v527
        %v2417 = vunpack.c.h.bf16 %v527
        %v2418 = vunpack.c.l.bf16 %v528
        %v2419 = vunpack.c.h.bf16 %v528
        %v2420 = vunpack.c.l.bf16 %v529
        %v2421 = vunpack.c.l.bf16 %v530
        %v2422 = vunpack.c.h.bf16 %v530
        %v2423 = vunpack.c.l.bf16 %v531
        %v2424 = vunpack.c.h.bf16 %v531
        %v2425 = vunpack.c.l.bf16 %v532
        %v2426 = vunpack.c.h.bf16 %v532
        %v2427 = vunpack.c.l.bf16 %v533
        %v2428 = vunpack.c.l.bf16 %v534
        %v2429 = vunpack.c.h.bf16 %v534
        %v2430 = vunpack.c.l.bf16 %v535
        %v2431 = vunpack.c.h.bf16 %v535
        %v2432 = vunpack.c.l.bf16 %v536
        %v2433 = vunpack.c.h.bf16 %v536
        %v2434 = vunpack.c.l.bf16 %v537
        %v2435 = vunpack.c.l.bf16 %v538
        %v2436 = vunpack.c.h.bf16 %v538
        %v2437 = vunpack.c.l.bf16 %v539
        %v2438 = vunpack.c.h.bf16 %v539
        %v2439 = vunpack.c.l.bf16 %v540
        %v2440 = vunpack.c.h.bf16 %v540
        %v2441 = vunpack.c.l.bf16 %v541
        %v2442 = vunpack.c.l.bf16 %v542
        %v2443 = vunpack.c.h.bf16 %v542
        %v2444 = vunpack.c.l.bf16 %v543
        %v2445 = vunpack.c.h.bf16 %v543
        %v2446 = vunpack.c.l.bf16 %v544
        %v2447 = vunpack.c.h.bf16 %v544
        %v2448 = vunpack.c.l.bf16 %v545
        %v2449 = vunpack.c.l.bf16 %v546
        %v2450 = vunpack.c.h.bf16 %v546
        %v2451 = vunpack.c.l.bf16 %v547
        %v2452 = vunpack.c.h.bf16 %v547
        %v2453 = vunpack.c.l.bf16 %v548
        %v2454 = vunpack.c.h.bf16 %v548
        %v2455 = vunpack.c.l.bf16 %v549
        %v2456 = vunpack.c.l.bf16 %v550
        %v2457 = vunpack.c.h.bf16 %v550
        %v2458 = vunpack.c.l.bf16 %v551
        %v2459 = vunpack.c.h.bf16 %v551
        %v2460 = vunpack.c.l.bf16 %v552
        %v2461 = vunpack.c.h.bf16 %v552
        %v2462 = vunpack.c.l.bf16 %v553
        %v2463 = vunpack.c.l.bf16 %v554
        %v2464 = vunpack.c.h.bf16 %v554
        %v2465 = vunpack.c.l.bf16 %v555
        %v2466 = vunpack.c.h.bf16 %v555
        %v2467 = vunpack.c.l.bf16 %v556
        %v2468 = vunpack.c.h.bf16 %v556
        %v2469 = vunpack.c.l.bf16 %v557
        %v2470 = vunpack.c.l.bf16 %v558
        %v2471 = vunpack.c.h.bf16 %v558
        %v2472 = vunpack.c.l.bf16 %v559
        %v2473 = vunpack.c.h.bf16 %v559
        %v2474 = vunpack.c.l.bf16 %v560
        %v2475 = vunpack.c.h.bf16 %v560
        %v2476 = vunpack.c.l.bf16 %v561
        %v2477 = vunpack.c.l.bf16 %v562
        %v2478 = vunpack.c.h.bf16 %v562
        %v2479 = vunpack.c.l.bf16 %v563
        %v2480 = vunpack.c.h.bf16 %v563
        %v2481 = vunpack.c.l.bf16 %v564
        %v2482 = vunpack.c.h.bf16 %v564
        %v2483 = vunpack.c.l.bf16 %v565
        %v2484 = vunpack.c.l.bf16 %v566
        %v2485 = vunpack.c.h.bf16 %v566
        %v2486 = vunpack.c.l.bf16 %v567
        %v2487 = vunpack.c.h.bf16 %v567
        %v2488 = vunpack.c.l.bf16 %v568
        %v2489 = vunpack.c.h.bf16 %v568
        %v2490 = vunpack.c.l.bf16 %v569
        %v2491 = vunpack.c.l.bf16 %v570
        %v2492 = vunpack.c.h.bf16 %v570
        %v2493 = vunpack.c.l.bf16 %v571
        %v2494 = vunpack.c.h.bf16 %v571
        %v2495 = vunpack.c.l.bf16 %v572
        %v2496 = vunpack.c.h.bf16 %v572
        %v2497 = vunpack.c.l.bf16 %v573
        %v2498 = vunpack.c.l.bf16 %v574
        %v2499 = vunpack.c.h.bf16 %v574
        %v2500 = vunpack.c.l.bf16 %v575
        %v2501 = vunpack.c.h.bf16 %v575
        %v2502 = vunpack.c.l.bf16 %v576
        %v2503 = vunpack.c.h.bf16 %v576
        %v2504 = vunpack.c.l.bf16 %v577
        %v2505 = vunpack.c.l.bf16 %v578
        %v2506 = vunpack.c.h.bf16 %v578
        %v2507 = vunpack.c.l.bf16 %v579
        %v2508 = vunpack.c.h.bf16 %v579
        %v2509 = vunpack.c.l.bf16 %v580
        %v2510 = vunpack.c.h.bf16 %v580
        %v2511 = vunpack.c.l.bf16 %v581
        %v2512 = vunpack.c.l.bf16 %v582
        %v2513 = vunpack.c.h.bf16 %v582
        %v2514 = vunpack.c.l.bf16 %v583
        %v2515 = vunpack.c.h.bf16 %v583
        %v2516 = vunpack.c.l.bf16 %v584
        %v2517 = vunpack.c.h.bf16 %v584
        %v2518 = vunpack.c.l.bf16 %v585
        %v2519 = vunpack.c.l.bf16 %v586
        %v2520 = vunpack.c.h.bf16 %v586
        %v2521 = vunpack.c.l.bf16 %v587
        %v2522 = vunpack.c.h.bf16 %v587
        %v2523 = vunpack.c.l.bf16 %v588
        %v2524 = vunpack.c.h.bf16 %v588
        %v2525 = vunpack.c.l.bf16 %v589
        %v2526 = vunpack.c.l.bf16 %v590
        %v2527 = vunpack.c.h.bf16 %v590
        %v2528 = vunpack.c.l.bf16 %v591
        %v2529 = vunpack.c.h.bf16 %v591
        %v2530 = vunpack.c.l.bf16 %v592
        %v2531 = vunpack.c.h.bf16 %v592
        %v2532 = vunpack.c.l.bf16 %v593
        %v2533 = vunpack.c.l.bf16 %v594
        %v2534 = vunpack.c.h.bf16 %v594
        %v2535 = vunpack.c.l.bf16 %v595
        %v2536 = vunpack.c.h.bf16 %v595
        %v2537 = vunpack.c.l.bf16 %v596
        %v2538 = vunpack.c.h.bf16 %v596
        %v2539 = vunpack.c.l.bf16 %v597
        %v2540 = vunpack.c.l.bf16 %v598
        %v2541 = vunpack.c.h.bf16 %v598
        %v2542 = vunpack.c.l.bf16 %v599
        %v2543 = vunpack.c.h.bf16 %v599
        %v2544 = vunpack.c.l.bf16 %v600
        %v2545 = vunpack.c.h.bf16 %v600
        %v2546 = vunpack.c.l.bf16 %v601
        %v2547 = vunpack.c.l.bf16 %v602
        %v2548 = vunpack.c.h.bf16 %v602
        %v2549 = vunpack.c.l.bf16 %v603
        %v2550 = vunpack.c.h.bf16 %v603
        %v2551 = vunpack.c.l.bf16 %v604
        %v2552 = vunpack.c.h.bf16 %v604
        %v2553 = vunpack.c.l.bf16 %v605
        %v2554 = vunpack.c.l.bf16 %v606
        %v2555 = vunpack.c.h.bf16 %v606
        %v2556 = vunpack.c.l.bf16 %v607
        %v2557 = vunpack.c.h.bf16 %v607
        %v2558 = vunpack.c.l.bf16 %v608
        %v2559 = vunpack.c.h.bf16 %v608
        %v2560 = vunpack.c.l.bf16 %v609
        %v2561 = vunpack.c.l.bf16 %v610
        %v2562 = vunpack.c.h.bf16 %v610
        %v2563 = vunpack.c.l.bf16 %v611
        %v2564 = vunpack.c.h.bf16 %v611
        %v2565 = vunpack.c.l.bf16 %v612
        %v2566 = vunpack.c.h.bf16 %v612
        %v2567 = vunpack.c.l.bf16 %v613
        %v2568 = vunpack.c.l.bf16 %v614
        %v2569 = vunpack.c.h.bf16 %v614
        %v2570 = vunpack.c.l.bf16 %v615
        %v2571 = vunpack.c.h.bf16 %v615
        %v2572 = vunpack.c.l.bf16 %v616
        %v2573 = vunpack.c.h.bf16 %v616
        %v2574 = vunpack.c.l.bf16 %v617
        %v2575 = vunpack.c.l.bf16 %v618
        %v2576 = vunpack.c.h.bf16 %v618
        %v2577 = vunpack.c.l.bf16 %v619
        %v2578 = vunpack.c.h.bf16 %v619
        %v2579 = vunpack.c.l.bf16 %v620
        %v2580 = vunpack.c.h.bf16 %v620
        %v2581 = vunpack.c.l.bf16 %v621
        %v2582 = vunpack.c.l.bf16 %v2043
        %v2583 = vunpack.c.h.bf16 %v2043
        %v2584 = vunpack.c.l.bf16 %v2044
        %v2585 = vunpack.c.h.bf16 %v2044
        %v2586 = vunpack.c.l.bf16 %v2045
        %v2587 = vunpack.c.h.bf16 %v2045
        %v2588 = vunpack.c.l.bf16 %v2046
        %v2589 = vunpack.c.l.bf16 %v2047
        %v2590 = vunpack.c.h.bf16 %v2047
        %v2591 = vunpack.c.l.bf16 %v2048
        %v2592 = vunpack.c.h.bf16 %v2048
        %v2593 = vunpack.c.l.bf16 %v2049
        %v2594 = vunpack.c.h.bf16 %v2049
        %v2595 = vunpack.c.l.bf16 %v2050
        %v2596 = vunpack.c.l.bf16 %v2051
        %v2597 = vunpack.c.h.bf16 %v2051
        %v2598 = vunpack.c.l.bf16 %v2052
        %v2599 = vunpack.c.h.bf16 %v2052
        %v2600 = vunpack.c.l.bf16 %v2053
        %v2601 = vunpack.c.h.bf16 %v2053
        %v2602 = vunpack.c.l.bf16 %v2054
        %v2603 = vunpack.c.l.bf16 %v2055
        %v2604 = vunpack.c.h.bf16 %v2055
        %v2605 = vunpack.c.l.bf16 %v2056
        %v2606 = vunpack.c.h.bf16 %v2056
        %v2607 = vunpack.c.l.bf16 %v2057
        %v2608 = vunpack.c.h.bf16 %v2057
        %v2609 = vunpack.c.l.bf16 %v2058
        %v2610 = vunpack.c.l.bf16 %v2059
        %v2611 = vunpack.c.h.bf16 %v2059
        %v2612 = vunpack.c.l.bf16 %v2060
        %v2613 = vunpack.c.h.bf16 %v2060
        %v2614 = vunpack.c.l.bf16 %v2061
        %v2615 = vunpack.c.h.bf16 %v2061
        %v2616 = vunpack.c.l.bf16 %v2062
        %v2617 = vunpack.c.l.bf16 %v2063
        %v2618 = vunpack.c.h.bf16 %v2063
        %v2619 = vunpack.c.l.bf16 %v2064
        %v2620 = vunpack.c.h.bf16 %v2064
        %v2621 = vunpack.c.l.bf16 %v2065
        %v2622 = vunpack.c.h.bf16 %v2065
        %v2623 = vunpack.c.l.bf16 %v2066
        %v2624 = vunpack.c.l.bf16 %v2067
        %v2625 = vunpack.c.h.bf16 %v2067
        %v2626 = vunpack.c.l.bf16 %v2068
        %v2627 = vunpack.c.h.bf16 %v2068
        %v2628 = vunpack.c.l.bf16 %v2069
        %v2629 = vunpack.c.h.bf16 %v2069
        %v2630 = vunpack.c.l.bf16 %v2070
        %v2631 = vunpack.c.l.bf16 %v2071
        %v2632 = vunpack.c.h.bf16 %v2071
        %v2633 = vunpack.c.l.bf16 %v2072
        %v2634 = vunpack.c.h.bf16 %v2072
        %v2635 = vunpack.c.l.bf16 %v2073
        %v2636 = vunpack.c.h.bf16 %v2073
        %v2637 = vunpack.c.l.bf16 %v2074
        %v2638 = vunpack.c.l.bf16 %v2075
        %v2639 = vunpack.c.h.bf16 %v2075
        %v2640 = vunpack.c.l.bf16 %v2076
        %v2641 = vunpack.c.h.bf16 %v2076
        %v2642 = vunpack.c.l.bf16 %v2077
        %v2643 = vunpack.c.h.bf16 %v2077
        %v2644 = vunpack.c.l.bf16 %v2078
        %v2645 = vunpack.c.l.bf16 %v2079
        %v2646 = vunpack.c.h.bf16 %v2079
        %v2647 = vunpack.c.l.bf16 %v2080
        %v2648 = vunpack.c.h.bf16 %v2080
        %v2649 = vunpack.c.l.bf16 %v2081
        %v2650 = vunpack.c.h.bf16 %v2081
        %v2651 = vunpack.c.l.bf16 %v2082
        %v2652 = vunpack.c.l.bf16 %v2083
        %v2653 = vunpack.c.h.bf16 %v2083
        %v2654 = vunpack.c.l.bf16 %v2084
        %v2655 = vunpack.c.h.bf16 %v2084
        %v2656 = vunpack.c.l.bf16 %v2085
        %v2657 = vunpack.c.h.bf16 %v2085
        %v2658 = vunpack.c.l.bf16 %v2086
        %v2659 = vunpack.c.l.bf16 %v2087
        %v2660 = vunpack.c.h.bf16 %v2087
        %v2661 = vunpack.c.l.bf16 %v2088
        %v2662 = vunpack.c.h.bf16 %v2088
        %v2663 = vunpack.c.l.bf16 %v2089
        %v2664 = vunpack.c.h.bf16 %v2089
        %v2665 = vunpack.c.l.bf16 %v2090
        %v2666 = vunpack.c.l.bf16 %v2091
        %v2667 = vunpack.c.h.bf16 %v2091
        %v2668 = vunpack.c.l.bf16 %v2092
        %v2669 = vunpack.c.h.bf16 %v2092
        %v2670 = vunpack.c.l.bf16 %v2093
        %v2671 = vunpack.c.h.bf16 %v2093
        %v2672 = vunpack.c.l.bf16 %v2094
        %v2673 = vunpack.c.l.bf16 %v2095
        %v2674 = vunpack.c.h.bf16 %v2095
        %v2675 = vunpack.c.l.bf16 %v2096
        %v2676 = vunpack.c.h.bf16 %v2096
        %v2677 = vunpack.c.l.bf16 %v2097
        %v2678 = vunpack.c.h.bf16 %v2097
        %v2679 = vunpack.c.l.bf16 %v2098
        %v2680 = vunpack.c.l.bf16 %v2099
        %v2681 = vunpack.c.h.bf16 %v2099
        %v2682 = vunpack.c.l.bf16 %v2100
        %v2683 = vunpack.c.h.bf16 %v2100
        %v2684 = vunpack.c.l.bf16 %v2101
        %v2685 = vunpack.c.h.bf16 %v2101
        %v2686 = vunpack.c.l.bf16 %v2102
        %v2687 = vunpack.c.l.bf16 %v2103
        %v2688 = vunpack.c.h.bf16 %v2103
        %v2689 = vunpack.c.l.bf16 %v2104
        %v2690 = vunpack.c.h.bf16 %v2104
        %v2691 = vunpack.c.l.bf16 %v2105
        %v2692 = vunpack.c.h.bf16 %v2105
        %v2693 = vunpack.c.l.bf16 %v2106
        %v2694 = vunpack.c.l.bf16 %v2107
        %v2695 = vunpack.c.h.bf16 %v2107
        %v2696 = vunpack.c.l.bf16 %v2108
        %v2697 = vunpack.c.h.bf16 %v2108
        %v2698 = vunpack.c.l.bf16 %v2109
        %v2699 = vunpack.c.h.bf16 %v2109
        %v2700 = vunpack.c.l.bf16 %v2110
        %v2701 = vunpack.c.l.bf16 %v2111
        %v2702 = vunpack.c.h.bf16 %v2111
        %v2703 = vunpack.c.l.bf16 %v2112
        %v2704 = vunpack.c.h.bf16 %v2112
        %v2705 = vunpack.c.l.bf16 %v2113
        %v2706 = vunpack.c.h.bf16 %v2113
        %v2707 = vunpack.c.l.bf16 %v2114
        %v2708 = vunpack.c.l.bf16 %v2115
        %v2709 = vunpack.c.h.bf16 %v2115
        %v2710 = vunpack.c.l.bf16 %v2116
        %v2711 = vunpack.c.h.bf16 %v2116
        %v2712 = vunpack.c.l.bf16 %v2117
        %v2713 = vunpack.c.h.bf16 %v2117
        %v2714 = vunpack.c.l.bf16 %v2118
        %v2715 = vunpack.c.l.bf16 %v2119
        %v2716 = vunpack.c.h.bf16 %v2119
        %v2717 = vunpack.c.l.bf16 %v2120
        %v2718 = vunpack.c.h.bf16 %v2120
        %v2719 = vunpack.c.l.bf16 %v2121
        %v2720 = vunpack.c.h.bf16 %v2121
        %v2721 = vunpack.c.l.bf16 %v2122
        %v2722 = vunpack.c.l.bf16 %v2123
        %v2723 = vunpack.c.h.bf16 %v2123
        %v2724 = vunpack.c.l.bf16 %v2124
        %v2725 = vunpack.c.h.bf16 %v2124
        %v2726 = vunpack.c.l.bf16 %v2125
        %v2727 = vunpack.c.h.bf16 %v2125
        %v2728 = vunpack.c.l.bf16 %v2126
        %v2729 = vunpack.c.l.bf16 %v2127
        %v2730 = vunpack.c.h.bf16 %v2127
        %v2731 = vunpack.c.l.bf16 %v2128
        %v2732 = vunpack.c.h.bf16 %v2128
        %v2733 = vunpack.c.l.bf16 %v2129
        %v2734 = vunpack.c.h.bf16 %v2129
        %v2735 = vunpack.c.l.bf16 %v2130
        %v2736 = vunpack.c.l.bf16 %v2131
        %v2737 = vunpack.c.h.bf16 %v2131
        %v2738 = vunpack.c.l.bf16 %v2132
        %v2739 = vunpack.c.h.bf16 %v2132
        %v2740 = vunpack.c.l.bf16 %v2133
        %v2741 = vunpack.c.h.bf16 %v2133
        %v2742 = vunpack.c.l.bf16 %v2134
        %v2743 = vunpack.c.l.bf16 %v2135
        %v2744 = vunpack.c.h.bf16 %v2135
        %v2745 = vunpack.c.l.bf16 %v2136
        %v2746 = vunpack.c.h.bf16 %v2136
        %v2747 = vunpack.c.l.bf16 %v2137
        %v2748 = vunpack.c.h.bf16 %v2137
        %v2749 = vunpack.c.l.bf16 %v2138
        %v2750 = vunpack.c.l.bf16 %v2139
        %v2751 = vunpack.c.h.bf16 %v2139
        %v2752 = vunpack.c.l.bf16 %v2140
        %v2753 = vunpack.c.h.bf16 %v2140
        %v2754 = vunpack.c.l.bf16 %v2141
        %v2755 = vunpack.c.h.bf16 %v2141
        %v2756 = vunpack.c.l.bf16 %v2142
        %v2757 = vunpack.c.l.bf16 %v2143
        %v2758 = vunpack.c.h.bf16 %v2143
        %v2759 = vunpack.c.l.bf16 %v2144
        %v2760 = vunpack.c.h.bf16 %v2144
        %v2761 = vunpack.c.l.bf16 %v2145
        %v2762 = vunpack.c.h.bf16 %v2145
        %v2763 = vunpack.c.l.bf16 %v2146
        %v2764 = vunpack.c.l.bf16 %v2147
        %v2765 = vunpack.c.h.bf16 %v2147
        %v2766 = vunpack.c.l.bf16 %v2148
        %v2767 = vunpack.c.h.bf16 %v2148
        %v2768 = vunpack.c.l.bf16 %v2149
        %v2769 = vunpack.c.h.bf16 %v2149
        %v2770 = vunpack.c.l.bf16 %v2150
        %v2771 = vunpack.c.l.bf16 %v2151
        %v2772 = vunpack.c.h.bf16 %v2151
        %v2773 = vunpack.c.l.bf16 %v2152
        %v2774 = vunpack.c.h.bf16 %v2152
        %v2775 = vunpack.c.l.bf16 %v2153
        %v2776 = vunpack.c.h.bf16 %v2153
        %v2777 = vunpack.c.l.bf16 %v2154
        %v2778 = vunpack.c.l.bf16 %v2155
        %v2779 = vunpack.c.h.bf16 %v2155
        %v2780 = vunpack.c.l.bf16 %v2156
        %v2781 = vunpack.c.h.bf16 %v2156
        %v2782 = vunpack.c.l.bf16 %v2157
        %v2783 = vunpack.c.h.bf16 %v2157
        %v2784 = vunpack.c.l.bf16 %v2158
        %v2785 = vunpack.c.l.bf16 %v2159
        %v2786 = vunpack.c.h.bf16 %v2159
        %v2787 = vunpack.c.l.bf16 %v2160
        %v2788 = vunpack.c.h.bf16 %v2160
        %v2789 = vunpack.c.l.bf16 %v2161
        %v2790 = vunpack.c.h.bf16 %v2161
        %v2791 = vunpack.c.l.bf16 %v2162
        %v2792 = vunpack.c.l.bf16 %v2163
        %v2793 = vunpack.c.h.bf16 %v2163
        %v2794 = vunpack.c.l.bf16 %v2164
        %v2795 = vunpack.c.h.bf16 %v2164
        %v2796 = vunpack.c.l.bf16 %v2165
        %v2797 = vunpack.c.h.bf16 %v2165
        %v2798 = vunpack.c.l.bf16 %v2166
        %v2799 = vunpack.c.l.bf16 %v2167
        %v2800 = vunpack.c.h.bf16 %v2167
        %v2801 = vunpack.c.l.bf16 %v2168
        %v2802 = vunpack.c.h.bf16 %v2168
        %v2803 = vunpack.c.l.bf16 %v2169
        %v2804 = vunpack.c.h.bf16 %v2169
        %v2805 = vunpack.c.l.bf16 %v2170
        %v2806 = vunpack.c.l.bf16 %v2171
        %v2807 = vunpack.c.h.bf16 %v2171
        %v2808 = vunpack.c.l.bf16 %v2172
        %v2809 = vunpack.c.h.bf16 %v2172
        %v2810 = vunpack.c.l.bf16 %v2173
        %v2811 = vunpack.c.h.bf16 %v2173
        %v2812 = vunpack.c.l.bf16 %v2174
        %v2813 = vunpack.c.l.bf16 %v2175
        %v2814 = vunpack.c.h.bf16 %v2175
        %v2815 = vunpack.c.l.bf16 %v2176
        %v2816 = vunpack.c.h.bf16 %v2176
        %v2817 = vunpack.c.l.bf16 %v2177
        %v2818 = vunpack.c.h.bf16 %v2177
        %v2819 = vunpack.c.l.bf16 %v2178
        %v2820 = vunpack.c.l.bf16 %v2179
        %v2821 = vunpack.c.h.bf16 %v2179
        %v2822 = vunpack.c.l.bf16 %v2180
        %v2823 = vunpack.c.h.bf16 %v2180
        %v2824 = vunpack.c.l.bf16 %v2181
        %v2825 = vunpack.c.h.bf16 %v2181
        %v2826 = vunpack.c.l.bf16 %v2182
        %v2827 = vunpack.c.l.bf16 %v2183
        %v2828 = vunpack.c.h.bf16 %v2183
        %v2829 = vunpack.c.l.bf16 %v2184
        %v2830 = vunpack.c.h.bf16 %v2184
        %v2831 = vunpack.c.l.bf16 %v2185
        %v2832 = vunpack.c.h.bf16 %v2185
        %v2833 = vunpack.c.l.bf16 %v2186
        %v2834 = vunpack.c.l.bf16 %v2187
        %v2835 = vunpack.c.h.bf16 %v2187
        %v2836 = vunpack.c.l.bf16 %v2188
        %v2837 = vunpack.c.h.bf16 %v2188
        %v2838 = vunpack.c.l.bf16 %v2189
        %v2839 = vunpack.c.h.bf16 %v2189
        %v2840 = vunpack.c.l.bf16 %v2190
        %v2841 = vunpack.c.l.bf16 %v2191
        %v2842 = vunpack.c.h.bf16 %v2191
        %v2843 = vunpack.c.l.bf16 %v2192
        %v2844 = vunpack.c.h.bf16 %v2192
        %v2845 = vunpack.c.l.bf16 %v2193
        %v2846 = vunpack.c.h.bf16 %v2193
        %v2847 = vunpack.c.l.bf16 %v2194
        %v2848 = vunpack.c.l.bf16 %v2195
        %v2849 = vunpack.c.h.bf16 %v2195
        %v2850 = vunpack.c.l.bf16 %v2196
        %v2851 = vunpack.c.h.bf16 %v2196
        %v2852 = vunpack.c.l.bf16 %v2197
        %v2853 = vunpack.c.h.bf16 %v2197
        %v2854 = vunpack.c.l.bf16 %v2198
        %v2855 = vunpack.c.l.bf16 %v2199
        %v2856 = vunpack.c.h.bf16 %v2199
        %v2857 = vunpack.c.l.bf16 %v2200
        %v2858 = vunpack.c.h.bf16 %v2200
        %v2859 = vunpack.c.l.bf16 %v2201
        %v2860 = vunpack.c.h.bf16 %v2201
        %v2861 = vunpack.c.l.bf16 %v2202
        %v2862 = vunpack.c.l.bf16 %v2203
        %v2863 = vunpack.c.h.bf16 %v2203
        %v2864 = vunpack.c.l.bf16 %v2204
        %v2865 = vunpack.c.h.bf16 %v2204
        %v2866 = vunpack.c.l.bf16 %v2205
        %v2867 = vunpack.c.h.bf16 %v2205
        %v2868 = vunpack.c.l.bf16 %v2206
        %v2869 = vunpack.c.l.bf16 %v2207
        %v2870 = vunpack.c.h.bf16 %v2207
        %v2871 = vunpack.c.l.bf16 %v2208
        %v2872 = vunpack.c.h.bf16 %v2208
        %v2873 = vunpack.c.l.bf16 %v2209
        %v2874 = vunpack.c.h.bf16 %v2209
        %v2875 = vunpack.c.l.bf16 %v2210
        %v2876 = vunpack.c.l.bf16 %v2211
        %v2877 = vunpack.c.h.bf16 %v2211
        %v2878 = vunpack.c.l.bf16 %v2212
        %v2879 = vunpack.c.h.bf16 %v2212
        %v2880 = vunpack.c.l.bf16 %v2213
        %v2881 = vunpack.c.h.bf16 %v2213
        %v2882 = vunpack.c.l.bf16 %v2214
        %v2883 = vunpack.c.l.bf16 %v2215
        %v2884 = vunpack.c.h.bf16 %v2215
        %v2885 = vunpack.c.l.bf16 %v2216
        %v2886 = vunpack.c.h.bf16 %v2216
        %v2887 = vunpack.c.l.bf16 %v2217
        %v2888 = vunpack.c.h.bf16 %v2217
        %v2889 = vunpack.c.l.bf16 %v2218
        %v2890 = vunpack.c.l.bf16 %v2219
        %v2891 = vunpack.c.h.bf16 %v2219
        %v2892 = vunpack.c.l.bf16 %v2220
        %v2893 = vunpack.c.h.bf16 %v2220
        %v2894 = vunpack.c.l.bf16 %v2221
        %v2895 = vunpack.c.h.bf16 %v2221
        %v2896 = vunpack.c.l.bf16 %v2222
        %v2897 = vunpack.c.l.bf16 %v2223
        %v2898 = vunpack.c.h.bf16 %v2223
        %v2899 = vunpack.c.l.bf16 %v2224
        %v2900 = vunpack.c.h.bf16 %v2224
        %v2901 = vunpack.c.l.bf16 %v2225
        %v2902 = vunpack.c.h.bf16 %v2225
        %v2903 = vunpack.c.l.bf16 %v2226
        %v2904 = vunpack.c.l.bf16 %v2227
        %v2905 = vunpack.c.h.bf16 %v2227
        %v2906 = vunpack.c.l.bf16 %v2228
        %v2907 = vunpack.c.h.bf16 %v2228
        %v2908 = vunpack.c.l.bf16 %v2229
        %v2909 = vunpack.c.h.bf16 %v2229
        %v2910 = vunpack.c.l.bf16 %v2230
        %v2911 = vunpack.c.l.bf16 %v2231
        %v2912 = vunpack.c.h.bf16 %v2231
        %v2913 = vunpack.c.l.bf16 %v2232
        %v2914 = vunpack.c.h.bf16 %v2232
        %v2915 = vunpack.c.l.bf16 %v2233
        %v2916 = vunpack.c.h.bf16 %v2233
        %v2917 = vunpack.c.l.bf16 %v2234
        %v2918 = vunpack.c.l.bf16 %v2235
        %v2919 = vunpack.c.h.bf16 %v2235
        %v2920 = vunpack.c.l.bf16 %v2236
        %v2921 = vunpack.c.h.bf16 %v2236
        %v2922 = vunpack.c.l.bf16 %v2237
        %v2923 = vunpack.c.h.bf16 %v2237
        %v2924 = vunpack.c.l.bf16 %v2238
        %v2925 = vadd.f32 %v2239, %v2582
        %v2926 = vadd.f32 %v2240, %v2583
        %v2927 = vadd.f32 %v2241, %v2584
        %v2928 = vadd.f32 %v2242, %v2585
        %v2929 = vadd.f32 %v2243, %v2586
        %v2930 = vadd.f32 %v2244, %v2587
        %v2931 = vadd.f32 %v2245, %v2588
        %v2932 = vadd.f32 %v2246, %v2589
        %v2933 = vadd.f32 %v2247, %v2590
        %v2934 = vadd.f32 %v2248, %v2591
        %v2935 = vadd.f32 %v2249, %v2592
        %v2936 = vadd.f32 %v2250, %v2593
        %v2937 = vadd.f32 %v2251, %v2594
        %v2938 = vadd.f32 %v2252, %v2595
        %v2939 = vadd.f32 %v2253, %v2596
        %v2940 = vadd.f32 %v2254, %v2597
        %v2941 = vadd.f32 %v2255, %v2598
        %v2942 = vadd.f32 %v2256, %v2599
        %v2943 = vadd.f32 %v2257, %v2600
        %v2944 = vadd.f32 %v2258, %v2601
        %v2945 = vadd.f32 %v2259, %v2602
        %v2946 = vadd.f32 %v2260, %v2603
        %v2947 = vadd.f32 %v2261, %v2604
        %v2948 = vadd.f32 %v2262, %v2605
        %v2949 = vadd.f32 %v2263, %v2606
        %v2950 = vadd.f32 %v2264, %v2607
        %v2951 = vadd.f32 %v2265, %v2608
        %v2952 = vadd.f32 %v2266, %v2609
        %v2953 = vadd.f32 %v2267, %v2610
        %v2954 = vadd.f32 %v2268, %v2611
        %v2955 = vadd.f32 %v2269, %v2612
        %v2956 = vadd.f32 %v2270, %v2613
        %v2957 = vadd.f32 %v2271, %v2614
        %v2958 = vadd.f32 %v2272, %v2615
        %v2959 = vadd.f32 %v2273, %v2616
        %v2960 = vadd.f32 %v2274, %v2617
        %v2961 = vadd.f32 %v2275, %v2618
        %v2962 = vadd.f32 %v2276, %v2619
        %v2963 = vadd.f32 %v2277, %v2620
        %v2964 = vadd.f32 %v2278, %v2621
        %v2965 = vadd.f32 %v2279, %v2622
        %v2966 = vadd.f32 %v2280, %v2623
        %v2967 = vadd.f32 %v2281, %v2624
        %v2968 = vadd.f32 %v2282, %v2625
        %v2969 = vadd.f32 %v2283, %v2626
        %v2970 = vadd.f32 %v2284, %v2627
        %v2971 = vadd.f32 %v2285, %v2628
        %v2972 = vadd.f32 %v2286, %v2629
        %v2973 = vadd.f32 %v2287, %v2630
        %v2974 = vadd.f32 %v2288, %v2631
        %v2975 = vadd.f32 %v2289, %v2632
        %v2976 = vadd.f32 %v2290, %v2633
        %v2977 = vadd.f32 %v2291, %v2634
        %v2978 = vadd.f32 %v2292, %v2635
        %v2979 = vadd.f32 %v2293, %v2636
        %v2980 = vadd.f32 %v2294, %v2637
        %v2981 = vadd.f32 %v2295, %v2638
        %v2982 = vadd.f32 %v2296, %v2639
        %v2983 = vadd.f32 %v2297, %v2640
        %v2984 = vadd.f32 %v2298, %v2641
        %v2985 = vadd.f32 %v2299, %v2642
        %v2986 = vadd.f32 %v2300, %v2643
        %v2987 = vadd.f32 %v2301, %v2644
        %v2988 = vadd.f32 %v2302, %v2645
        %v2989 = vadd.f32 %v2303, %v2646
        %v2990 = vadd.f32 %v2304, %v2647
        %v2991 = vadd.f32 %v2305, %v2648
        %v2992 = vadd.f32 %v2306, %v2649
        %v2993 = vadd.f32 %v2307, %v2650
        %v2994 = vadd.f32 %v2308, %v2651
        %v2995 = vadd.f32 %v2309, %v2652
        %v2996 = vadd.f32 %v2310, %v2653
        %v2997 = vadd.f32 %v2311, %v2654
        %v2998 = vadd.f32 %v2312, %v2655
        %v2999 = vadd.f32 %v2313, %v2656
        %v3000 = vadd.f32 %v2314, %v2657
        %v3001 = vadd.f32 %v2315, %v2658
        %v3002 = vadd.f32 %v2316, %v2659
        %v3003 = vadd.f32 %v2317, %v2660
        %v3004 = vadd.f32 %v2318, %v2661
        %v3005 = vadd.f32 %v2319, %v2662
        %v3006 = vadd.f32 %v2320, %v2663
        %v3007 = vadd.f32 %v2321, %v2664
        %v3008 = vadd.f32 %v2322, %v2665
        %v3009 = vadd.f32 %v2323, %v2666
        %v3010 = vadd.f32 %v2324, %v2667
        %v3011 = vadd.f32 %v2325, %v2668
        %v3012 = vadd.f32 %v2326, %v2669
        %v3013 = vadd.f32 %v2327, %v2670
        %v3014 = vadd.f32 %v2328, %v2671
        %v3015 = vadd.f32 %v2329, %v2672
        %v3016 = vadd.f32 %v2330, %v2673
        %v3017 = vadd.f32 %v2331, %v2674
        %v3018 = vadd.f32 %v2332, %v2675
        %v3019 = vadd.f32 %v2333, %v2676
        %v3020 = vadd.f32 %v2334, %v2677
        %v3021 = vadd.f32 %v2335, %v2678
        %v3022 = vadd.f32 %v2336, %v2679
        %v3023 = vadd.f32 %v2337, %v2680
        %v3024 = vadd.f32 %v2338, %v2681
        %v3025 = vadd.f32 %v2339, %v2682
        %v3026 = vadd.f32 %v2340, %v2683
        %v3027 = vadd.f32 %v2341, %v2684
        %v3028 = vadd.f32 %v2342, %v2685
        %v3029 = vadd.f32 %v2343, %v2686
        %v3030 = vadd.f32 %v2344, %v2687
        %v3031 = vadd.f32 %v2345, %v2688
        %v3032 = vadd.f32 %v2346, %v2689
        %v3033 = vadd.f32 %v2347, %v2690
        %v3034 = vadd.f32 %v2348, %v2691
        %v3035 = vadd.f32 %v2349, %v2692
        %v3036 = vadd.f32 %v2350, %v2693
        %v3037 = vadd.f32 %v2351, %v2694
        %v3038 = vadd.f32 %v2352, %v2695
        %v3039 = vadd.f32 %v2353, %v2696
        %v3040 = vadd.f32 %v2354, %v2697
        %v3041 = vadd.f32 %v2355, %v2698
        %v3042 = vadd.f32 %v2356, %v2699
        %v3043 = vadd.f32 %v2357, %v2700
        %v3044 = vadd.f32 %v2358, %v2701
        %v3045 = vadd.f32 %v2359, %v2702
        %v3046 = vadd.f32 %v2360, %v2703
        %v3047 = vadd.f32 %v2361, %v2704
        %v3048 = vadd.f32 %v2362, %v2705
        %v3049 = vadd.f32 %v2363, %v2706
        %v3050 = vadd.f32 %v2364, %v2707
        %v3051 = vadd.f32 %v2365, %v2708
        %v3052 = vadd.f32 %v2366, %v2709
        %v3053 = vadd.f32 %v2367, %v2710
        %v3054 = vadd.f32 %v2368, %v2711
        %v3055 = vadd.f32 %v2369, %v2712
        %v3056 = vadd.f32 %v2370, %v2713
        %v3057 = vadd.f32 %v2371, %v2714
        %v3058 = vadd.f32 %v2372, %v2715
        %v3059 = vadd.f32 %v2373, %v2716
        %v3060 = vadd.f32 %v2374, %v2717
        %v3061 = vadd.f32 %v2375, %v2718
        %v3062 = vadd.f32 %v2376, %v2719
        %v3063 = vadd.f32 %v2377, %v2720
        %v3064 = vadd.f32 %v2378, %v2721
        %v3065 = vadd.f32 %v2379, %v2722
        %v3066 = vadd.f32 %v2380, %v2723
        %v3067 = vadd.f32 %v2381, %v2724
        %v3068 = vadd.f32 %v2382, %v2725
        %v3069 = vadd.f32 %v2383, %v2726
        %v3070 = vadd.f32 %v2384, %v2727
        %v3071 = vadd.f32 %v2385, %v2728
        %v3072 = vadd.f32 %v2386, %v2729
        %v3073 = vadd.f32 %v2387, %v2730
        %v3074 = vadd.f32 %v2388, %v2731
        %v3075 = vadd.f32 %v2389, %v2732
        %v3076 = vadd.f32 %v2390, %v2733
        %v3077 = vadd.f32 %v2391, %v2734
        %v3078 = vadd.f32 %v2392, %v2735
        %v3079 = vadd.f32 %v2393, %v2736
        %v3080 = vadd.f32 %v2394, %v2737
        %v3081 = vadd.f32 %v2395, %v2738
        %v3082 = vadd.f32 %v2396, %v2739
        %v3083 = vadd.f32 %v2397, %v2740
        %v3084 = vadd.f32 %v2398, %v2741
        %v3085 = vadd.f32 %v2399, %v2742
        %v3086 = vadd.f32 %v2400, %v2743
        %v3087 = vadd.f32 %v2401, %v2744
        %v3088 = vadd.f32 %v2402, %v2745
        %v3089 = vadd.f32 %v2403, %v2746
        %v3090 = vadd.f32 %v2404, %v2747
        %v3091 = vadd.f32 %v2405, %v2748
        %v3092 = vadd.f32 %v2406, %v2749
        %v3093 = vadd.f32 %v2407, %v2750
        %v3094 = vadd.f32 %v2408, %v2751
        %v3095 = vadd.f32 %v2409, %v2752
        %v3096 = vadd.f32 %v2410, %v2753
        %v3097 = vadd.f32 %v2411, %v2754
        %v3098 = vadd.f32 %v2412, %v2755
        %v3099 = vadd.f32 %v2413, %v2756
        %v3100 = vadd.f32 %v2414, %v2757
        %v3101 = vadd.f32 %v2415, %v2758
        %v3102 = vadd.f32 %v2416, %v2759
        %v3103 = vadd.f32 %v2417, %v2760
        %v3104 = vadd.f32 %v2418, %v2761
        %v3105 = vadd.f32 %v2419, %v2762
        %v3106 = vadd.f32 %v2420, %v2763
        %v3107 = vadd.f32 %v2421, %v2764
        %v3108 = vadd.f32 %v2422, %v2765
        %v3109 = vadd.f32 %v2423, %v2766
        %v3110 = vadd.f32 %v2424, %v2767
        %v3111 = vadd.f32 %v2425, %v2768
        %v3112 = vadd.f32 %v2426, %v2769
        %v3113 = vadd.f32 %v2427, %v2770
        %v3114 = vadd.f32 %v2428, %v2771
        %v3115 = vadd.f32 %v2429, %v2772
        %v3116 = vadd.f32 %v2430, %v2773
        %v3117 = vadd.f32 %v2431, %v2774
        %v3118 = vadd.f32 %v2432, %v2775
        %v3119 = vadd.f32 %v2433, %v2776
        %v3120 = vadd.f32 %v2434, %v2777
        %v3121 = vadd.f32 %v2435, %v2778
        %v3122 = vadd.f32 %v2436, %v2779
        %v3123 = vadd.f32 %v2437, %v2780
        %v3124 = vadd.f32 %v2438, %v2781
        %v3125 = vadd.f32 %v2439, %v2782
        %v3126 = vadd.f32 %v2440, %v2783
        %v3127 = vadd.f32 %v2441, %v2784
        %v3128 = vadd.f32 %v2442, %v2785
        %v3129 = vadd.f32 %v2443, %v2786
        %v3130 = vadd.f32 %v2444, %v2787
        %v3131 = vadd.f32 %v2445, %v2788
        %v3132 = vadd.f32 %v2446, %v2789
        %v3133 = vadd.f32 %v2447, %v2790
        %v3134 = vadd.f32 %v2448, %v2791
        %v3135 = vadd.f32 %v2449, %v2792
        %v3136 = vadd.f32 %v2450, %v2793
        %v3137 = vadd.f32 %v2451, %v2794
        %v3138 = vadd.f32 %v2452, %v2795
        %v3139 = vadd.f32 %v2453, %v2796
        %v3140 = vadd.f32 %v2454, %v2797
        %v3141 = vadd.f32 %v2455, %v2798
        %v3142 = vadd.f32 %v2456, %v2799
        %v3143 = vadd.f32 %v2457, %v2800
        %v3144 = vadd.f32 %v2458, %v2801
        %v3145 = vadd.f32 %v2459, %v2802
        %v3146 = vadd.f32 %v2460, %v2803
        %v3147 = vadd.f32 %v2461, %v2804
        %v3148 = vadd.f32 %v2462, %v2805
        %v3149 = vadd.f32 %v2463, %v2806
        %v3150 = vadd.f32 %v2464, %v2807
        %v3151 = vadd.f32 %v2465, %v2808
        %v3152 = vadd.f32 %v2466, %v2809
        %v3153 = vadd.f32 %v2467, %v2810
        %v3154 = vadd.f32 %v2468, %v2811
        %v3155 = vadd.f32 %v2469, %v2812
        %v3156 = vadd.f32 %v2470, %v2813
        %v3157 = vadd.f32 %v2471, %v2814
        %v3158 = vadd.f32 %v2472, %v2815
        %v3159 = vadd.f32 %v2473, %v2816
        %v3160 = vadd.f32 %v2474, %v2817
        %v3161 = vadd.f32 %v2475, %v2818
        %v3162 = vadd.f32 %v2476, %v2819
        %v3163 = vadd.f32 %v2477, %v2820
        %v3164 = vadd.f32 %v2478, %v2821
        %v3165 = vadd.f32 %v2479, %v2822
        %v3166 = vadd.f32 %v2480, %v2823
        %v3167 = vadd.f32 %v2481, %v2824
        %v3168 = vadd.f32 %v2482, %v2825
        %v3169 = vadd.f32 %v2483, %v2826
        %v3170 = vadd.f32 %v2484, %v2827
        %v3171 = vadd.f32 %v2485, %v2828
        %v3172 = vadd.f32 %v2486, %v2829
        %v3173 = vadd.f32 %v2487, %v2830
        %v3174 = vadd.f32 %v2488, %v2831
        %v3175 = vadd.f32 %v2489, %v2832
        %v3176 = vadd.f32 %v2490, %v2833
        %v3177 = vadd.f32 %v2491, %v2834
        %v3178 = vadd.f32 %v2492, %v2835
        %v3179 = vadd.f32 %v2493, %v2836
        %v3180 = vadd.f32 %v2494, %v2837
        %v3181 = vadd.f32 %v2495, %v2838
        %v3182 = vadd.f32 %v2496, %v2839
        %v3183 = vadd.f32 %v2497, %v2840
        %v3184 = vadd.f32 %v2498, %v2841
        %v3185 = vadd.f32 %v2499, %v2842
        %v3186 = vadd.f32 %v2500, %v2843
        %v3187 = vadd.f32 %v2501, %v2844
        %v3188 = vadd.f32 %v2502, %v2845
        %v3189 = vadd.f32 %v2503, %v2846
        %v3190 = vadd.f32 %v2504, %v2847
        %v3191 = vadd.f32 %v2505, %v2848
        %v3192 = vadd.f32 %v2506, %v2849
        %v3193 = vadd.f32 %v2507, %v2850
        %v3194 = vadd.f32 %v2508, %v2851
        %v3195 = vadd.f32 %v2509, %v2852
        %v3196 = vadd.f32 %v2510, %v2853
        %v3197 = vadd.f32 %v2511, %v2854
        %v3198 = vadd.f32 %v2512, %v2855
        %v3199 = vadd.f32 %v2513, %v2856
        %v3200 = vadd.f32 %v2514, %v2857
        %v3201 = vadd.f32 %v2515, %v2858
        %v3202 = vadd.f32 %v2516, %v2859
        %v3203 = vadd.f32 %v2517, %v2860
        %v3204 = vadd.f32 %v2518, %v2861
        %v3205 = vadd.f32 %v2519, %v2862
        %v3206 = vadd.f32 %v2520, %v2863
        %v3207 = vadd.f32 %v2521, %v2864
        %v3208 = vadd.f32 %v2522, %v2865
        %v3209 = vadd.f32 %v2523, %v2866
        %v3210 = vadd.f32 %v2524, %v2867
        %v3211 = vadd.f32 %v2525, %v2868
        %v3212 = vadd.f32 %v2526, %v2869
        %v3213 = vadd.f32 %v2527, %v2870
        %v3214 = vadd.f32 %v2528, %v2871
        %v3215 = vadd.f32 %v2529, %v2872
        %v3216 = vadd.f32 %v2530, %v2873
        %v3217 = vadd.f32 %v2531, %v2874
        %v3218 = vadd.f32 %v2532, %v2875
        %v3219 = vadd.f32 %v2533, %v2876
        %v3220 = vadd.f32 %v2534, %v2877
        %v3221 = vadd.f32 %v2535, %v2878
        %v3222 = vadd.f32 %v2536, %v2879
        %v3223 = vadd.f32 %v2537, %v2880
        %v3224 = vadd.f32 %v2538, %v2881
        %v3225 = vadd.f32 %v2539, %v2882
        %v3226 = vadd.f32 %v2540, %v2883
        %v3227 = vadd.f32 %v2541, %v2884
        %v3228 = vadd.f32 %v2542, %v2885
        %v3229 = vadd.f32 %v2543, %v2886
        %v3230 = vadd.f32 %v2544, %v2887
        %v3231 = vadd.f32 %v2545, %v2888
        %v3232 = vadd.f32 %v2546, %v2889
        %v3233 = vadd.f32 %v2547, %v2890
        %v3234 = vadd.f32 %v2548, %v2891
        %v3235 = vadd.f32 %v2549, %v2892
        %v3236 = vadd.f32 %v2550, %v2893
        %v3237 = vadd.f32 %v2551, %v2894
        %v3238 = vadd.f32 %v2552, %v2895
        %v3239 = vadd.f32 %v2553, %v2896
        %v3240 = vadd.f32 %v2554, %v2897
        %v3241 = vadd.f32 %v2555, %v2898
        %v3242 = vadd.f32 %v2556, %v2899
        %v3243 = vadd.f32 %v2557, %v2900
        %v3244 = vadd.f32 %v2558, %v2901
        %v3245 = vadd.f32 %v2559, %v2902
        %v3246 = vadd.f32 %v2560, %v2903
        %v3247 = vadd.f32 %v2561, %v2904
        %v3248 = vadd.f32 %v2562, %v2905
        %v3249 = vadd.f32 %v2563, %v2906
        %v3250 = vadd.f32 %v2564, %v2907
        %v3251 = vadd.f32 %v2565, %v2908
        %v3252 = vadd.f32 %v2566, %v2909
        %v3253 = vadd.f32 %v2567, %v2910
        %v3254 = vadd.f32 %v2568, %v2911
        %v3255 = vadd.f32 %v2569, %v2912
        %v3256 = vadd.f32 %v2570, %v2913
        %v3257 = vadd.f32 %v2571, %v2914
        %v3258 = vadd.f32 %v2572, %v2915
        %v3259 = vadd.f32 %v2573, %v2916
        %v3260 = vadd.f32 %v2574, %v2917
        %v3261 = vadd.f32 %v2575, %v2918
        %v3262 = vadd.f32 %v2576, %v2919
        %v3263 = vadd.f32 %v2577, %v2920
        %v3264 = vadd.f32 %v2578, %v2921
        %v3265 = vadd.f32 %v2579, %v2922
        %v3266 = vadd.f32 %v2580, %v2923
        %v3267 = vadd.f32 %v2581, %v2924
        %v3268 = vpack.c.bf16 %v2932, %v2925
        %v3269 = vpack.c.bf16 %v2933, %v2926
        %v3270 = vpack.c.bf16 %v2934, %v2927
        %v3271 = vpack.c.bf16 %v2935, %v2928
        %v3272 = vpack.c.bf16 %v2936, %v2929
        %v3273 = vpack.c.bf16 %v2937, %v2930
        %v3274 = vpack.c.bf16 %v2938, %v2931
        %v3275 = vpack.c.bf16 %v2946, %v2939
        %v3276 = vpack.c.bf16 %v2947, %v2940
        %v3277 = vpack.c.bf16 %v2948, %v2941
        %v3278 = vpack.c.bf16 %v2949, %v2942
        %v3279 = vpack.c.bf16 %v2950, %v2943
        %v3280 = vpack.c.bf16 %v2951, %v2944
        %v3281 = vpack.c.bf16 %v2952, %v2945
        %v3282 = vpack.c.bf16 %v2960, %v2953
        %v3283 = vpack.c.bf16 %v2961, %v2954
        %v3284 = vpack.c.bf16 %v2962, %v2955
        %v3285 = vpack.c.bf16 %v2963, %v2956
        %v3286 = vpack.c.bf16 %v2964, %v2957
        %v3287 = vpack.c.bf16 %v2965, %v2958
        %v3288 = vpack.c.bf16 %v2966, %v2959
        %v3289 = vpack.c.bf16 %v2974, %v2967
        %v3290 = vpack.c.bf16 %v2975, %v2968
        %v3291 = vpack.c.bf16 %v2976, %v2969
        %v3292 = vpack.c.bf16 %v2977, %v2970
        %v3293 = vpack.c.bf16 %v2978, %v2971
        %v3294 = vpack.c.bf16 %v2979, %v2972
        %v3295 = vpack.c.bf16 %v2980, %v2973
        %v3296 = vpack.c.bf16 %v2988, %v2981
        %v3297 = vpack.c.bf16 %v2989, %v2982
        %v3298 = vpack.c.bf16 %v2990, %v2983
        %v3299 = vpack.c.bf16 %v2991, %v2984
        %v3300 = vpack.c.bf16 %v2992, %v2985
        %v3301 = vpack.c.bf16 %v2993, %v2986
        %v3302 = vpack.c.bf16 %v2994, %v2987
        %v3303 = vpack.c.bf16 %v3002, %v2995
        %v3304 = vpack.c.bf16 %v3003, %v2996
        %v3305 = vpack.c.bf16 %v3004, %v2997
        %v3306 = vpack.c.bf16 %v3005, %v2998
        %v3307 = vpack.c.bf16 %v3006, %v2999
        %v3308 = vpack.c.bf16 %v3007, %v3000
        %v3309 = vpack.c.bf16 %v3008, %v3001
        %v3310 = vpack.c.bf16 %v3016, %v3009
        %v3311 = vpack.c.bf16 %v3017, %v3010
        %v3312 = vpack.c.bf16 %v3018, %v3011
        %v3313 = vpack.c.bf16 %v3019, %v3012
        %v3314 = vpack.c.bf16 %v3020, %v3013
        %v3315 = vpack.c.bf16 %v3021, %v3014
        %v3316 = vpack.c.bf16 %v3022, %v3015
        %v3317 = vpack.c.bf16 %v3030, %v3023
        %v3318 = vpack.c.bf16 %v3031, %v3024
        %v3319 = vpack.c.bf16 %v3032, %v3025
        %v3320 = vpack.c.bf16 %v3033, %v3026
        %v3321 = vpack.c.bf16 %v3034, %v3027
        %v3322 = vpack.c.bf16 %v3035, %v3028
        %v3323 = vpack.c.bf16 %v3036, %v3029
        %v3324 = vpack.c.bf16 %v3044, %v3037
        %v3325 = vpack.c.bf16 %v3045, %v3038
        %v3326 = vpack.c.bf16 %v3046, %v3039
        %v3327 = vpack.c.bf16 %v3047, %v3040
        %v3328 = vpack.c.bf16 %v3048, %v3041
        %v3329 = vpack.c.bf16 %v3049, %v3042
        %v3330 = vpack.c.bf16 %v3050, %v3043
        %v3331 = vpack.c.bf16 %v3058, %v3051
        %v3332 = vpack.c.bf16 %v3059, %v3052
        %v3333 = vpack.c.bf16 %v3060, %v3053
        %v3334 = vpack.c.bf16 %v3061, %v3054
        %v3335 = vpack.c.bf16 %v3062, %v3055
        %v3336 = vpack.c.bf16 %v3063, %v3056
        %v3337 = vpack.c.bf16 %v3064, %v3057
        %v3338 = vpack.c.bf16 %v3072, %v3065
        %v3339 = vpack.c.bf16 %v3073, %v3066
        %v3340 = vpack.c.bf16 %v3074, %v3067
        %v3341 = vpack.c.bf16 %v3075, %v3068
        %v3342 = vpack.c.bf16 %v3076, %v3069
        %v3343 = vpack.c.bf16 %v3077, %v3070
        %v3344 = vpack.c.bf16 %v3078, %v3071
        %v3345 = vpack.c.bf16 %v3086, %v3079
        %v3346 = vpack.c.bf16 %v3087, %v3080
        %v3347 = vpack.c.bf16 %v3088, %v3081
        %v3348 = vpack.c.bf16 %v3089, %v3082
        %v3349 = vpack.c.bf16 %v3090, %v3083
        %v3350 = vpack.c.bf16 %v3091, %v3084
        %v3351 = vpack.c.bf16 %v3092, %v3085
        %v3352 = vpack.c.bf16 %v3100, %v3093
        %v3353 = vpack.c.bf16 %v3101, %v3094
        %v3354 = vpack.c.bf16 %v3102, %v3095
        %v3355 = vpack.c.bf16 %v3103, %v3096
        %v3356 = vpack.c.bf16 %v3104, %v3097
        %v3357 = vpack.c.bf16 %v3105, %v3098
        %v3358 = vpack.c.bf16 %v3106, %v3099
        %v3359 = vpack.c.bf16 %v3114, %v3107
        %v3360 = vpack.c.bf16 %v3115, %v3108
        %v3361 = vpack.c.bf16 %v3116, %v3109
        %v3362 = vpack.c.bf16 %v3117, %v3110
        %v3363 = vpack.c.bf16 %v3118, %v3111
        %v3364 = vpack.c.bf16 %v3119, %v3112
        %v3365 = vpack.c.bf16 %v3120, %v3113
        %v3366 = vpack.c.bf16 %v3128, %v3121
        %v3367 = vpack.c.bf16 %v3129, %v3122
        %v3368 = vpack.c.bf16 %v3130, %v3123
        %v3369 = vpack.c.bf16 %v3131, %v3124
        %v3370 = vpack.c.bf16 %v3132, %v3125
        %v3371 = vpack.c.bf16 %v3133, %v3126
        %v3372 = vpack.c.bf16 %v3134, %v3127
        %v3373 = vpack.c.bf16 %v3142, %v3135
        %v3374 = vpack.c.bf16 %v3143, %v3136
        %v3375 = vpack.c.bf16 %v3144, %v3137
        %v3376 = vpack.c.bf16 %v3145, %v3138
        %v3377 = vpack.c.bf16 %v3146, %v3139
        %v3378 = vpack.c.bf16 %v3147, %v3140
        %v3379 = vpack.c.bf16 %v3148, %v3141
        %v3380 = vpack.c.bf16 %v3156, %v3149
        %v3381 = vpack.c.bf16 %v3157, %v3150
        %v3382 = vpack.c.bf16 %v3158, %v3151
        %v3383 = vpack.c.bf16 %v3159, %v3152
        %v3384 = vpack.c.bf16 %v3160, %v3153
        %v3385 = vpack.c.bf16 %v3161, %v3154
        %v3386 = vpack.c.bf16 %v3162, %v3155
        %v3387 = vpack.c.bf16 %v3170, %v3163
        %v3388 = vpack.c.bf16 %v3171, %v3164
        %v3389 = vpack.c.bf16 %v3172, %v3165
        %v3390 = vpack.c.bf16 %v3173, %v3166
        %v3391 = vpack.c.bf16 %v3174, %v3167
        %v3392 = vpack.c.bf16 %v3175, %v3168
        %v3393 = vpack.c.bf16 %v3176, %v3169
        %v3394 = vpack.c.bf16 %v3184, %v3177
        %v3395 = vpack.c.bf16 %v3185, %v3178
        %v3396 = vpack.c.bf16 %v3186, %v3179
        %v3397 = vpack.c.bf16 %v3187, %v3180
        %v3398 = vpack.c.bf16 %v3188, %v3181
        %v3399 = vpack.c.bf16 %v3189, %v3182
        %v3400 = vpack.c.bf16 %v3190, %v3183
        %v3401 = vpack.c.bf16 %v3198, %v3191
        %v3402 = vpack.c.bf16 %v3199, %v3192
        %v3403 = vpack.c.bf16 %v3200, %v3193
        %v3404 = vpack.c.bf16 %v3201, %v3194
        %v3405 = vpack.c.bf16 %v3202, %v3195
        %v3406 = vpack.c.bf16 %v3203, %v3196
        %v3407 = vpack.c.bf16 %v3204, %v3197
        %v3408 = vpack.c.bf16 %v3212, %v3205
        %v3409 = vpack.c.bf16 %v3213, %v3206
        %v3410 = vpack.c.bf16 %v3214, %v3207
        %v3411 = vpack.c.bf16 %v3215, %v3208
        %v3412 = vpack.c.bf16 %v3216, %v3209
        %v3413 = vpack.c.bf16 %v3217, %v3210
        %v3414 = vpack.c.bf16 %v3218, %v3211
        %v3415 = vpack.c.bf16 %v3226, %v3219
        %v3416 = vpack.c.bf16 %v3227, %v3220
        %v3417 = vpack.c.bf16 %v3228, %v3221
        %v3418 = vpack.c.bf16 %v3229, %v3222
        %v3419 = vpack.c.bf16 %v3230, %v3223
        %v3420 = vpack.c.bf16 %v3231, %v3224
        %v3421 = vpack.c.bf16 %v3232, %v3225
        %v3422 = vpack.c.bf16 %v3240, %v3233
        %v3423 = vpack.c.bf16 %v3241, %v3234
        %v3424 = vpack.c.bf16 %v3242, %v3235
        %v3425 = vpack.c.bf16 %v3243, %v3236
        %v3426 = vpack.c.bf16 %v3244, %v3237
        %v3427 = vpack.c.bf16 %v3245, %v3238
        %v3428 = vpack.c.bf16 %v3246, %v3239
        %v3429 = vpack.c.bf16 %v3254, %v3247
        %v3430 = vpack.c.bf16 %v3255, %v3248
        %v3431 = vpack.c.bf16 %v3256, %v3249
        %v3432 = vpack.c.bf16 %v3257, %v3250
        %v3433 = vpack.c.bf16 %v3258, %v3251
        %v3434 = vpack.c.bf16 %v3259, %v3252
        %v3435 = vpack.c.bf16 %v3260, %v3253
        %v3436 = vpack.c.bf16 %v3261, %v3261
        %v3437 = vpack.c.bf16 %v3262, %v3262
        %v3438 = vpack.c.bf16 %v3263, %v3263
        %v3439 = vpack.c.bf16 %v3264, %v3264
        %v3440 = vpack.c.bf16 %v3265, %v3265
        %v3441 = vpack.c.bf16 %v3266, %v3266
        %v3442 = vpack.c.bf16 %v3267, %v3267
        %v3443 = vld [vmem:[#allocation2] sm:$0xff]
        %v3444 = vld [vmem:[#allocation2 + $0x8] sm:$0xff]
        %v3445 = vld [vmem:[#allocation2 + $0x10] sm:$0xff]
        %v3446 = vld [vmem:[#allocation2 + $0x18] sm:$0xff]
        %v3447 = vld [vmem:[#allocation2 + $0x20] sm:$0xff]
        %v3448 = vld [vmem:[#allocation2 + $0x28] sm:$0xff]
        %v3449 = vld [vmem:[#allocation2 + $0x30] sm:$0xff]
        %v3450 = vld [vmem:[#allocation2 + $0x38] sm:$0xff]
        %v3451 = vld [vmem:[#allocation2 + $0x40] sm:$0xff]
        %v3452 = vld [vmem:[#allocation2 + $0x48] sm:$0xff]
        %v3453 = vld [vmem:[#allocation2 + $0x50] sm:$0xff]
        %v3454 = vld [vmem:[#allocation2 + $0x58] sm:$0xff]
        %v3455 = vld [vmem:[#allocation2 + $0x60] sm:$0xff]
        %v3456 = vld [vmem:[#allocation2 + $0x68] sm:$0xff]
        %v3457 = vld [vmem:[%s398] sm:$0xff]
        %v3458 = vld [vmem:[%s398 + $0x8] sm:$0xff]
        %v3459 = vld [vmem:[%s398 + $0x10] sm:$0xff]
        %v3460 = vld [vmem:[%s398 + $0x18] sm:$0xff]
        %v3465 = vunpack.c.l.b16 %v3457
        %v3466 = vunpack.c.h.b16 %v3457
        %v3467 = vunpack.c.l.b16 %v3458
        %v3468 = vunpack.c.h.b16 %v3458
        %v3469 = vunpack.c.l.b16 %v3459
        %v3470 = vunpack.c.h.b16 %v3459
        %v3471 = vunpack.c.l.b16 %v3460
        %v3472 = vunpack.c.h.b16 %v3460
        %v3473 = vpack.c.b16 %v3469, %v3465
        %v3474 = vpack.c.b16 %v3470, %v3466
        %v3475 = vpack.c.b16 %v3471, %v3467
        %v3476 = vpack.c.b16 %v3472, %v3468
        %vm3480 = vcmask 64512
        %v3482 = vsel %vm3480, %v3476, 0
        %vm3484 = vcmask 1043456
        %v3486 = vsel %vm3484, %v3436, 0
        %v3489 = vsel %vm3484, %v3437, 0
        %v3492 = vsel %vm3484, %v3438, 0
        %v3495 = vsel %vm3484, %v3439, 0
        %v3498 = vsel %vm3484, %v3440, 0
        %v3501 = vsel %vm3484, %v3441, 0
        %v3504 = vsel %vm3484, %v3442, 0
        %3506 = vmatpush.bf16.msra.mxu0 %v3317
        %3507 = vmatpush.bf16.msra.mxu0 %v3310
        %3508 = vmatpush.bf16.msra.mxu0 %v3303
        %3509 = vmatpush.bf16.msra.mxu0 %v3296
        %3510 = vmatpush.bf16.msra.mxu0 %v3289
        %3511 = vmatpush.bf16.msra.mxu0 %v3282
        %3512 = vmatpush.bf16.msra.mxu0 %v3275
        %3513 = vmatpush.bf16.msra.mxu0 %v3268
        %3514 = vmatmul.bf16.gmra.mxu0 %v3473
        %v3515 = vpop.f32.mrf.mxu0
        %v3516 = vadd.f32 0.0, %v3515
        %v3517 = vpop.f32.mrf.mxu0
        %v3518 = vadd.f32 0.0, %v3517
        %3519 = vdwg.mxu0
        %3520 = vmatpush.bf16.msra.mxu0 %v3373
        %3521 = vmatpush.bf16.msra.mxu0 %v3366
        %3522 = vmatpush.bf16.msra.mxu0 %v3359
        %3523 = vmatpush.bf16.msra.mxu0 %v3352
        %3524 = vmatpush.bf16.msra.mxu0 %v3345
        %3525 = vmatpush.bf16.msra.mxu0 %v3338
        %3526 = vmatpush.bf16.msra.mxu0 %v3331
        %3527 = vmatpush.bf16.msra.mxu0 %v3324
        %3528 = vmatmul.bf16.gmra.mxu0 %v3474
        %v3529 = vpop.f32.mrf.mxu0
        %v3530 = vadd.f32 %v3516, %v3529
        %v3531 = vpop.f32.mrf.mxu0
        %v3532 = vadd.f32 %v3518, %v3531
        %3533 = vdwg.mxu0
        %3534 = vmatpush.bf16.msra.mxu0 %v3429
        %3535 = vmatpush.bf16.msra.mxu0 %v3422
        %3536 = vmatpush.bf16.msra.mxu0 %v3415
        %3537 = vmatpush.bf16.msra.mxu0 %v3408
        %3538 = vmatpush.bf16.msra.mxu0 %v3401
        %3539 = vmatpush.bf16.msra.mxu0 %v3394
        %3540 = vmatpush.bf16.msra.mxu0 %v3387
        %3541 = vmatpush.bf16.msra.mxu0 %v3380
        %3542 = vmatmul.bf16.gmra.mxu0 %v3475
        %v3543 = vpop.f32.mrf.mxu0
        %v3544 = vadd.f32 %v3530, %v3543
        %v3545 = vpop.f32.mrf.mxu0
        %v3546 = vadd.f32 %v3532, %v3545
        %3547 = vdwg.mxu0
        %3548 = vmatpush.bf16.msra.mxu0 0
        %3549 = vmatpush.bf16.msra.mxu0 0
        %3550 = vmatpush.bf16.msra.mxu0 0
        %3551 = vmatpush.bf16.msra.mxu0 0
        %3552 = vmatpush.bf16.msra.mxu0 0
        %3553 = vmatpush.bf16.msra.mxu0 0
        %3554 = vmatpush.bf16.msra.mxu0 0
        %3555 = vmatpush.bf16.msra.mxu0 %v3486
        %3556 = vmatmul.bf16.gmra.mxu0 %v3482
        %v3557 = vpop.f32.mrf.mxu0
        %v3558 = vadd.f32 %v3544, %v3557
        %v3559 = vpop.f32.mrf.mxu0
        %v3560 = vadd.f32 %v3546, %v3559
        %3561 = vdwg.mxu0
        %3562 = vmatpush.bf16.msra.mxu0 %v3318
        %3563 = vmatpush.bf16.msra.mxu0 %v3311
        %3564 = vmatpush.bf16.msra.mxu0 %v3304
        %3565 = vmatpush.bf16.msra.mxu0 %v3297
        %3566 = vmatpush.bf16.msra.mxu0 %v3290
        %3567 = vmatpush.bf16.msra.mxu0 %v3283
        %3568 = vmatpush.bf16.msra.mxu0 %v3276
        %3569 = vmatpush.bf16.msra.mxu0 %v3269
        %3570 = vmatmul.bf16.gmra.mxu0 %v3473
        %v3571 = vpop.f32.mrf.mxu0
        %v3572 = vadd.f32 0.0, %v3571
        %v3573 = vpop.f32.mrf.mxu0
        %v3574 = vadd.f32 0.0, %v3573
        %3575 = vdwg.mxu0
        %3576 = vmatpush.bf16.msra.mxu0 %v3374
        %3577 = vmatpush.bf16.msra.mxu0 %v3367
        %3578 = vmatpush.bf16.msra.mxu0 %v3360
        %3579 = vmatpush.bf16.msra.mxu0 %v3353
        %3580 = vmatpush.bf16.msra.mxu0 %v3346
        %3581 = vmatpush.bf16.msra.mxu0 %v3339
        %3582 = vmatpush.bf16.msra.mxu0 %v3332
        %3583 = vmatpush.bf16.msra.mxu0 %v3325
        %3584 = vmatmul.bf16.gmra.mxu0 %v3474
        %v3585 = vpop.f32.mrf.mxu0
        %v3586 = vadd.f32 %v3572, %v3585
        %v3587 = vpop.f32.mrf.mxu0
        %v3588 = vadd.f32 %v3574, %v3587
        %3589 = vdwg.mxu0
        %3590 = vmatpush.bf16.msra.mxu0 %v3430
        %3591 = vmatpush.bf16.msra.mxu0 %v3423
        %3592 = vmatpush.bf16.msra.mxu0 %v3416
        %3593 = vmatpush.bf16.msra.mxu0 %v3409
        %3594 = vmatpush.bf16.msra.mxu0 %v3402
        %3595 = vmatpush.bf16.msra.mxu0 %v3395
        %3596 = vmatpush.bf16.msra.mxu0 %v3388
        %3597 = vmatpush.bf16.msra.mxu0 %v3381
        %3598 = vmatmul.bf16.gmra.mxu0 %v3475
        %v3599 = vpop.f32.mrf.mxu0
        %v3600 = vadd.f32 %v3586, %v3599
        %v3601 = vpop.f32.mrf.mxu0
        %v3602 = vadd.f32 %v3588, %v3601
        %3603 = vdwg.mxu0
        %3604 = vmatpush.bf16.msra.mxu0 0
        %3605 = vmatpush.bf16.msra.mxu0 0
        %3606 = vmatpush.bf16.msra.mxu0 0
        %3607 = vmatpush.bf16.msra.mxu0 0
        %3608 = vmatpush.bf16.msra.mxu0 0
        %3609 = vmatpush.bf16.msra.mxu0 0
        %3610 = vmatpush.bf16.msra.mxu0 0
        %3611 = vmatpush.bf16.msra.mxu0 %v3489
        %3612 = vmatmul.bf16.gmra.mxu0 %v3482
        %v3613 = vpop.f32.mrf.mxu0
        %v3614 = vadd.f32 %v3600, %v3613
        %v3615 = vpop.f32.mrf.mxu0
        %v3616 = vadd.f32 %v3602, %v3615
        %3617 = vdwg.mxu0
        %3618 = vmatpush.bf16.msra.mxu0 %v3319
        %3619 = vmatpush.bf16.msra.mxu0 %v3312
        %3620 = vmatpush.bf16.msra.mxu0 %v3305
        %3621 = vmatpush.bf16.msra.mxu0 %v3298
        %3622 = vmatpush.bf16.msra.mxu0 %v3291
        %3623 = vmatpush.bf16.msra.mxu0 %v3284
        %3624 = vmatpush.bf16.msra.mxu0 %v3277
        %3625 = vmatpush.bf16.msra.mxu0 %v3270
        %3626 = vmatmul.bf16.gmra.mxu0 %v3473
        %v3627 = vpop.f32.mrf.mxu0
        %v3628 = vadd.f32 0.0, %v3627
        %v3629 = vpop.f32.mrf.mxu0
        %v3630 = vadd.f32 0.0, %v3629
        %3631 = vdwg.mxu0
        %3632 = vmatpush.bf16.msra.mxu0 %v3375
        %3633 = vmatpush.bf16.msra.mxu0 %v3368
        %3634 = vmatpush.bf16.msra.mxu0 %v3361
        %3635 = vmatpush.bf16.msra.mxu0 %v3354
        %3636 = vmatpush.bf16.msra.mxu0 %v3347
        %3637 = vmatpush.bf16.msra.mxu0 %v3340
        %3638 = vmatpush.bf16.msra.mxu0 %v3333
        %3639 = vmatpush.bf16.msra.mxu0 %v3326
        %3640 = vmatmul.bf16.gmra.mxu0 %v3474
        %v3641 = vpop.f32.mrf.mxu0
        %v3642 = vadd.f32 %v3628, %v3641
        %v3643 = vpop.f32.mrf.mxu0
        %v3644 = vadd.f32 %v3630, %v3643
        %3645 = vdwg.mxu0
        %3646 = vmatpush.bf16.msra.mxu0 %v3431
        %3647 = vmatpush.bf16.msra.mxu0 %v3424
        %3648 = vmatpush.bf16.msra.mxu0 %v3417
        %3649 = vmatpush.bf16.msra.mxu0 %v3410
        %3650 = vmatpush.bf16.msra.mxu0 %v3403
        %3651 = vmatpush.bf16.msra.mxu0 %v3396
        %3652 = vmatpush.bf16.msra.mxu0 %v3389
        %3653 = vmatpush.bf16.msra.mxu0 %v3382
        %3654 = vmatmul.bf16.gmra.mxu0 %v3475
        %v3655 = vpop.f32.mrf.mxu0
        %v3656 = vadd.f32 %v3642, %v3655
        %v3657 = vpop.f32.mrf.mxu0
        %v3658 = vadd.f32 %v3644, %v3657
        %3659 = vdwg.mxu0
        %3660 = vmatpush.bf16.msra.mxu0 0
        %3661 = vmatpush.bf16.msra.mxu0 0
        %3662 = vmatpush.bf16.msra.mxu0 0
        %3663 = vmatpush.bf16.msra.mxu0 0
        %3664 = vmatpush.bf16.msra.mxu0 0
        %3665 = vmatpush.bf16.msra.mxu0 0
        %3666 = vmatpush.bf16.msra.mxu0 0
        %3667 = vmatpush.bf16.msra.mxu0 %v3492
        %3668 = vmatmul.bf16.gmra.mxu0 %v3482
        %v3669 = vpop.f32.mrf.mxu0
        %v3670 = vadd.f32 %v3656, %v3669
        %v3671 = vpop.f32.mrf.mxu0
        %v3672 = vadd.f32 %v3658, %v3671
        %3673 = vdwg.mxu0
        %3674 = vmatpush.bf16.msra.mxu0 %v3320
        %3675 = vmatpush.bf16.msra.mxu0 %v3313
        %3676 = vmatpush.bf16.msra.mxu0 %v3306
        %3677 = vmatpush.bf16.msra.mxu0 %v3299
        %3678 = vmatpush.bf16.msra.mxu0 %v3292
        %3679 = vmatpush.bf16.msra.mxu0 %v3285
        %3680 = vmatpush.bf16.msra.mxu0 %v3278
        %3681 = vmatpush.bf16.msra.mxu0 %v3271
        %3682 = vmatmul.bf16.gmra.mxu0 %v3473
        %v3683 = vpop.f32.mrf.mxu0
        %v3684 = vadd.f32 0.0, %v3683
        %v3685 = vpop.f32.mrf.mxu0
        %v3686 = vadd.f32 0.0, %v3685
        %3687 = vdwg.mxu0
        %3688 = vmatpush.bf16.msra.mxu0 %v3376
        %3689 = vmatpush.bf16.msra.mxu0 %v3369
        %3690 = vmatpush.bf16.msra.mxu0 %v3362
        %3691 = vmatpush.bf16.msra.mxu0 %v3355
        %3692 = vmatpush.bf16.msra.mxu0 %v3348
        %3693 = vmatpush.bf16.msra.mxu0 %v3341
        %3694 = vmatpush.bf16.msra.mxu0 %v3334
        %3695 = vmatpush.bf16.msra.mxu0 %v3327
        %3696 = vmatmul.bf16.gmra.mxu0 %v3474
        %v3697 = vpop.f32.mrf.mxu0
        %v3698 = vadd.f32 %v3684, %v3697
        %v3699 = vpop.f32.mrf.mxu0
        %v3700 = vadd.f32 %v3686, %v3699
        %3701 = vdwg.mxu0
        %3702 = vmatpush.bf16.msra.mxu0 %v3432
        %3703 = vmatpush.bf16.msra.mxu0 %v3425
        %3704 = vmatpush.bf16.msra.mxu0 %v3418
        %3705 = vmatpush.bf16.msra.mxu0 %v3411
        %3706 = vmatpush.bf16.msra.mxu0 %v3404
        %3707 = vmatpush.bf16.msra.mxu0 %v3397
        %3708 = vmatpush.bf16.msra.mxu0 %v3390
        %3709 = vmatpush.bf16.msra.mxu0 %v3383
        %3710 = vmatmul.bf16.gmra.mxu0 %v3475
        %v3711 = vpop.f32.mrf.mxu0
        %v3712 = vadd.f32 %v3698, %v3711
        %v3713 = vpop.f32.mrf.mxu0
        %v3714 = vadd.f32 %v3700, %v3713
        %3715 = vdwg.mxu0
        %3716 = vmatpush.bf16.msra.mxu0 0
        %3717 = vmatpush.bf16.msra.mxu0 0
        %3718 = vmatpush.bf16.msra.mxu0 0
        %3719 = vmatpush.bf16.msra.mxu0 0
        %3720 = vmatpush.bf16.msra.mxu0 0
        %3721 = vmatpush.bf16.msra.mxu0 0
        %3722 = vmatpush.bf16.msra.mxu0 0
        %3723 = vmatpush.bf16.msra.mxu0 %v3495
        %3724 = vmatmul.bf16.gmra.mxu0 %v3482
        %v3725 = vpop.f32.mrf.mxu0
        %v3726 = vadd.f32 %v3712, %v3725
        %v3727 = vpop.f32.mrf.mxu0
        %v3728 = vadd.f32 %v3714, %v3727
        %3729 = vdwg.mxu0
        %3730 = vmatpush.bf16.msra.mxu0 %v3321
        %3731 = vmatpush.bf16.msra.mxu0 %v3314
        %3732 = vmatpush.bf16.msra.mxu0 %v3307
        %3733 = vmatpush.bf16.msra.mxu0 %v3300
        %3734 = vmatpush.bf16.msra.mxu0 %v3293
        %3735 = vmatpush.bf16.msra.mxu0 %v3286
        %3736 = vmatpush.bf16.msra.mxu0 %v3279
        %3737 = vmatpush.bf16.msra.mxu0 %v3272
        %3738 = vmatmul.bf16.gmra.mxu0 %v3473
        %v3739 = vpop.f32.mrf.mxu0
        %v3740 = vadd.f32 0.0, %v3739
        %v3741 = vpop.f32.mrf.mxu0
        %v3742 = vadd.f32 0.0, %v3741
        %3743 = vdwg.mxu0
        %3744 = vmatpush.bf16.msra.mxu0 %v3377
        %3745 = vmatpush.bf16.msra.mxu0 %v3370
        %3746 = vmatpush.bf16.msra.mxu0 %v3363
        %3747 = vmatpush.bf16.msra.mxu0 %v3356
        %3748 = vmatpush.bf16.msra.mxu0 %v3349
        %3749 = vmatpush.bf16.msra.mxu0 %v3342
        %3750 = vmatpush.bf16.msra.mxu0 %v3335
        %3751 = vmatpush.bf16.msra.mxu0 %v3328
        %3752 = vmatmul.bf16.gmra.mxu0 %v3474
        %v3753 = vpop.f32.mrf.mxu0
        %v3754 = vadd.f32 %v3740, %v3753
        %v3755 = vpop.f32.mrf.mxu0
        %v3756 = vadd.f32 %v3742, %v3755
        %3757 = vdwg.mxu0
        %3758 = vmatpush.bf16.msra.mxu0 %v3433
        %3759 = vmatpush.bf16.msra.mxu0 %v3426
        %3760 = vmatpush.bf16.msra.mxu0 %v3419
        %3761 = vmatpush.bf16.msra.mxu0 %v3412
        %3762 = vmatpush.bf16.msra.mxu0 %v3405
        %3763 = vmatpush.bf16.msra.mxu0 %v3398
        %3764 = vmatpush.bf16.msra.mxu0 %v3391
        %3765 = vmatpush.bf16.msra.mxu0 %v3384
        %3766 = vmatmul.bf16.gmra.mxu0 %v3475
        %v3767 = vpop.f32.mrf.mxu0
        %v3768 = vadd.f32 %v3754, %v3767
        %v3769 = vpop.f32.mrf.mxu0
        %v3770 = vadd.f32 %v3756, %v3769
        %3771 = vdwg.mxu0
        %3772 = vmatpush.bf16.msra.mxu0 0
        %3773 = vmatpush.bf16.msra.mxu0 0
        %3774 = vmatpush.bf16.msra.mxu0 0
        %3775 = vmatpush.bf16.msra.mxu0 0
        %3776 = vmatpush.bf16.msra.mxu0 0
        %3777 = vmatpush.bf16.msra.mxu0 0
        %3778 = vmatpush.bf16.msra.mxu0 0
        %3779 = vmatpush.bf16.msra.mxu0 %v3498
        %3780 = vmatmul.bf16.gmra.mxu0 %v3482
        %v3781 = vpop.f32.mrf.mxu0
        %v3782 = vadd.f32 %v3768, %v3781
        %v3783 = vpop.f32.mrf.mxu0
        %v3784 = vadd.f32 %v3770, %v3783
        %3785 = vdwg.mxu0
        %3786 = vmatpush.bf16.msra.mxu0 %v3322
        %3787 = vmatpush.bf16.msra.mxu0 %v3315
        %3788 = vmatpush.bf16.msra.mxu0 %v3308
        %3789 = vmatpush.bf16.msra.mxu0 %v3301
        %3790 = vmatpush.bf16.msra.mxu0 %v3294
        %3791 = vmatpush.bf16.msra.mxu0 %v3287
        %3792 = vmatpush.bf16.msra.mxu0 %v3280
        %3793 = vmatpush.bf16.msra.mxu0 %v3273
        %3794 = vmatmul.bf16.gmra.mxu0 %v3473
        %v3795 = vpop.f32.mrf.mxu0
        %v3796 = vadd.f32 0.0, %v3795
        %v3797 = vpop.f32.mrf.mxu0
        %v3798 = vadd.f32 0.0, %v3797
        %3799 = vdwg.mxu0
        %3800 = vmatpush.bf16.msra.mxu0 %v3378
        %3801 = vmatpush.bf16.msra.mxu0 %v3371
        %3802 = vmatpush.bf16.msra.mxu0 %v3364
        %3803 = vmatpush.bf16.msra.mxu0 %v3357
        %3804 = vmatpush.bf16.msra.mxu0 %v3350
        %3805 = vmatpush.bf16.msra.mxu0 %v3343
        %3806 = vmatpush.bf16.msra.mxu0 %v3336
        %3807 = vmatpush.bf16.msra.mxu0 %v3329
        %3808 = vmatmul.bf16.gmra.mxu0 %v3474
        %v3809 = vpop.f32.mrf.mxu0
        %v3810 = vadd.f32 %v3796, %v3809
        %v3811 = vpop.f32.mrf.mxu0
        %v3812 = vadd.f32 %v3798, %v3811
        %3813 = vdwg.mxu0
        %3814 = vmatpush.bf16.msra.mxu0 %v3434
        %3815 = vmatpush.bf16.msra.mxu0 %v3427
        %3816 = vmatpush.bf16.msra.mxu0 %v3420
        %3817 = vmatpush.bf16.msra.mxu0 %v3413
        %3818 = vmatpush.bf16.msra.mxu0 %v3406
        %3819 = vmatpush.bf16.msra.mxu0 %v3399
        %3820 = vmatpush.bf16.msra.mxu0 %v3392
        %3821 = vmatpush.bf16.msra.mxu0 %v3385
        %3822 = vmatmul.bf16.gmra.mxu0 %v3475
        %v3823 = vpop.f32.mrf.mxu0
        %v3824 = vadd.f32 %v3810, %v3823
        %v3825 = vpop.f32.mrf.mxu0
        %v3826 = vadd.f32 %v3812, %v3825
        %3827 = vdwg.mxu0
        %3828 = vmatpush.bf16.msra.mxu0 0
        %3829 = vmatpush.bf16.msra.mxu0 0
        %3830 = vmatpush.bf16.msra.mxu0 0
        %3831 = vmatpush.bf16.msra.mxu0 0
        %3832 = vmatpush.bf16.msra.mxu0 0
        %3833 = vmatpush.bf16.msra.mxu0 0
        %3834 = vmatpush.bf16.msra.mxu0 0
        %3835 = vmatpush.bf16.msra.mxu0 %v3501
        %3836 = vmatmul.bf16.gmra.mxu0 %v3482
        %v3837 = vpop.f32.mrf.mxu0
        %v3838 = vadd.f32 %v3824, %v3837
        %v3839 = vpop.f32.mrf.mxu0
        %v3840 = vadd.f32 %v3826, %v3839
        %3841 = vdwg.mxu0
        %3842 = vmatpush.bf16.msra.mxu0 %v3323
        %3843 = vmatpush.bf16.msra.mxu0 %v3316
        %3844 = vmatpush.bf16.msra.mxu0 %v3309
        %3845 = vmatpush.bf16.msra.mxu0 %v3302
        %3846 = vmatpush.bf16.msra.mxu0 %v3295
        %3847 = vmatpush.bf16.msra.mxu0 %v3288
        %3848 = vmatpush.bf16.msra.mxu0 %v3281
        %3849 = vmatpush.bf16.msra.mxu0 %v3274
        %3850 = vmatmul.bf16.gmra.mxu0 %v3473
        %v3851 = vpop.f32.mrf.mxu0
        %v3852 = vadd.f32 0.0, %v3851
        %v3853 = vpop.f32.mrf.mxu0
        %v3854 = vadd.f32 0.0, %v3853
        %3855 = vdwg.mxu0
        %3856 = vmatpush.bf16.msra.mxu0 %v3379
        %3857 = vmatpush.bf16.msra.mxu0 %v3372
        %3858 = vmatpush.bf16.msra.mxu0 %v3365
        %3859 = vmatpush.bf16.msra.mxu0 %v3358
        %3860 = vmatpush.bf16.msra.mxu0 %v3351
        %3861 = vmatpush.bf16.msra.mxu0 %v3344
        %3862 = vmatpush.bf16.msra.mxu0 %v3337
        %3863 = vmatpush.bf16.msra.mxu0 %v3330
        %3864 = vmatmul.bf16.gmra.mxu0 %v3474
        %v3865 = vpop.f32.mrf.mxu0
        %v3866 = vadd.f32 %v3852, %v3865
        %v3867 = vpop.f32.mrf.mxu0
        %v3868 = vadd.f32 %v3854, %v3867
        %3869 = vdwg.mxu0
        %3870 = vmatpush.bf16.msra.mxu0 %v3435
        %3871 = vmatpush.bf16.msra.mxu0 %v3428
        %3872 = vmatpush.bf16.msra.mxu0 %v3421
        %3873 = vmatpush.bf16.msra.mxu0 %v3414
        %3874 = vmatpush.bf16.msra.mxu0 %v3407
        %3875 = vmatpush.bf16.msra.mxu0 %v3400
        %3876 = vmatpush.bf16.msra.mxu0 %v3393
        %3877 = vmatpush.bf16.msra.mxu0 %v3386
        %3878 = vmatmul.bf16.gmra.mxu0 %v3475
        %v3879 = vpop.f32.mrf.mxu0
        %v3880 = vadd.f32 %v3866, %v3879
        %v3881 = vpop.f32.mrf.mxu0
        %v3882 = vadd.f32 %v3868, %v3881
        %3883 = vdwg.mxu0
        %3884 = vmatpush.bf16.msra.mxu0 0
        %3885 = vmatpush.bf16.msra.mxu0 0
        %3886 = vmatpush.bf16.msra.mxu0 0
        %3887 = vmatpush.bf16.msra.mxu0 0
        %3888 = vmatpush.bf16.msra.mxu0 0
        %3889 = vmatpush.bf16.msra.mxu0 0
        %3890 = vmatpush.bf16.msra.mxu0 0
        %3891 = vmatpush.bf16.msra.mxu0 %v3504
        %3892 = vmatmul.bf16.gmra.mxu0 %v3482
        %v3893 = vpop.f32.mrf.mxu0
        %v3894 = vadd.f32 %v3880, %v3893
        %v3895 = vpop.f32.mrf.mxu0
        %v3896 = vadd.f32 %v3882, %v3895
        %3897 = vdwg.mxu0
        %v3898 = vadd.f32 %v3443, %v3558
        %v3899 = vadd.f32 %v3444, %v3614
        %v3900 = vadd.f32 %v3445, %v3670
        %v3901 = vadd.f32 %v3446, %v3726
        %v3902 = vadd.f32 %v3447, %v3782
        %v3903 = vadd.f32 %v3448, %v3838
        %v3904 = vadd.f32 %v3449, %v3894
        %v3905 = vadd.f32 %v3450, %v3560
        %v3906 = vadd.f32 %v3451, %v3616
        %v3907 = vadd.f32 %v3452, %v3672
        %v3908 = vadd.f32 %v3453, %v3728
        %v3909 = vadd.f32 %v3454, %v3784
        %v3910 = vadd.f32 %v3455, %v3840
        %v3911 = vadd.f32 %v3456, %v3896
        %3912 = vst [vmem:[#allocation2] sm:$0xff] %v3898
        %3913 = vst [vmem:[#allocation2 + $0x8] sm:$0xff] %v3899
        %3914 = vst [vmem:[#allocation2 + $0x10] sm:$0xff] %v3900
        %3915 = vst [vmem:[#allocation2 + $0x18] sm:$0xff] %v3901
        %3916 = vst [vmem:[#allocation2 + $0x20] sm:$0xff] %v3902
        %3917 = vst [vmem:[#allocation2 + $0x28] sm:$0xff] %v3903
        %vm3918 = vcmask 261120
        %3919 = vst.msk [vmem:[#allocation2 + $0x30] sm:$0xff] %vm3918, %v3904
        %3920 = vst [vmem:[#allocation2 + $0x38] sm:$0xff] %v3905
        %3921 = vst [vmem:[#allocation2 + $0x40] sm:$0xff] %v3906
        %3922 = vst [vmem:[#allocation2 + $0x48] sm:$0xff] %v3907
        %3923 = vst [vmem:[#allocation2 + $0x50] sm:$0xff] %v3908
        %3924 = vst [vmem:[#allocation2 + $0x58] sm:$0xff] %v3909
        %3925 = vst [vmem:[#allocation2 + $0x60] sm:$0xff] %v3910
        %3926 = vst.msk [vmem:[#allocation2 + $0x68] sm:$0xff] %vm3918, %v3911
        %p3927 = scmp.eq.s32.totalorder %s30, 1
        // Predicated region
        $region61: #{bayesian_mlp_forward.1} parent=47 // pred_check
          %p3928 = pneg %p3927
        $region62: #{bayesian_mlp_forward.1} parent=47 // pred_check_branch
          %3930 = sbr.rel (%p3928) target = $region64
        $region63: #{bayesian_mlp_forward.1} parent=47 // pred_region
          %v3931 = vld [vmem:[#allocation2] sm:$0xff]
          %v3932 = vld [vmem:[#allocation2 + $0x8] sm:$0xff]
          %v3933 = vld [vmem:[#allocation2 + $0x10] sm:$0xff]
          %v3934 = vld [vmem:[#allocation2 + $0x18] sm:$0xff]
          %v3935 = vld [vmem:[#allocation2 + $0x20] sm:$0xff]
          %v3936 = vld [vmem:[#allocation2 + $0x28] sm:$0xff]
          %v3937 = vld [vmem:[#allocation2 + $0x30] sm:$0xff]
          %v3938 = vld [vmem:[#allocation2 + $0x38] sm:$0xff]
          %v3939 = vld [vmem:[#allocation2 + $0x40] sm:$0xff]
          %v3940 = vld [vmem:[#allocation2 + $0x48] sm:$0xff]
          %v3941 = vld [vmem:[#allocation2 + $0x50] sm:$0xff]
          %v3942 = vld [vmem:[#allocation2 + $0x58] sm:$0xff]
          %v3943 = vld [vmem:[#allocation2 + $0x60] sm:$0xff]
          %v3944 = vld [vmem:[#allocation2 + $0x68] sm:$0xff]
          %v3945 = vld [vmem:[%s4] sm:$0x7f]
          %v3947 = vperm.slane %v3945, 0
          %v3948 = vperm.slane %v3945, 1
          %v3949 = vperm.slane %v3945, 2
          %v3950 = vperm.slane %v3945, 3
          %v3951 = vperm.slane %v3945, 4
          %v3952 = vperm.slane %v3945, 5
          %v3953 = vperm.slane %v3945, 6
          %v3961 = vadd.f32 %v3931, %v3947
          %v3962 = vadd.f32 %v3932, %v3948
          %v3963 = vadd.f32 %v3933, %v3949
          %v3964 = vadd.f32 %v3934, %v3950
          %v3965 = vadd.f32 %v3935, %v3951
          %v3966 = vadd.f32 %v3936, %v3952
          %v3967 = vadd.f32 %v3937, %v3953
          %v3968 = vadd.f32 %v3938, %v3947
          %v3969 = vadd.f32 %v3939, %v3948
          %v3970 = vadd.f32 %v3940, %v3949
          %v3971 = vadd.f32 %v3941, %v3950
          %v3972 = vadd.f32 %v3942, %v3951
          %v3973 = vadd.f32 %v3943, %v3952
          %v3974 = vadd.f32 %v3944, %v3953
          %v3975 = vmax.f32 %v3961, 0.0
          %v3976 = vmax.f32 %v3962, 0.0
          %v3977 = vmax.f32 %v3963, 0.0
          %v3978 = vmax.f32 %v3964, 0.0
          %v3979 = vmax.f32 %v3965, 0.0
          %v3980 = vmax.f32 %v3966, 0.0
          %v3981 = vmax.f32 %v3967, 0.0
          %v3982 = vmax.f32 %v3968, 0.0
          %v3983 = vmax.f32 %v3969, 0.0
          %v3984 = vmax.f32 %v3970, 0.0
          %v3985 = vmax.f32 %v3971, 0.0
          %v3986 = vmax.f32 %v3972, 0.0
          %v3987 = vmax.f32 %v3973, 0.0
          %v3988 = vmax.f32 %v3974, 0.0
          %v3989 = vld [vmem:[%s5] sm:$0xff]
          %v3990 = vld [vmem:[%s5 + $0x8] sm:$0xff]
          %v3991 = vld [vmem:[%s5 + $0x10] sm:$0xff]
          %v3992 = vld [vmem:[%s5 + $0x18] sm:$0xff]
          %v3993 = vld [vmem:[%s5 + $0x20] sm:$0xff]
          %v3994 = vld [vmem:[%s5 + $0x28] sm:$0xff]
          %v3995 = vld [vmem:[%s5 + $0x30] sm:$0xff]
          %v3996 = vld [vmem:[%s5 + $0x38] sm:$0xff]
          %v3997 = vld [vmem:[%s5 + $0x40] sm:$0xff]
          %v3998 = vld [vmem:[%s5 + $0x48] sm:$0xff]
          %v3999 = vld [vmem:[%s5 + $0x50] sm:$0xff]
          %v4000 = vld [vmem:[%s5 + $0x58] sm:$0xff]
          %v4001 = vld [vmem:[%s5 + $0x60] sm:$0xff]
          %v4002 = vld [vmem:[%s5 + $0x68] sm:$0xff]
          %v4003 = vld [vmem:[%s5 + $0x70] sm:$0xff]
          %v4004 = vld [vmem:[%s5 + $0x78] sm:$0xff]
          %v4005 = vld [vmem:[%s5 + $0x80] sm:$0xff]
          %v4006 = vld [vmem:[%s5 + $0x88] sm:$0xff]
          %v4007 = vld [vmem:[%s5 + $0x90] sm:$0xff]
          %v4008 = vld [vmem:[%s5 + $0x98] sm:$0xff]
          %v4009 = vld [vmem:[%s5 + $0xa0] sm:$0xff]
          %v4010 = vld [vmem:[%s5 + $0xa8] sm:$0xff]
          %v4011 = vld [vmem:[%s5 + $0xb0] sm:$0xff]
          %v4012 = vld [vmem:[%s5 + $0xb8] sm:$0xff]
          %v4013 = vld [vmem:[%s5 + $0xc0] sm:$0xff]
          %v4014 = vld [vmem:[%s5 + $0xc8] sm:$0xff]
          %v4015 = vld [vmem:[%s5 + $0xd0] sm:$0xff]
          %v4016 = vld [vmem:[%s5 + $0xd8] sm:$0xff]
          %v4017 = vld [vmem:[%s5 + $0xe0] sm:$0xff]
          %v4018 = vld [vmem:[%s5 + $0xe8] sm:$0xff]
          %v4019 = vld [vmem:[%s5 + $0xf0] sm:$0xff]
          %v4020 = vld [vmem:[%s5 + $0xf8] sm:$0xff]
          %v4021 = vld [vmem:[%s5 + $0x100] sm:$0xff]
          %v4022 = vld [vmem:[%s5 + $0x108] sm:$0xff]
          %v4023 = vld [vmem:[%s5 + $0x110] sm:$0xff]
          %v4024 = vld [vmem:[%s5 + $0x118] sm:$0xff]
          %v4025 = vld [vmem:[%s5 + $0x120] sm:$0xff]
          %v4026 = vld [vmem:[%s5 + $0x128] sm:$0xff]
          %v4027 = vld [vmem:[%s5 + $0x130] sm:$0xff]
          %v4028 = vld [vmem:[%s5 + $0x138] sm:$0xff]
          %v4029 = vld [vmem:[%s5 + $0x140] sm:$0xff]
          %v4030 = vld [vmem:[%s5 + $0x148] sm:$0xff]
          %v4031 = vld [vmem:[%s5 + $0x150] sm:$0xff]
          %v4032 = vld [vmem:[%s5 + $0x158] sm:$0xff]
          %v4033 = vld [vmem:[%s5 + $0x160] sm:$0xff]
          %v4034 = vld [vmem:[%s5 + $0x168] sm:$0xff]
          %v4035 = vld [vmem:[%s5 + $0x170] sm:$0xff]
          %v4036 = vld [vmem:[%s5 + $0x178] sm:$0xff]
          %v4037 = vld [vmem:[%s5 + $0x180] sm:$0xff]
          %v4038 = vld [vmem:[%s5 + $0x188] sm:$0xff]
          %v4039 = vld [vmem:[%s5 + $0x190] sm:$0xff]
          %v4040 = vld [vmem:[%s5 + $0x198] sm:$0xff]
          %v4041 = vld [vmem:[%s5 + $0x1a0] sm:$0xff]
          %v4042 = vld [vmem:[%s5 + $0x1a8] sm:$0xff]
          %v4043 = vld [vmem:[%s5 + $0x1b0] sm:$0xff]
          %v4044 = vld [vmem:[%s5 + $0x1b8] sm:$0xff]
          %v4045 = vld [vmem:[%s5 + $0x1c0] sm:$0xff]
          %v4046 = vld [vmem:[%s5 + $0x1c8] sm:$0xff]
          %v4047 = vld [vmem:[%s5 + $0x1d0] sm:$0xff]
          %v4048 = vld [vmem:[%s5 + $0x1d8] sm:$0xff]
          %v4049 = vld [vmem:[%s5 + $0x1e0] sm:$0xff]
          %v4050 = vld [vmem:[%s5 + $0x1e8] sm:$0xff]
          %v4051 = vld [vmem:[%s5 + $0x1f0] sm:$0xff]
          %v4052 = vld [vmem:[%s5 + $0x1f8] sm:$0xff]
          %v4053 = vld [vmem:[%s5 + $0x200] sm:$0xff]
          %v4054 = vld [vmem:[%s5 + $0x208] sm:$0xff]
          %v4055 = vld [vmem:[%s5 + $0x210] sm:$0xff]
          %v4056 = vld [vmem:[%s5 + $0x218] sm:$0xff]
          %v4057 = vld [vmem:[%s5 + $0x220] sm:$0xff]
          %v4058 = vld [vmem:[%s5 + $0x228] sm:$0xff]
          %v4059 = vld [vmem:[%s5 + $0x230] sm:$0xff]
          %v4060 = vld [vmem:[%s5 + $0x238] sm:$0xff]
          %v4061 = vld [vmem:[%s5 + $0x240] sm:$0xff]
          %v4062 = vld [vmem:[%s5 + $0x248] sm:$0xff]
          %v4063 = vld [vmem:[%s5 + $0x250] sm:$0xff]
          %v4064 = vld [vmem:[%s5 + $0x258] sm:$0xff]
          %v4065 = vld [vmem:[%s5 + $0x260] sm:$0xff]
          %v4066 = vld [vmem:[%s5 + $0x268] sm:$0xff]
          %v4067 = vld [vmem:[%s5 + $0x270] sm:$0xff]
          %v4068 = vld [vmem:[%s5 + $0x278] sm:$0xff]
          %v4069 = vld [vmem:[%s5 + $0x280] sm:$0xff]
          %v4070 = vld [vmem:[%s5 + $0x288] sm:$0xff]
          %v4071 = vld [vmem:[%s5 + $0x290] sm:$0xff]
          %v4072 = vld [vmem:[%s5 + $0x298] sm:$0xff]
          %v4073 = vld [vmem:[%s5 + $0x2a0] sm:$0xff]
          %v4074 = vld [vmem:[%s5 + $0x2a8] sm:$0xff]
          %v4075 = vld [vmem:[%s5 + $0x2b0] sm:$0xff]
          %v4076 = vld [vmem:[%s5 + $0x2b8] sm:$0xff]
          %v4077 = vld [vmem:[%s5 + $0x2c0] sm:$0xff]
          %v4078 = vld [vmem:[%s5 + $0x2c8] sm:$0xff]
          %v4079 = vld [vmem:[%s5 + $0x2d0] sm:$0xff]
          %v4080 = vld [vmem:[%s5 + $0x2d8] sm:$0xff]
          %v4081 = vld [vmem:[%s5 + $0x2e0] sm:$0xff]
          %v4082 = vld [vmem:[%s5 + $0x2e8] sm:$0xff]
          %v4083 = vld [vmem:[%s5 + $0x2f0] sm:$0xff]
          %v4084 = vld [vmem:[%s5 + $0x2f8] sm:$0xff]
          %v4085 = vld [vmem:[%s5 + $0x300] sm:$0xff]
          %v4086 = vld [vmem:[%s5 + $0x308] sm:$0xff]
          %v4087 = vld [vmem:[%s5 + $0x310] sm:$0xff]
          %v4088 = vld [vmem:[%s5 + $0x318] sm:$0xff]
          %v4089 = vld [vmem:[%s6] sm:$0x1]
          %v4091 = vperm.slane %v4089, 0
          %v4094 = vsel %vm3918, %v3981, 0
          %v4097 = vsel %vm3918, %v3988, 0
          %4099 = vmatpush.msra.mxu0 %v4004
          %4100 = vmatpush.msra.mxu0 %v4003
          %4101 = vmatpush.msra.mxu0 %v4002
          %4102 = vmatpush.msra.mxu0 %v4001
          %4103 = vmatpush.msra.mxu0 %v4000
          %4104 = vmatpush.msra.mxu0 %v3999
          %4105 = vmatpush.msra.mxu0 %v3998
          %4106 = vmatpush.msra.mxu0 %v3997
          %4107 = vmatpush.msra.mxu0 %v3996
          %4108 = vmatpush.msra.mxu0 %v3995
          %4109 = vmatpush.msra.mxu0 %v3994
          %4110 = vmatpush.msra.mxu0 %v3993
          %4111 = vmatpush.msra.mxu0 %v3992
          %4112 = vmatpush.msra.mxu0 %v3991
          %4113 = vmatpush.msra.mxu0 %v3990
          %4114 = vmatpush.msra.mxu0 %v3989
          %4115 = vmatmul.f32.gmra.mxu0 %v3975
          %v4116 = vpop.f32.mrf.mxu0
          %v4117 = vadd.f32 %v4091, %v4116
          %4118 = vmatmul.f32.gmra.mxu0 %v3982
          %v4119 = vpop.f32.mrf.mxu0
          %v4120 = vadd.f32 %v4091, %v4119
          %4121 = vdwg.mxu0
          %4122 = vmatpush.msra.mxu0 %v4020
          %4123 = vmatpush.msra.mxu0 %v4019
          %4124 = vmatpush.msra.mxu0 %v4018
          %4125 = vmatpush.msra.mxu0 %v4017
          %4126 = vmatpush.msra.mxu0 %v4016
          %4127 = vmatpush.msra.mxu0 %v4015
          %4128 = vmatpush.msra.mxu0 %v4014
          %4129 = vmatpush.msra.mxu0 %v4013
          %4130 = vmatpush.msra.mxu0 %v4012
          %4131 = vmatpush.msra.mxu0 %v4011
          %4132 = vmatpush.msra.mxu0 %v4010
          %4133 = vmatpush.msra.mxu0 %v4009
          %4134 = vmatpush.msra.mxu0 %v4008
          %4135 = vmatpush.msra.mxu0 %v4007
          %4136 = vmatpush.msra.mxu0 %v4006
          %4137 = vmatpush.msra.mxu0 %v4005
          %4138 = vmatmul.f32.gmra.mxu0 %v3976
          %v4139 = vpop.f32.mrf.mxu0
          %v4140 = vadd.f32 %v4117, %v4139
          %4141 = vmatmul.f32.gmra.mxu0 %v3983
          %v4142 = vpop.f32.mrf.mxu0
          %v4143 = vadd.f32 %v4120, %v4142
          %4144 = vdwg.mxu0
          %4145 = vmatpush.msra.mxu0 %v4036
          %4146 = vmatpush.msra.mxu0 %v4035
          %4147 = vmatpush.msra.mxu0 %v4034
          %4148 = vmatpush.msra.mxu0 %v4033
          %4149 = vmatpush.msra.mxu0 %v4032
          %4150 = vmatpush.msra.mxu0 %v4031
          %4151 = vmatpush.msra.mxu0 %v4030
          %4152 = vmatpush.msra.mxu0 %v4029
          %4153 = vmatpush.msra.mxu0 %v4028
          %4154 = vmatpush.msra.mxu0 %v4027
          %4155 = vmatpush.msra.mxu0 %v4026
          %4156 = vmatpush.msra.mxu0 %v4025
          %4157 = vmatpush.msra.mxu0 %v4024
          %4158 = vmatpush.msra.mxu0 %v4023
          %4159 = vmatpush.msra.mxu0 %v4022
          %4160 = vmatpush.msra.mxu0 %v4021
          %4161 = vmatmul.f32.gmra.mxu0 %v3977
          %v4162 = vpop.f32.mrf.mxu0
          %v4163 = vadd.f32 %v4140, %v4162
          %4164 = vmatmul.f32.gmra.mxu0 %v3984
          %v4165 = vpop.f32.mrf.mxu0
          %v4166 = vadd.f32 %v4143, %v4165
          %4167 = vdwg.mxu0
          %4168 = vmatpush.msra.mxu0 %v4052
          %4169 = vmatpush.msra.mxu0 %v4051
          %4170 = vmatpush.msra.mxu0 %v4050
          %4171 = vmatpush.msra.mxu0 %v4049
          %4172 = vmatpush.msra.mxu0 %v4048
          %4173 = vmatpush.msra.mxu0 %v4047
          %4174 = vmatpush.msra.mxu0 %v4046
          %4175 = vmatpush.msra.mxu0 %v4045
          %4176 = vmatpush.msra.mxu0 %v4044
          %4177 = vmatpush.msra.mxu0 %v4043
          %4178 = vmatpush.msra.mxu0 %v4042
          %4179 = vmatpush.msra.mxu0 %v4041
          %4180 = vmatpush.msra.mxu0 %v4040
          %4181 = vmatpush.msra.mxu0 %v4039
          %4182 = vmatpush.msra.mxu0 %v4038
          %4183 = vmatpush.msra.mxu0 %v4037
          %4184 = vmatmul.f32.gmra.mxu0 %v3978
          %v4185 = vpop.f32.mrf.mxu0
          %v4186 = vadd.f32 %v4163, %v4185
          %4187 = vmatmul.f32.gmra.mxu0 %v3985
          %v4188 = vpop.f32.mrf.mxu0
          %v4189 = vadd.f32 %v4166, %v4188
          %4190 = vdwg.mxu0
          %4191 = vmatpush.msra.mxu0 %v4068
          %4192 = vmatpush.msra.mxu0 %v4067
          %4193 = vmatpush.msra.mxu0 %v4066
          %4194 = vmatpush.msra.mxu0 %v4065
          %4195 = vmatpush.msra.mxu0 %v4064
          %4196 = vmatpush.msra.mxu0 %v4063
          %4197 = vmatpush.msra.mxu0 %v4062
          %4198 = vmatpush.msra.mxu0 %v4061
          %4199 = vmatpush.msra.mxu0 %v4060
          %4200 = vmatpush.msra.mxu0 %v4059
          %4201 = vmatpush.msra.mxu0 %v4058
          %4202 = vmatpush.msra.mxu0 %v4057
          %4203 = vmatpush.msra.mxu0 %v4056
          %4204 = vmatpush.msra.mxu0 %v4055
          %4205 = vmatpush.msra.mxu0 %v4054
          %4206 = vmatpush.msra.mxu0 %v4053
          %4207 = vmatmul.f32.gmra.mxu0 %v3979
          %v4208 = vpop.f32.mrf.mxu0
          %v4209 = vadd.f32 %v4186, %v4208
          %4210 = vmatmul.f32.gmra.mxu0 %v3986
          %v4211 = vpop.f32.mrf.mxu0
          %v4212 = vadd.f32 %v4189, %v4211
          %4213 = vdwg.mxu0
          %4214 = vmatpush.msra.mxu0 %v4084
          %4215 = vmatpush.msra.mxu0 %v4083
          %4216 = vmatpush.msra.mxu0 %v4082
          %4217 = vmatpush.msra.mxu0 %v4081
          %4218 = vmatpush.msra.mxu0 %v4080
          %4219 = vmatpush.msra.mxu0 %v4079
          %4220 = vmatpush.msra.mxu0 %v4078
          %4221 = vmatpush.msra.mxu0 %v4077
          %4222 = vmatpush.msra.mxu0 %v4076
          %4223 = vmatpush.msra.mxu0 %v4075
          %4224 = vmatpush.msra.mxu0 %v4074
          %4225 = vmatpush.msra.mxu0 %v4073
          %4226 = vmatpush.msra.mxu0 %v4072
          %4227 = vmatpush.msra.mxu0 %v4071
          %4228 = vmatpush.msra.mxu0 %v4070
          %4229 = vmatpush.msra.mxu0 %v4069
          %4230 = vmatmul.f32.gmra.mxu0 %v3980
          %v4231 = vpop.f32.mrf.mxu0
          %v4232 = vadd.f32 %v4209, %v4231
          %4233 = vmatmul.f32.gmra.mxu0 %v3987
          %v4234 = vpop.f32.mrf.mxu0
          %v4235 = vadd.f32 %v4212, %v4234
          %4236 = vdwg.mxu0
          %4237 = vmatpush.msra.mxu0 0.0
          %4238 = vmatpush.msra.mxu0 0.0
          %4239 = vmatpush.msra.mxu0 0.0
          %4240 = vmatpush.msra.mxu0 0.0
          %4241 = vmatpush.msra.mxu0 0.0
          %4242 = vmatpush.msra.mxu0 0.0
          %4243 = vmatpush.msra.mxu0 0.0
          %4244 = vmatpush.msra.mxu0 0.0
          %4245 = vmatpush.msra.mxu0 0.0
          %4246 = vmatpush.msra.mxu0 0.0
          %4247 = vmatpush.msra.mxu0 0.0
          %4248 = vmatpush.msra.mxu0 0.0
          %4249 = vmatpush.msra.mxu0 %v4088
          %4250 = vmatpush.msra.mxu0 %v4087
          %4251 = vmatpush.msra.mxu0 %v4086
          %4252 = vmatpush.msra.mxu0 %v4085
          %4253 = vmatmul.f32.gmra.mxu0 %v4094
          %v4254 = vpop.f32.mrf.mxu0
          %v4255 = vadd.f32 %v4232, %v4254
          %4256 = vmatmul.f32.gmra.mxu0 %v4097
          %v4257 = vpop.f32.mrf.mxu0
          %v4258 = vadd.f32 %v4235, %v4257
          %4259 = vdwg.mxu0
          %vm4260 = vcmask 80896
          %4261 = vst.msk [vmem:[#allocation8] sm:$0xff] %vm4260, %v4255
          %4262 = vst.msk [vmem:[#allocation8 + $0x8] sm:$0xff] %vm4260, %v4258
        $region64: #{bayesian_mlp_forward.1} parent=47 // pred_fallthru
          _
        // Predicated region
        $region65: #{bayesian_mlp_forward.1} parent=47 // pred_check
          %p4263 = pneg %p224
        $region66: #{bayesian_mlp_forward.1} parent=47 // pred_check_branch
          %4265 = sbr.rel (%p4263) target = $region68
        $region67: #{bayesian_mlp_forward.1} parent=47 // pred_region
          %s4266 = smul.u32 2, %s29
          %4268 = vsyncadd [#allocation5], 0
          %s4269 = smul.addr %s4266, 8
          %s4270 = scalar_lea.hbm %s7, %s4269
          %s4271 = sshll.u32 [#allocation8], 4
          %s4272 = int_to_ptr.vmem [resolvable:$true] %s4271
          %s4273 = sshll.u32 %s4270, 4
          %s4274 = int_to_ptr.hbm [resolvable:$true] %s4273
          %4279 = dma.vmem_to_hbm [thread:$0]  %s4272, 256, %s4274, [#allocation5], 128, 128, 8
        $region68: #{bayesian_mlp_forward.1} parent=47 // pred_fallthru
          _
        // Predicated region
        $region69: #{bayesian_mlp_forward.1} parent=47 // pred_check
          %p4280 = pneg %p224
        $region70: #{bayesian_mlp_forward.1} parent=47 // pred_check_branch
          %4282 = sbr.rel (%p4280) target = $region72
        $region71: #{bayesian_mlp_forward.1} parent=47 // pred_region
          %4284 = dma.done [#allocation5], 256
        $region72: #{bayesian_mlp_forward.1} parent=47 // pred_fallthru
          _
      $region48: #{bayesian_mlp_forward.1} parent=5 // pred_fallthru
        _
      %p4285 = scmp.le.s32.totalorder 2, %s20
      // Predicated region
      $region73: #{bayesian_mlp_forward.1} parent=5 // pred_check
        %p4286 = pneg %p4285
      $region74: #{bayesian_mlp_forward.1} parent=5 // pred_check_branch
        %4288 = sbr.rel (%p4286) target = $region76
      $region75: #{bayesian_mlp_forward.1} parent=5 // pred_region
        %s4289 = ssub.s32 %s20, 2
      $region76: #{bayesian_mlp_forward.1} parent=5 // pred_fallthru
        _
    $region6: #{bayesian_mlp_forward.1} parent=1 // loop_footer
      %s24 = sadd.s32 1, %s20
    $region7: #{bayesian_mlp_forward.1} parent=1 // loop_footer_branch
      %19 = sbr.rel target = $region3
    $region8: #{bayesian_mlp_forward.1} parent=1 // loop_exit
      _
    %4290 = vsyncpa [#allocation4], 1
    %s4291 = scalar_lea.sflag [#allocation4], 1
    %4292 = vsyncpa %s4291, 1
    %4293 = vsyncpa [#allocation7], 1
    %s4294 = scalar_lea.sflag [#allocation7], 1
    %4295 = vsyncpa %s4294, 1
    %4296 = vsyncpa [#allocation5], 1
    %s4297 = scalar_lea.sflag [#allocation5], 1
    %4298 = vsyncpa %s4297, 1

</llo_original>
